<compile_context>
chip_gen: v5e
topology: v5e:2x2
jax: 0.10.0
libtpu: 0.0.40
codegen_flags: <defaults>
</compile_context>

<pallas_src>
import functools

import jax
import jax.numpy as jnp
from jax import lax
from jax.experimental import pallas as pl
from jax.experimental.pallas import tpu as pltpu


def _round_up(x, m):
    return ((x + m - 1) // m) * m


# ----------------------------------------------------------------------------
# Kernel 1: tiled matmul + bias + activation (stem conv hot path)
# ----------------------------------------------------------------------------
def _mm_bias_act_kernel(a_ref, b_ref, bias_ref, o_ref, *, act):
    acc = jnp.dot(a_ref[...], b_ref[...], preferred_element_type=jnp.float32)
    acc = acc + bias_ref[...]
    if act == "silu":
        acc = acc * jax.nn.sigmoid(acc)
    elif act == "sigmoid":
        acc = jax.nn.sigmoid(acc)
    o_ref[...] = acc.astype(o_ref.dtype)


def matmul_bias_act(a, b, bias, act="none", out_dtype=jnp.bfloat16, tm=128, tn=512):
    """a: (M, K) bf16, b: (K, N) bf16, bias: (N,) f32 -> padded (Mp, Np) out.

    Whole-K blocks (K <= 32 here).  The f32 epilogue tile is capped at 128 KB
    so bias/activation stay in registers.  For the stem, Np == tn (single N
    tile) so the weight/bias blocks have constant index maps and are fetched
    once and kept resident.  Caller slices the padded result lazily.
    """
    # TODO(synk): for real MBConv expand convs (K up to 1152) add a K grid axis
    # ("arbitrary") with a VMEM f32 accumulator and keep the weight resident.
    M, K = a.shape
    _, N = b.shape
    Np = _round_up(N, 128)
    tn = min(tn, Np)
    while tm > 8 and tm * tn * 4 > 128 * 1024:   # cap f32 epilogue tile (no spills)
        tm //= 2
    tm = min(tm, _round_up(M, 8))
    Mp = _round_up(M, tm)
    if Mp != M:
        a = jnp.pad(a, ((0, Mp - M), (0, 0)))
    if Np != N:
        b = jnp.pad(b, ((0, 0), (0, Np - N)))
        bias = jnp.pad(bias, ((0, Np - N),))
    return pl.pallas_call(
        functools.partial(_mm_bias_act_kernel, act=act),
        out_shape=jax.ShapeDtypeStruct((Mp, Np), out_dtype),
        grid=(Mp // tm, Np // tn),
        in_specs=[
            pl.BlockSpec((tm, K), lambda i, j: (i, 0)),
            pl.BlockSpec((K, tn), lambda i, j: (0, j)),    # resident when Np == tn
            pl.BlockSpec((1, tn), lambda i, j: (0, j)),
        ],
        out_specs=pl.BlockSpec((tm, tn), lambda i, j: (i, j)),
        compiler_params=pltpu.CompilerParams(
            dimension_semantics=("parallel", "parallel")),
    )(a, b, bias.reshape(1, Np).astype(jnp.float32))


# ----------------------------------------------------------------------------
# Kernel 2: depthwise 3x3 conv + folded BN + SiLU, fused SE squeeze (GAP)
#   Lane axis carries (W, C) interleaved -> W*C lanes.  H-strip tiled grid;
#   the padded image is a resident block per b, strips are sliced in-kernel.
# ----------------------------------------------------------------------------
def _dwconv_bn_silu_se_kernel(x_ref, w_ref, s_ref, b_ref, sel_ref,
                              y_ref, sq_ref, acc_ref, *, W, C, HT, inv_hw):
    h = pl.program_id(1)

    @pl.when(h == 0)
    def _init():
        acc_ref[...] = jnp.zeros_like(acc_ref)

    row0 = pl.multiple_of(h * HT, HT)
    xs = x_ref[0, pl.ds(row0, HT + 2), :].astype(jnp.float32)   # (HT+2, (W+2)*C)
    # hoist the 3 kw lane-offset slices out of the kh loop (3 lane relayouts, not 9)
    cols = [xs[:, kw * C: kw * C + W * C] for kw in range(3)]
    w = w_ref[...]                                              # (3, 3, W*C)
    acc = jnp.zeros((HT, W * C), jnp.float32)
    for kh in range(3):
        for kw in range(3):
            acc = acc + cols[kw][kh:kh + HT, :] * w[kh, kw]
    acc = acc * s_ref[...] + b_ref[...]                         # folded BN
    y = acc * jax.nn.sigmoid(acc)                               # SiLU (f32 on the VPU)
    y_ref[0] = y.astype(y_ref.dtype)
    # fused SE squeeze: partial per-channel spatial sum via bf16 selector matmul
    col = jnp.sum(y, axis=0, keepdims=True).astype(jnp.bfloat16)           # (1, W*C)
    acc_ref[...] += jnp.dot(col, sel_ref[...], preferred_element_type=jnp.float32)

    @pl.when(h == pl.num_programs(1) - 1)
    def _fin():
        sq_ref[0] = acc_ref[...] * inv_hw


def dwconv3x3_bn_silu_se(x, w, scale, bias, ht=8):
    """x: (B, H, W, C) bf16 -> (y: (B, H, W, C) bf16, squeeze: (B, C) f32)."""
    B, H, W, C = x.shape
    if H % ht != 0:
        ht = H  # TODO(synk): pad H for resolutions not divisible by the strip size
    xp = jnp.pad(x, ((0, 0), (1, 1), (1, 1), (0, 0))).reshape(B, H + 2, (W + 2) * C)
    w_t = jnp.tile(w, (1, 1, W)).astype(jnp.float32)                  # (3, 3, W*C)
    s_t = jnp.tile(scale, (W,)).reshape(1, W * C).astype(jnp.float32)
    b_t = jnp.tile(bias, (W,)).reshape(1, W * C).astype(jnp.float32)
    sel = jnp.tile(jnp.eye(C, dtype=jnp.bfloat16), (W, 1))            # (W*C, C) bf16
    # TODO(synk): at real 112x112 resolutions also tile W (W*C lanes per row get
    # too wide for vregs); toy shapes fit comfortably.
    y, sq = pl.pallas_call(
        functools.partial(_dwconv_bn_silu_se_kernel,
                          W=W, C=C, HT=ht, inv_hw=1.0 / (H * W)),
        out_shape=(jax.ShapeDtypeStruct((B, H, W * C), jnp.bfloat16),
                   jax.ShapeDtypeStruct((B, 1, C), jnp.float32)),
        grid=(B, H // ht),
        in_specs=[
            pl.BlockSpec((1, H + 2, (W + 2) * C), lambda b, h: (b, 0, 0)),  # resident/b
            pl.BlockSpec((3, 3, W * C), lambda b, h: (0, 0, 0)),
            pl.BlockSpec((1, W * C), lambda b, h: (0, 0)),
            pl.BlockSpec((1, W * C), lambda b, h: (0, 0)),
            pl.BlockSpec((W * C, C), lambda b, h: (0, 0)),
        ],
        out_specs=(pl.BlockSpec((1, ht, W * C), lambda b, h: (b, h, 0)),
                   pl.BlockSpec((1, 1, C), lambda b, h: (b, 0, 0))),
        scratch_shapes=[pltpu.VMEM((1, C), jnp.float32)],
        compiler_params=pltpu.CompilerParams(
            dimension_semantics=("parallel", "arbitrary")),
    )(xp, w_t, s_t, b_t, sel)
    return y.reshape(B, H, W, C), sq.reshape(B, C)


# ----------------------------------------------------------------------------
# Kernel 3: SE-scale + (proj∘head) 1x1 conv + folded BN + SiLU + global avg pool
#   Output is the final (B, 1280) feature; the (B,Ho,Wo,1280) activation never
#   leaves VMEM.  The per-image activation block is resident (read once); the
#   spatial reduction runs over an innermost "arbitrary" grid axis with a VMEM
#   f32 accumulator; the per-step f32 epilogue tile is (tm, tn) <= 128 KB.
# ----------------------------------------------------------------------------
def _head_gap_kernel(x_ref, g_ref, w_ref, bias_ref, o_ref, acc_ref,
                     *, tm, hw, inv_hw, need_mask):
    m = pl.program_id(2)

    @pl.when(m == 0)
    def _init():
        acc_ref[...] = jnp.zeros_like(acc_ref)

    row0 = pl.multiple_of(m * tm, tm)
    a = (x_ref[0, pl.ds(row0, tm), :] * g_ref[0]).astype(jnp.bfloat16)   # SE gate
    y = jnp.dot(a, w_ref[...], preferred_element_type=jnp.float32)       # (tm, tn)
    y = y + bias_ref[...]
    y = y * jax.nn.sigmoid(y)                                            # SiLU/pixel
    if need_mask:  # padded rows would contribute silu(bias) -> mask them out
        rows = row0 + lax.broadcasted_iota(jnp.int32, (tm, 1), 0)
        y = jnp.where(rows < hw, y, 0.0)
    acc_ref[...] += jnp.sum(y, axis=0, keepdims=True)                    # partial GAP

    @pl.when(m == pl.num_programs(2) - 1)
    def _fin():
        o_ref[0] = (acc_ref[...] * inv_hw).astype(o_ref.dtype)


def head_matmul_gap(x, gate, w, bias, tm=128, tn=256):
    """x: (B, HW, C) bf16, gate: (B, 1, C) bf16, w: (C, N) bf16, bias: (N,) f32.

    Returns (B, N) f32 = mean over HW of silu((x * gate) @ w + bias).
    """
    B, HW, C = x.shape
    _, N = w.shape
    Np = _round_up(N, 128)
    tn = min(tn, Np)
    while tm > 8 and tm * tn * 4 > 128 * 1024:   # cap f32 epilogue tile (no spills)
        tm //= 2
    HWp = _round_up(HW, tm)
    if HWp != HW:
        x = jnp.pad(x, ((0, 0), (0, HWp - HW), (0, 0)))
    if Np != N:
        w = jnp.pad(w, ((0, 0), (0, Np - N)))
        bias = jnp.pad(bias, ((0, Np - N),))
    out = pl.pallas_call(
        functools.partial(_head_gap_kernel, tm=tm, hw=HW, inv_hw=1.0 / HW,
                          need_mask=(HWp != HW)),
        out_shape=jax.ShapeDtypeStruct((B, 1, Np), jnp.float32),
        grid=(B, Np // tn, HWp // tm),
        in_specs=[
            # whole per-image activation resident in VMEM -> DMA'd exactly once
            pl.BlockSpec((1, HWp, C), lambda b, n, m: (b, 0, 0)),
            pl.BlockSpec((1, 1, C), lambda b, n, m: (b, 0, 0)),
            pl.BlockSpec((C, tn), lambda b, n, m: (0, n)),
            pl.BlockSpec((1, tn), lambda b, n, m: (0, n)),
        ],
        out_specs=pl.BlockSpec((1, 1, tn), lambda b, n, m: (b, 0, n)),
        scratch_shapes=[pltpu.VMEM((1, tn), jnp.float32)],
        compiler_params=pltpu.CompilerParams(
            dimension_semantics=("parallel", "parallel", "arbitrary")),
    )(x, gate, w, bias.reshape(1, Np).astype(jnp.float32))
    return out.reshape(B, Np)[:, :N]


# ----------------------------------------------------------------------------
# Plain-JAX glue (layout plumbing, im2col, BN folding, parameter init)
# ----------------------------------------------------------------------------
def im2col(x, k, stride, pad):
    """NHWC (bf16) -> patches [B*Ho*Wo, k*k*Cin]; tap order is (kh, kw, Cin)."""
    # TODO(synk): at real EfficientNet resolutions do im2col inside the stem
    # kernel (row-strip index_map) instead of materializing patches in HBM.
    B, H, W, C = x.shape
    xp = jnp.pad(x, ((0, 0), (pad, pad), (pad, pad), (0, 0)))
    Ho = (H + 2 * pad - k) // stride + 1
    Wo = (W + 2 * pad - k) // stride + 1
    cols = []
    for i in range(k):
        for j in range(k):
            cols.append(xp[:, i:i + stride * Ho:stride, j:j + stride * Wo:stride, :])
    patches = jnp.stack(cols, axis=3)            # (B, Ho, Wo, k*k, C)
    return patches.reshape(B * Ho * Wo, k * k * C), Ho, Wo


def fold_bn(gamma, beta, mean, var, eps=1e-3):
    scale = gamma / jnp.sqrt(var + eps)
    bias = beta - mean * scale
    return scale, bias


def torch_conv_to_matmul(w_oikk):
    """(Cout, Cin, kh, kw) -> (kh*kw*Cin, Cout), matching im2col tap order."""
    co, ci, kh, kw = w_oikk.shape
    return jnp.transpose(w_oikk, (2, 3, 1, 0)).reshape(kh * kw * ci, co)


def init_params(key):
    ks = jax.random.split(key, 16)
    f = jnp.float32

    def bn(k, c):
        k1, k2, k3, k4 = jax.random.split(k, 4)
        gamma = 1.0 + 0.1 * jax.random.normal(k1, (c,), f)
        beta = 0.1 * jax.random.normal(k2, (c,), f)
        mean = 0.1 * jax.random.normal(k3, (c,), f)
        var = 1.0 + 0.1 * jnp.abs(jax.random.normal(k4, (c,), f))
        return gamma, beta, mean, var

    p = {}
    # stem: Conv2d(3, 32, k=3, s=2, p=1, bias=False) + BN + SiLU
    p["stem_w"] = torch_conv_to_matmul(0.1 * jax.random.normal(ks[0], (32, 3, 3, 3), f))
    p["stem_bn"] = bn(ks[1], 32)
    # MBConv-1 (expand ratio 1): depthwise 3x3 (groups=32) + BN + SiLU
    p["dw_w"] = jnp.transpose(
        0.1 * jax.random.normal(ks[2], (32, 1, 3, 3), f)[:, 0], (1, 2, 0))  # (3,3,32)
    p["dw_bn"] = bn(ks[3], 32)
    # SE: 1x1 conv 32->8 (SiLU), 1x1 conv 8->32 (sigmoid), both with bias
    p["se_w1"] = 0.1 * jax.random.normal(ks[4], (32, 8), f)
    p["se_b1"] = 0.1 * jax.random.normal(ks[5], (8,), f)
    p["se_w2"] = 0.1 * jax.random.normal(ks[6], (8, 32), f)
    p["se_b2"] = 0.1 * jax.random.normal(ks[7], (32,), f)
    # project: Conv2d(32, 16, k=1, bias=False) + BN (no activation)
    p["proj_w"] = 0.1 * jax.random.normal(ks[8], (32, 16), f)
    p["proj_bn"] = bn(ks[9], 16)
    # head: Conv2d(16, 1280, k=1, bias=False) + BN + SiLU  -> out_dim = 1280
    p["head_w"] = 0.1 * jax.random.normal(ks[10], (16, 1280), f)
    p["head_bn"] = bn(ks[11], 1280)
    return p


def cnn_branch_forward(img_nchw, params):
    # NCHW -> NHWC, cast to bf16 up front so im2col patches are built in bf16
    x = jnp.transpose(img_nchw, (0, 2, 3, 1)).astype(jnp.bfloat16)
    B = x.shape[0]

    # --- stem conv 3x3 s2 p1 + BN + SiLU (im2col matmul, bf16 MXU operands) ---
    patches, Ho, Wo = im2col(x, k=3, stride=2, pad=1)               # (M, 27) bf16
    s, b = fold_bn(*params["stem_bn"])
    w_stem = params["stem_w"] * s[None, :]                          # (27, 32) f32
    Kp = 32                                                         # pad K 27 -> 32
    patches = jnp.pad(patches, ((0, 0), (0, Kp - patches.shape[1])))
    w_stem = jnp.pad(w_stem, ((0, Kp - w_stem.shape[0]), (0, 0))).astype(jnp.bfloat16)
    y_pad = matmul_bias_act(patches, w_stem, b, act="silu")         # (M, 128) bf16
    # lazy slice of the lane-padded stem output: fuses into the dw pre-pack copy
    M = B * Ho * Wo
    x = y_pad[:M, :32].reshape(B, Ho, Wo, 32)                       # bf16

    # --- MBConv: depthwise conv + BN + SiLU, with SE squeeze fused in-kernel ---
    s, b = fold_bn(*params["dw_bn"])
    x, sq = dwconv3x3_bn_silu_se(x, params["dw_w"], s, b)           # bf16, (B,32) f32

    # --- SE excite (tiny FCs: plain jnp, not worth a pallas_call) ---
    h = sq @ params["se_w1"] + params["se_b1"]
    h = h * jax.nn.sigmoid(h)
    gate = jax.nn.sigmoid(h @ params["se_w2"] + params["se_b2"])    # (B, 32) f32

    # --- SE-scale + proj(linear)∘head(SiLU) 1x1 convs + global avg pool, fused ---
    # proj has no activation and no residual here, so proj∘head composes exactly.
    sp, bp = fold_bn(*params["proj_bn"])
    sh, bh = fold_bn(*params["head_bn"])
    w_proj = params["proj_w"] * sp[None, :]                         # (32, 16)
    w_head = params["head_w"] * sh[None, :]                         # (16, 1280)
    w_comb = (w_proj @ w_head).astype(jnp.bfloat16)                 # (32, 1280)
    b_comb = bp @ w_head + bh                                       # (1280,)
    a = x.reshape(B, Ho * Wo, 32)                                   # contiguous reshape
    gate_b = gate.reshape(B, 1, 32).astype(jnp.bfloat16)
    feat = head_matmul_gap(a, gate_b, w_comb, b_comb)               # (B, 1280) f32
    return feat


if __name__ == "__main__":
    key = jax.random.PRNGKey(0)
    k_img, k_par = jax.random.split(key)
    img = jax.random.normal(k_img, (2, 3, 32, 32), jnp.float32)  # NCHW, like PyTorch
    params = init_params(k_par)

    fwd = jax.jit(cnn_branch_forward)
    out = jax.block_until_ready(fwd(img, params))
    assert out.shape == (2, 1280), out.shape
    assert bool(jnp.all(jnp.isfinite(out)))
    print("KERNEL_OK")
</pallas_src>

<mosaic_0001>
module attributes {stable_mosaic.version = 11 : i64} {
  func.func @_mm_bias_act_kernel(%arg0: i32, %arg1: i32, %arg2: memref<128x32xbf16, #tpu.memory_space<vmem>>, %arg3: memref<32x128xbf16, #tpu.memory_space<vmem>>, %arg4: memref<1x128xf32, #tpu.memory_space<vmem>>, %arg5: memref<128x128xbf16, #tpu.memory_space<vmem>>) attributes {dimension_semantics = [#tpu.dimension_semantics<parallel>, #tpu.dimension_semantics<parallel>], iteration_bounds = array<i64: 4, 1>, scalar_prefetch = 0 : i64, scratch_operands = 0 : i64, tpu.core_type = #tpu.core_type<tc>, window_params = [{transform_indices = @transform_0, window_bounds = array<i64: 128, 32>}, {transform_indices = @transform_1, window_bounds = array<i64: 32, 128>}, {transform_indices = @transform_2, window_bounds = array<i64: 1, 128>}, {transform_indices = @transform_3, window_bounds = array<i64: 128, 128>}]} {
    %c0 = arith.constant 0 : index
    %c0_0 = arith.constant 0 : index
    %0 = vector.load %arg2[%c0, %c0_0] : memref<128x32xbf16, #tpu.memory_space<vmem>>, vector<128x32xbf16>
    %c0_1 = arith.constant 0 : index
    %c0_2 = arith.constant 0 : index
    %1 = vector.load %arg3[%c0_1, %c0_2] : memref<32x128xbf16, #tpu.memory_space<vmem>>, vector<32x128xbf16>
    %cst = arith.constant dense<0.000000e+00> : vector<128x128xf32>
    %2 = tpu.matmul %0, %1, %cst {dimension_numbers = #tpu.dot_dimension_numbers<[1], [0], [0], [1], [0, 0, 1, 1], [], []>} : vector<128x32xbf16>, vector<32x128xbf16>, vector<128x128xf32> -> vector<128x128xf32>
    %c0_3 = arith.constant 0 : index
    %c0_4 = arith.constant 0 : index
    %3 = vector.load %arg4[%c0_3, %c0_4] : memref<1x128xf32, #tpu.memory_space<vmem>>, vector<1x128xf32>
    %4 = vector.broadcast %3 : vector<1x128xf32> to vector<128x128xf32>
    %5 = arith.addf %2, %4 : vector<128x128xf32>
    %6 = arith.negf %5 : vector<128x128xf32>
    %7 = math.exp %6 : vector<128x128xf32>
    %cst_5 = arith.constant 1.000000e+00 : f32
    %8 = vector.broadcast %cst_5 : f32 to vector<128x128xf32>
    %9 = arith.addf %8, %7 : vector<128x128xf32>
    %10 = arith.divf %8, %9 : vector<128x128xf32>
    %11 = arith.mulf %5, %10 : vector<128x128xf32>
    %12 = arith.truncf %11 : vector<128x128xf32> to vector<128x128xbf16>
    %c0_6 = arith.constant 0 : index
    %c0_7 = arith.constant 0 : index
    %13 = vector.load %arg5[%c0_6, %c0_7] : memref<128x128xbf16, #tpu.memory_space<vmem>>, vector<128x128xbf16>
    tpu.vector_store %arg5[%c0_6, %c0_7], %12 {strides = array<i32>} : memref<128x128xbf16, #tpu.memory_space<vmem>>, vector<128x128xbf16>,
    return
  }
  func.func @transform_0(%arg0: i32, %arg1: i32) -> (i32, i32) {
    %c0_i32 = arith.constant 0 : i32
    %c0_i32_0 = arith.constant 0 : i32
    return %arg0, %c0_i32 : i32, i32
  }
  func.func @transform_1(%arg0: i32, %arg1: i32) -> (i32, i32) {
    %c0_i32 = arith.constant 0 : i32
    %c0_i32_0 = arith.constant 0 : i32
    return %c0_i32, %arg1 : i32, i32
  }
  func.func @transform_2(%arg0: i32, %arg1: i32) -> (i32, i32) {
    %c0_i32 = arith.constant 0 : i32
    %c0_i32_0 = arith.constant 0 : i32
    return %c0_i32, %arg1 : i32, i32
  }
  func.func @transform_3(%arg0: i32, %arg1: i32) -> (i32, i32) {
    %c0_i32 = arith.constant 0 : i32
    return %arg0, %arg1 : i32, i32
  }
}

module attributes {stable_mosaic.version = 11 : i64} {
  func.func @_dwconv_bn_silu_se_kernel(%arg0: i32, %arg1: i32, %arg2: memref<1x18x576xbf16, #tpu.memory_space<vmem>>, %arg3: memref<3x3x512xf32, #tpu.memory_space<vmem>>, %arg4: memref<1x512xf32, #tpu.memory_space<vmem>>, %arg5: memref<1x512xf32, #tpu.memory_space<vmem>>, %arg6: memref<512x32xbf16, #tpu.memory_space<vmem>>, %arg7: memref<1x8x512xbf16, #tpu.memory_space<vmem>>, %arg8: memref<1x1x32xf32, #tpu.memory_space<vmem>>, %arg9: memref<1x32xf32, #tpu.memory_space<vmem>>) attributes {dimension_semantics = [#tpu.dimension_semantics<parallel>, #tpu.dimension_semantics<arbitrary>], iteration_bounds = array<i64: 2, 2>, scalar_prefetch = 0 : i64, scratch_operands = 1 : i64, tpu.core_type = #tpu.core_type<tc>, window_params = [{transform_indices = @transform_0, window_bounds = array<i64: 1, 18, 576>}, {pipeline_mode = #tpu.pipeline_mode<synchronous>, transform_indices = @transform_1, window_bounds = array<i64: 3, 3, 512>}, {pipeline_mode = #tpu.pipeline_mode<synchronous>, transform_indices = @transform_2, window_bounds = array<i64: 1, 512>}, {pipeline_mode = #tpu.pipeline_mode<synchronous>, transform_indices = @transform_3, window_bounds = array<i64: 1, 512>}, {pipeline_mode = #tpu.pipeline_mode<synchronous>, transform_indices = @transform_4, window_bounds = array<i64: 512, 32>}, {transform_indices = @transform_5, window_bounds = array<i64: 1, 8, 512>}, {transform_indices = @transform_6, window_bounds = array<i64: 1, 1, 32>}]} {
    %c0_i32 = arith.constant 0 : i32
    %0 = arith.cmpi eq, %arg1, %c0_i32 : i32
    %1 = arith.extui %0 : i1 to i32
    %c0_i32_0 = arith.constant 0 : i32
    %2 = arith.cmpi ne, %1, %c0_i32_0 : i32
    scf.if %2 {
      %cst_22 = arith.constant 0.000000e+00 : f32
      %104 = vector.broadcast %cst_22 : f32 to vector<1x32xf32>
      %c0_23 = arith.constant 0 : index
      %c0_24 = arith.constant 0 : index
      %105 = vector.load %arg9[%c0_23, %c0_24] : memref<1x32xf32, #tpu.memory_space<vmem>>, vector<1x32xf32>
      tpu.vector_store %arg9[%c0_23, %c0_24], %104 {strides = array<i32>} : memref<1x32xf32, #tpu.memory_space<vmem>>, vector<1x32xf32>,
    } else {
    }
    %c8_i32 = arith.constant 8 : i32
    %3 = arith.muli %arg1, %c8_i32 : i32
    %4 = tpu.assume_multiple %3, 8 : i32
    %c0 = arith.constant 0 : index
    %5 = arith.index_cast %4 : i32 to index
    %c0_1 = arith.constant 0 : index
    %6 = vector.load %arg2[%c0, %5, %c0_1] : memref<1x18x576xbf16, #tpu.memory_space<vmem>>, vector<1x10x576xbf16>
    %7 = vector.shape_cast %6 : vector<1x10x576xbf16> to vector<10x576xbf16>
    %8 = arith.extf %7 : vector<10x576xbf16> to vector<10x576xf32>
    %9 = vector.extract_strided_slice %8 {offsets = [0, 0], sizes = [10, 512], strides = [1, 1]} : vector<10x576xf32> to vector<10x512xf32>
    %10 = vector.extract_strided_slice %8 {offsets = [0, 32], sizes = [10, 512], strides = [1, 1]} : vector<10x576xf32> to vector<10x512xf32>
    %11 = vector.extract_strided_slice %8 {offsets = [0, 64], sizes = [10, 512], strides = [1, 1]} : vector<10x576xf32> to vector<10x512xf32>
    %c0_2 = arith.constant 0 : index
    %c0_3 = arith.constant 0 : index
    %c0_4 = arith.constant 0 : index
    %12 = vector.load %arg3[%c0_2, %c0_3, %c0_4] : memref<3x3x512xf32, #tpu.memory_space<vmem>>, vector<3x3x512xf32>
    %cst = arith.constant 0.000000e+00 : f32
    %13 = vector.broadcast %cst : f32 to vector<8x512xf32>
    %14 = vector.extract_strided_slice %9 {offsets = [0, 0], sizes = [8, 512], strides = [1, 1]} : vector<10x512xf32> to vector<8x512xf32>
    %15 = vector.extract_strided_slice %12 {offsets = [0, 0, 0], sizes = [1, 1, 512], strides = [1, 1, 1]} : vector<3x3x512xf32> to vector<1x1x512xf32>
    %16 = vector.shape_cast %15 : vector<1x1x512xf32> to vector<512xf32>
    %17 = vector.shape_cast %16 : vector<512xf32> to vector<1x512xf32>
    %18 = vector.broadcast %17 : vector<1x512xf32> to vector<8x512xf32>
    %19 = arith.mulf %14, %18 : vector<8x512xf32>
    %20 = arith.addf %13, %19 : vector<8x512xf32>
    %21 = vector.extract_strided_slice %10 {offsets = [0, 0], sizes = [8, 512], strides = [1, 1]} : vector<10x512xf32> to vector<8x512xf32>
    %22 = vector.extract_strided_slice %12 {offsets = [0, 1, 0], sizes = [1, 1, 512], strides = [1, 1, 1]} : vector<3x3x512xf32> to vector<1x1x512xf32>
    %23 = vector.shape_cast %22 : vector<1x1x512xf32> to vector<512xf32>
    %24 = vector.shape_cast %23 : vector<512xf32> to vector<1x512xf32>
    %25 = vector.broadcast %24 : vector<1x512xf32> to vector<8x512xf32>
    %26 = arith.mulf %21, %25 : vector<8x512xf32>
    %27 = arith.addf %20, %26 : vector<8x512xf32>
    %28 = vector.extract_strided_slice %11 {offsets = [0, 0], sizes = [8, 512], strides = [1, 1]} : vector<10x512xf32> to vector<8x512xf32>
    %29 = vector.extract_strided_slice %12 {offsets = [0, 2, 0], sizes = [1, 1, 512], strides = [1, 1, 1]} : vector<3x3x512xf32> to vector<1x1x512xf32>
    %30 = vector.shape_cast %29 : vector<1x1x512xf32> to vector<512xf32>
    %31 = vector.shape_cast %30 : vector<512xf32> to vector<1x512xf32>
    %32 = vector.broadcast %31 : vector<1x512xf32> to vector<8x512xf32>
    %33 = arith.mulf %28, %32 : vector<8x512xf32>
    %34 = arith.addf %27, %33 : vector<8x512xf32>
    %35 = vector.extract_strided_slice %9 {offsets = [1, 0], sizes = [8, 512], strides = [1, 1]} : vector<10x512xf32> to vector<8x512xf32>
    %36 = vector.extract_strided_slice %12 {offsets = [1, 0, 0], sizes = [1, 1, 512], strides = [1, 1, 1]} : vector<3x3x512xf32> to vector<1x1x512xf32>
    %37 = vector.shape_cast %36 : vector<1x1x512xf32> to vector<512xf32>
    %38 = vector.shape_cast %37 : vector<512xf32> to vector<1x512xf32>
    %39 = vector.broadcast %38 : vector<1x512xf32> to vector<8x512xf32>
    %40 = arith.mulf %35, %39 : vector<8x512xf32>
    %41 = arith.addf %34, %40 : vector<8x512xf32>
    %42 = vector.extract_strided_slice %10 {offsets = [1, 0], sizes = [8, 512], strides = [1, 1]} : vector<10x512xf32> to vector<8x512xf32>
    %43 = vector.extract_strided_slice %12 {offsets = [1, 1, 0], sizes = [1, 1, 512], strides = [1, 1, 1]} : vector<3x3x512xf32> to vector<1x1x512xf32>
    %44 = vector.shape_cast %43 : vector<1x1x512xf32> to vector<512xf32>
    %45 = vector.shape_cast %44 : vector<512xf32> to vector<1x512xf32>
    %46 = vector.broadcast %45 : vector<1x512xf32> to vector<8x512xf32>
    %47 = arith.mulf %42, %46 : vector<8x512xf32>
    %48 = arith.addf %41, %47 : vector<8x512xf32>
    %49 = vector.extract_strided_slice %11 {offsets = [1, 0], sizes = [8, 512], strides = [1, 1]} : vector<10x512xf32> to vector<8x512xf32>
    %50 = vector.extract_strided_slice %12 {offsets = [1, 2, 0], sizes = [1, 1, 512], strides = [1, 1, 1]} : vector<3x3x512xf32> to vector<1x1x512xf32>
    %51 = vector.shape_cast %50 : vector<1x1x512xf32> to vector<512xf32>
    %52 = vector.shape_cast %51 : vector<512xf32> to vector<1x512xf32>
    %53 = vector.broadcast %52 : vector<1x512xf32> to vector<8x512xf32>
    %54 = arith.mulf %49, %53 : vector<8x512xf32>
    %55 = arith.addf %48, %54 : vector<8x512xf32>
    %56 = vector.extract_strided_slice %9 {offsets = [2, 0], sizes = [8, 512], strides = [1, 1]} : vector<10x512xf32> to vector<8x512xf32>
    %57 = vector.extract_strided_slice %12 {offsets = [2, 0, 0], sizes = [1, 1, 512], strides = [1, 1, 1]} : vector<3x3x512xf32> to vector<1x1x512xf32>
    %58 = vector.shape_cast %57 : vector<1x1x512xf32> to vector<512xf32>
    %59 = vector.shape_cast %58 : vector<512xf32> to vector<1x512xf32>
    %60 = vector.broadcast %59 : vector<1x512xf32> to vector<8x512xf32>
    %61 = arith.mulf %56, %60 : vector<8x512xf32>
    %62 = arith.addf %55, %61 : vector<8x512xf32>
    %63 = vector.extract_strided_slice %10 {offsets = [2, 0], sizes = [8, 512], strides = [1, 1]} : vector<10x512xf32> to vector<8x512xf32>
    %64 = vector.extract_strided_slice %12 {offsets = [2, 1, 0], sizes = [1, 1, 512], strides = [1, 1, 1]} : vector<3x3x512xf32> to vector<1x1x512xf32>
    %65 = vector.shape_cast %64 : vector<1x1x512xf32> to vector<512xf32>
    %66 = vector.shape_cast %65 : vector<512xf32> to vector<1x512xf32>
    %67 = vector.broadcast %66 : vector<1x512xf32> to vector<8x512xf32>
    %68 = arith.mulf %63, %67 : vector<8x512xf32>
    %69 = arith.addf %62, %68 : vector<8x512xf32>
    %70 = vector.extract_strided_slice %11 {offsets = [2, 0], sizes = [8, 512], strides = [1, 1]} : vector<10x512xf32> to vector<8x512xf32>
    %71 = vector.extract_strided_slice %12 {offsets = [2, 2, 0], sizes = [1, 1, 512], strides = [1, 1, 1]} : vector<3x3x512xf32> to vector<1x1x512xf32>
    %72 = vector.shape_cast %71 : vector<1x1x512xf32> to vector<512xf32>
    %73 = vector.shape_cast %72 : vector<512xf32> to vector<1x512xf32>
    %74 = vector.broadcast %73 : vector<1x512xf32> to vector<8x512xf32>
    %75 = arith.mulf %70, %74 : vector<8x512xf32>
    %76 = arith.addf %69, %75 : vector<8x512xf32>
    %c0_5 = arith.constant 0 : index
    %c0_6 = arith.constant 0 : index
    %77 = vector.load %arg4[%c0_5, %c0_6] : memref<1x512xf32, #tpu.memory_space<vmem>>, vector<1x512xf32>
    %78 = vector.broadcast %77 : vector<1x512xf32> to vector<8x512xf32>
    %79 = arith.mulf %76, %78 : vector<8x512xf32>
    %c0_7 = arith.constant 0 : index
    %c0_8 = arith.constant 0 : index
    %80 = vector.load %arg5[%c0_7, %c0_8] : memref<1x512xf32, #tpu.memory_space<vmem>>, vector<1x512xf32>
    %81 = vector.broadcast %80 : vector<1x512xf32> to vector<8x512xf32>
    %82 = arith.addf %79, %81 : vector<8x512xf32>
    %83 = arith.negf %82 : vector<8x512xf32>
    %84 = math.exp %83 : vector<8x512xf32>
    %cst_9 = arith.constant 1.000000e+00 : f32
    %85 = vector.broadcast %cst_9 : f32 to vector<8x512xf32>
    %86 = arith.addf %85, %84 : vector<8x512xf32>
    %87 = arith.divf %85, %86 : vector<8x512xf32>
    %88 = arith.mulf %82, %87 : vector<8x512xf32>
    %89 = arith.truncf %88 : vector<8x512xf32> to vector<8x512xbf16>
    %c0_10 = arith.constant 0 : index
    %c0_11 = arith.constant 0 : index
    %c0_12 = arith.constant 0 : index
    %90 = vector.load %arg7[%c0_10, %c0_11, %c0_12] : memref<1x8x512xbf16, #tpu.memory_space<vmem>>, vector<1x8x512xbf16>
    %91 = vector.shape_cast %90 : vector<1x8x512xbf16> to vector<8x512xbf16>
    %92 = vector.shape_cast %89 : vector<8x512xbf16> to vector<1x8x512xbf16>
    tpu.vector_store %arg7[%c0_10, %c0_11, %c0_12], %92 {strides = array<i32>} : memref<1x8x512xbf16, #tpu.memory_space<vmem>>, vector<1x8x512xbf16>,
    %cst_13 = arith.constant dense<0.000000e+00> : vector<512xf32>
    %93 = vector.multi_reduction <add>, %88, %cst_13 [0] : vector<8x512xf32> to vector<512xf32>
    %94 = vector.shape_cast %93 : vector<512xf32> to vector<1x512xf32>
    %95 = arith.truncf %94 : vector<1x512xf32> to vector<1x512xbf16>
    %c0_14 = arith.constant 0 : index
    %c0_15 = arith.constant 0 : index
    %96 = vector.load %arg9[%c0_14, %c0_15] : memref<1x32xf32, #tpu.memory_space<vmem>>, vector<1x32xf32>
    %c0_16 = arith.constant 0 : index
    %c0_17 = arith.constant 0 : index
    %97 = vector.load %arg6[%c0_16, %c0_17] : memref<512x32xbf16, #tpu.memory_space<vmem>>, vector<512x32xbf16>
    %cst_18 = arith.constant dense<0.000000e+00> : vector<1x32xf32>
    %98 = tpu.matmul %95, %97, %cst_18 {dimension_numbers = #tpu.dot_dimension_numbers<[1], [0], [0], [1], [0, 0, 1, 1], [], []>} : vector<1x512xbf16>, vector<512x32xbf16>, vector<1x32xf32> -> vector<1x32xf32>
    %99 = arith.addf %96, %98 : vector<1x32xf32>
    %c0_19 = arith.constant 0 : index
    %c0_20 = arith.constant 0 : index
    %100 = vector.load %arg9[%c0_19, %c0_20] : memref<1x32xf32, #tpu.memory_space<vmem>>, vector<1x32xf32>
    tpu.vector_store %arg9[%c0_19, %c0_20], %99 {strides = array<i32>} : memref<1x32xf32, #tpu.memory_space<vmem>>, vector<1x32xf32>,
    %c1_i32 = arith.constant 1 : i32
    %101 = arith.cmpi eq, %arg1, %c1_i32 : i32
    %102 = arith.extui %101 : i1 to i32
    %c0_i32_21 = arith.constant 0 : i32
    %103 = arith.cmpi ne, %102, %c0_i32_21 : i32
    scf.if %103 {
      %c0_22 = arith.constant 0 : index
      %c0_23 = arith.constant 0 : index
      %104 = vector.load %arg9[%c0_22, %c0_23] : memref<1x32xf32, #tpu.memory_space<vmem>>, vector<1x32xf32>
      %cst_24 = arith.constant 3.906250e-03 : f32
      %105 = vector.broadcast %cst_24 : f32 to vector<1x32xf32>
      %106 = arith.mulf %104, %105 : vector<1x32xf32>
      %c0_25 = arith.constant 0 : index
      %c0_26 = arith.constant 0 : index
      %c0_27 = arith.constant 0 : index
      %107 = vector.load %arg8[%c0_25, %c0_26, %c0_27] : memref<1x1x32xf32, #tpu.memory_space<vmem>>, vector<1x1x32xf32>
      %108 = vector.shape_cast %107 : vector<1x1x32xf32> to vector<1x32xf32>
      %109 = vector.shape_cast %106 : vector<1x32xf32> to vector<1x1x32xf32>
      tpu.vector_store %arg8[%c0_25, %c0_26, %c0_27], %109 {strides = array<i32>} : memref<1x1x32xf32, #tpu.memory_space<vmem>>, vector<1x1x32xf32>,
    } else {
    }
    return
  }
  func.func @transform_0(%arg0: i32, %arg1: i32) -> (i32, i32, i32) {
    %c0_i32 = arith.constant 0 : i32
    %c0_i32_0 = arith.constant 0 : i32
    %c0_i32_1 = arith.constant 0 : i32
    return %arg0, %c0_i32, %c0_i32_0 : i32, i32, i32
  }
  func.func @transform_1(%arg0: i32, %arg1: i32) -> (i32, i32, i32) {
    %c0_i32 = arith.constant 0 : i32
    %c0_i32_0 = arith.constant 0 : i32
    %c0_i32_1 = arith.constant 0 : i32
    %c0_i32_2 = arith.constant 0 : i32
    return %c0_i32, %c0_i32_0, %c0_i32_1 : i32, i32, i32
  }
  func.func @transform_2(%arg0: i32, %arg1: i32) -> (i32, i32) {
    %c0_i32 = arith.constant 0 : i32
    %c0_i32_0 = arith.constant 0 : i32
    %c0_i32_1 = arith.constant 0 : i32
    return %c0_i32, %c0_i32_0 : i32, i32
  }
  func.func @transform_3(%arg0: i32, %arg1: i32) -> (i32, i32) {
    %c0_i32 = arith.constant 0 : i32
    %c0_i32_0 = arith.constant 0 : i32
    %c0_i32_1 = arith.constant 0 : i32
    return %c0_i32, %c0_i32_0 : i32, i32
  }
  func.func @transform_4(%arg0: i32, %arg1: i32) -> (i32, i32) {
    %c0_i32 = arith.constant 0 : i32
    %c0_i32_0 = arith.constant 0 : i32
    %c0_i32_1 = arith.constant 0 : i32
    return %c0_i32, %c0_i32_0 : i32, i32
  }
  func.func @transform_5(%arg0: i32, %arg1: i32) -> (i32, i32, i32) {
    %c0_i32 = arith.constant 0 : i32
    %c0_i32_0 = arith.constant 0 : i32
    return %arg0, %arg1, %c0_i32 : i32, i32, i32
  }
  func.func @transform_6(%arg0: i32, %arg1: i32) -> (i32, i32, i32) {
    %c0_i32 = arith.constant 0 : i32
    %c0_i32_0 = arith.constant 0 : i32
    %c0_i32_1 = arith.constant 0 : i32
    return %arg0, %c0_i32, %c0_i32_0 : i32, i32, i32
  }
}

module attributes {stable_mosaic.version = 11 : i64} {
  func.func @_head_gap_kernel(%arg0: i32, %arg1: i32, %arg2: i32, %arg3: memref<1x256x32xbf16, #tpu.memory_space<vmem>>, %arg4: memref<1x1x32xbf16, #tpu.memory_space<vmem>>, %arg5: memref<32x256xbf16, #tpu.memory_space<vmem>>, %arg6: memref<1x256xf32, #tpu.memory_space<vmem>>, %arg7: memref<1x1x256xf32, #tpu.memory_space<vmem>>, %arg8: memref<1x256xf32, #tpu.memory_space<vmem>>) attributes {dimension_semantics = [#tpu.dimension_semantics<parallel>, #tpu.dimension_semantics<parallel>, #tpu.dimension_semantics<arbitrary>], iteration_bounds = array<i64: 2, 5, 2>, scalar_prefetch = 0 : i64, scratch_operands = 1 : i64, tpu.core_type = #tpu.core_type<tc>, window_params = [{transform_indices = @transform_0, window_bounds = array<i64: 1, 256, 32>}, {transform_indices = @transform_1, window_bounds = array<i64: 1, 1, 32>}, {transform_indices = @transform_2, window_bounds = array<i64: 32, 256>}, {transform_indices = @transform_3, window_bounds = array<i64: 1, 256>}, {transform_indices = @transform_4, window_bounds = array<i64: 1, 1, 256>}]} {
    %c0_i32 = arith.constant 0 : i32
    %0 = arith.cmpi eq, %arg2, %c0_i32 : i32
    %1 = arith.extui %0 : i1 to i32
    %c0_i32_0 = arith.constant 0 : i32
    %2 = arith.cmpi ne, %1, %c0_i32_0 : i32
    scf.if %2 {
      %cst_16 = arith.constant 0.000000e+00 : f32
      %31 = vector.broadcast %cst_16 : f32 to vector<1x256xf32>
      %c0_17 = arith.constant 0 : index
      %c0_18 = arith.constant 0 : index
      %32 = vector.load %arg8[%c0_17, %c0_18] : memref<1x256xf32, #tpu.memory_space<vmem>>, vector<1x256xf32>
      tpu.vector_store %arg8[%c0_17, %c0_18], %31 {strides = array<i32>} : memref<1x256xf32, #tpu.memory_space<vmem>>, vector<1x256xf32>,
    } else {
    }
    %c128_i32 = arith.constant 128 : i32
    %3 = arith.muli %arg2, %c128_i32 : i32
    %4 = tpu.assume_multiple %3, 128 : i32
    %c0 = arith.constant 0 : index
    %5 = arith.index_cast %4 : i32 to index
    %c0_1 = arith.constant 0 : index
    %6 = vector.load %arg3[%c0, %5, %c0_1] : memref<1x256x32xbf16, #tpu.memory_space<vmem>>, vector<1x128x32xbf16>
    %7 = vector.shape_cast %6 : vector<1x128x32xbf16> to vector<128x32xbf16>
    %c0_2 = arith.constant 0 : index
    %c0_3 = arith.constant 0 : index
    %c0_4 = arith.constant 0 : index
    %8 = vector.load %arg4[%c0_2, %c0_3, %c0_4] : memref<1x1x32xbf16, #tpu.memory_space<vmem>>, vector<1x1x32xbf16>
    %9 = vector.shape_cast %8 : vector<1x1x32xbf16> to vector<1x32xbf16>
    %10 = vector.broadcast %9 : vector<1x32xbf16> to vector<128x32xbf16>
    %11 = arith.mulf %7, %10 : vector<128x32xbf16>
    %c0_5 = arith.constant 0 : index
    %c0_6 = arith.constant 0 : index
    %12 = vector.load %arg5[%c0_5, %c0_6] : memref<32x256xbf16, #tpu.memory_space<vmem>>, vector<32x256xbf16>
    %cst = arith.constant dense<0.000000e+00> : vector<128x256xf32>
    %13 = tpu.matmul %11, %12, %cst {dimension_numbers = #tpu.dot_dimension_numbers<[1], [0], [0], [1], [0, 0, 1, 1], [], []>} : vector<128x32xbf16>, vector<32x256xbf16>, vector<128x256xf32> -> vector<128x256xf32>
    %c0_7 = arith.constant 0 : index
    %c0_8 = arith.constant 0 : index
    %14 = vector.load %arg6[%c0_7, %c0_8] : memref<1x256xf32, #tpu.memory_space<vmem>>, vector<1x256xf32>
    %15 = vector.broadcast %14 : vector<1x256xf32> to vector<128x256xf32>
    %16 = arith.addf %13, %15 : vector<128x256xf32>
    %17 = arith.negf %16 : vector<128x256xf32>
    %18 = math.exp %17 : vector<128x256xf32>
    %cst_9 = arith.constant 1.000000e+00 : f32
    %19 = vector.broadcast %cst_9 : f32 to vector<128x256xf32>
    %20 = arith.addf %19, %18 : vector<128x256xf32>
    %21 = arith.divf %19, %20 : vector<128x256xf32>
    %22 = arith.mulf %16, %21 : vector<128x256xf32>
    %c0_10 = arith.constant 0 : index
    %c0_11 = arith.constant 0 : index
    %23 = vector.load %arg8[%c0_10, %c0_11] : memref<1x256xf32, #tpu.memory_space<vmem>>, vector<1x256xf32>
    %cst_12 = arith.constant dense<0.000000e+00> : vector<256xf32>
    %24 = vector.multi_reduction <add>, %22, %cst_12 [0] : vector<128x256xf32> to vector<256xf32>
    %25 = vector.shape_cast %24 : vector<256xf32> to vector<1x256xf32>
    %26 = arith.addf %23, %25 : vector<1x256xf32>
    %c0_13 = arith.constant 0 : index
    %c0_14 = arith.constant 0 : index
    %27 = vector.load %arg8[%c0_13, %c0_14] : memref<1x256xf32, #tpu.memory_space<vmem>>, vector<1x256xf32>
    tpu.vector_store %arg8[%c0_13, %c0_14], %26 {strides = array<i32>} : memref<1x256xf32, #tpu.memory_space<vmem>>, vector<1x256xf32>,
    %c1_i32 = arith.constant 1 : i32
    %28 = arith.cmpi eq, %arg2, %c1_i32 : i32
    %29 = arith.extui %28 : i1 to i32
    %c0_i32_15 = arith.constant 0 : i32
    %30 = arith.cmpi ne, %29, %c0_i32_15 : i32
    scf.if %30 {
      %c0_16 = arith.constant 0 : index
      %c0_17 = arith.constant 0 : index
      %31 = vector.load %arg8[%c0_16, %c0_17] : memref<1x256xf32, #tpu.memory_space<vmem>>, vector<1x256xf32>
      %cst_18 = arith.constant 3.906250e-03 : f32
      %32 = vector.broadcast %cst_18 : f32 to vector<1x256xf32>
      %33 = arith.mulf %31, %32 : vector<1x256xf32>
      %c0_19 = arith.constant 0 : index
      %c0_20 = arith.constant 0 : index
      %c0_21 = arith.constant 0 : index
      %34 = vector.load %arg7[%c0_19, %c0_20, %c0_21] : memref<1x1x256xf32, #tpu.memory_space<vmem>>, vector<1x1x256xf32>
      %35 = vector.shape_cast %34 : vector<1x1x256xf32> to vector<1x256xf32>
      %36 = vector.shape_cast %33 : vector<1x256xf32> to vector<1x1x256xf32>
      tpu.vector_store %arg7[%c0_19, %c0_20, %c0_21], %36 {strides = array<i32>} : memref<1x1x256xf32, #tpu.memory_space<vmem>>, vector<1x1x256xf32>,
    } else {
    }
    return
  }
  func.func @transform_0(%arg0: i32, %arg1: i32, %arg2: i32) -> (i32, i32, i32) {
    %c0_i32 = arith.constant 0 : i32
    %c0_i32_0 = arith.constant 0 : i32
    %c0_i32_1 = arith.constant 0 : i32
    return %arg0, %c0_i32, %c0_i32_0 : i32, i32, i32
  }
  func.func @transform_1(%arg0: i32, %arg1: i32, %arg2: i32) -> (i32, i32, i32) {
    %c0_i32 = arith.constant 0 : i32
    %c0_i32_0 = arith.constant 0 : i32
    %c0_i32_1 = arith.constant 0 : i32
    return %arg0, %c0_i32, %c0_i32_0 : i32, i32, i32
  }
  func.func @transform_2(%arg0: i32, %arg1: i32, %arg2: i32) -> (i32, i32) {
    %c0_i32 = arith.constant 0 : i32
    %c0_i32_0 = arith.constant 0 : i32
    return %c0_i32, %arg1 : i32, i32
  }
  func.func @transform_3(%arg0: i32, %arg1: i32, %arg2: i32) -> (i32, i32) {
    %c0_i32 = arith.constant 0 : i32
    %c0_i32_0 = arith.constant 0 : i32
    return %c0_i32, %arg1 : i32, i32
  }
  func.func @transform_4(%arg0: i32, %arg1: i32, %arg2: i32) -> (i32, i32, i32) {
    %c0_i32 = arith.constant 0 : i32
    %c0_i32_0 = arith.constant 0 : i32
    return %arg0, %c0_i32, %arg1 : i32, i32, i32
  }
}

</mosaic_0001>

<llo_original>
// kernel: cnn_branch_forward.3
$region0: #{cnn_branch_forward.3}
  #allocation0 [shape = 'u32[]', space=smem, size = 0x4, offset = 0x4, fixed_abs, tag = 'smem constant byte address 0x4 - core index']
  #allocation1 [shape = 'u32[72,128]{1,0:T(1,128)}', space=vmem, size = 0x9000, scoped, tag = 'internal scratch']
  %s0 = inlined_call_operand.vmem [shape: bf16[512,32], index: 0, kind: input, shape index: {}]
  %s1 = inlined_call_operand.vmem [shape: bf16[32,128], index: 1, kind: input, shape index: {}]
  %s2 = inlined_call_operand.vmem [shape: f32[1,128], index: 2, kind: input, shape index: {}]
  %s3 = inlined_call_operand.vmem [shape: bf16[512,128], index: 3, kind: output, shape index: {}]
  %s4 = sld [smem:[#allocation0]]
  $region45: #{cnn_branch_forward.3} parent=0
    _
  %s6 = ssub.s32 1, %s4
  %s7 = scalar_select 0, %s6, %s4
  loop: start=0, step=1, limit=6
  $region2: #{cnn_branch_forward.3} parent=0 // loop_pre_header
    _
  $region3: #{cnn_branch_forward.3} parent=0 // loop_header
    %s9 = sphi 0, %s13
    %p10 = scmp.ge.s32.totalorder %s9, 6
    %s16 = sphi 0, %s28
    %s17 = sphi 0, %s24
    %s18 = sphi 0, %s16
    %s19 = sphi 0, %s17
    %s20 = sphi 0, %s18
    %s21 = sphi 0, %s19
    %s31 = sphi 0, %s33
    %s34 = sphi 0, %s31
    %s35 = sphi 0, %s34
    %s51 = sphi 0, %s35
    %s57 = sphi 0, %s59
    %s60 = sphi 0, %s57
    %s61 = sphi 0, %s60
    %s77 = sphi 0, %s61
    %s83 = sphi 0, %s85
    %s86 = sphi 0, %s83
    %s87 = sphi 0, %s86
    %s103 = sphi 0, %s87
    %s111 = sphi 0, %s113
    %s114 = sphi 0, %s111
    %s115 = sphi 0, %s114
    %s131 = sphi 0, %s115
  $region4: #{cnn_branch_forward.3} parent=0 // loop_header_branch
    %12 = sbr.rel (%p10) target = $region8
  $region5: #{cnn_branch_forward.3} parent=0 // loop_body
    %s14 = ssub.s32 %s9, 1
    %s15 = ssub.s32 %s9, 2
    %s22 = sadd.s32 1, %s17
    %p23 = scmp.ge.s32.totalorder %s22, 1
    %s24 = scalar_select %p23, 0, %s22
    %s25 = sadd.s32 1, %s16
    %s26 = scalar_select %p23, %s25, %s16
    %p27 = scmp.ge.s32.totalorder %s26, 4
    %s28 = scalar_select %p27, 0, %s26
    %s29 = ssub.s32 %s16, %s28
    %p30 = scmp.eq.s32.totalorder %s29, 0
    %s32 = sadd.s32 %s31, 1
    %s33 = scalar_select %p30, %s31, %s32
    %p36 = pneg %p30
    %p37 = scmp.eq.s32.totalorder %s9, 3
    %p38 = por %p36, %p37
    %p39 = scmp.ne.s32.totalorder %s31, %s34
    %p40 = scmp.eq.s32.totalorder %s9, 0
    %p41 = por %p39, %p40
    %p42 = scmp.ne.s32.totalorder %s31, %s34
    %p43 = scmp.eq.s32.totalorder %s14, 3
    %p44 = por %p42, %p43
    %p45 = scmp.ne.s32.totalorder %s34, %s35
    %p46 = scmp.eq.s32.totalorder %s14, 0
    %p47 = por %p45, %p46
    %p48 = scmp.ne.s32.totalorder %s34, %s35
    %p49 = scmp.eq.s32.totalorder %s15, 3
    %p50 = por %p48, %p49
    %p52 = scmp.ne.s32.totalorder %s35, %s51
    %p53 = scmp.eq.s32.totalorder %s15, 0
    %p54 = por %p52, %p53
    %s55 = ssub.s32 %s17, %s24
    %p56 = scmp.eq.s32.totalorder %s55, 0
    %s58 = sadd.s32 %s57, 1
    %s59 = scalar_select %p56, %s57, %s58
    %p62 = pneg %p56
    %p63 = scmp.eq.s32.totalorder %s9, 3
    %p64 = por %p62, %p63
    %p65 = scmp.ne.s32.totalorder %s57, %s60
    %p66 = scmp.eq.s32.totalorder %s9, 0
    %p67 = por %p65, %p66
    %p68 = scmp.ne.s32.totalorder %s57, %s60
    %p69 = scmp.eq.s32.totalorder %s14, 3
    %p70 = por %p68, %p69
    %p71 = scmp.ne.s32.totalorder %s60, %s61
    %p72 = scmp.eq.s32.totalorder %s14, 0
    %p73 = por %p71, %p72
    %p74 = scmp.ne.s32.totalorder %s60, %s61
    %p75 = scmp.eq.s32.totalorder %s15, 3
    %p76 = por %p74, %p75
    %p78 = scmp.ne.s32.totalorder %s61, %s77
    %p79 = scmp.eq.s32.totalorder %s15, 0
    %p80 = por %p78, %p79
    %s81 = ssub.s32 %s17, %s24
    %p82 = scmp.eq.s32.totalorder %s81, 0
    %s84 = sadd.s32 %s83, 1
    %s85 = scalar_select %p82, %s83, %s84
    %p88 = pneg %p82
    %p89 = scmp.eq.s32.totalorder %s9, 3
    %p90 = por %p88, %p89
    %p91 = scmp.ne.s32.totalorder %s83, %s86
    %p92 = scmp.eq.s32.totalorder %s9, 0
    %p93 = por %p91, %p92
    %p94 = scmp.ne.s32.totalorder %s83, %s86
    %p95 = scmp.eq.s32.totalorder %s14, 3
    %p96 = por %p94, %p95
    %p97 = scmp.ne.s32.totalorder %s86, %s87
    %p98 = scmp.eq.s32.totalorder %s14, 0
    %p99 = por %p97, %p98
    %p100 = scmp.ne.s32.totalorder %s86, %s87
    %p101 = scmp.eq.s32.totalorder %s15, 3
    %p102 = por %p100, %p101
    %p104 = scmp.ne.s32.totalorder %s87, %s103
    %p105 = scmp.eq.s32.totalorder %s15, 0
    %p106 = por %p104, %p105
    %s107 = ssub.s32 %s16, %s28
    %s108 = ssub.s32 %s17, %s24
    %s109 = sor.u32 %s107, %s108
    %p110 = scmp.eq.s32.totalorder %s109, 0
    %s112 = sadd.s32 %s111, 1
    %s113 = scalar_select %p110, %s111, %s112
    %p116 = pneg %p110
    %p117 = scmp.eq.s32.totalorder %s9, 3
    %p118 = por %p116, %p117
    %p119 = scmp.ne.s32.totalorder %s111, %s114
    %p120 = scmp.eq.s32.totalorder %s9, 0
    %p121 = por %p119, %p120
    %p122 = scmp.ne.s32.totalorder %s111, %s114
    %p123 = scmp.eq.s32.totalorder %s14, 3
    %p124 = por %p122, %p123
    %p125 = scmp.ne.s32.totalorder %s114, %s115
    %p126 = scmp.eq.s32.totalorder %s14, 0
    %p127 = por %p125, %p126
    %p128 = scmp.ne.s32.totalorder %s114, %s115
    %p129 = scmp.eq.s32.totalorder %s15, 3
    %p130 = por %p128, %p129
    %p132 = scmp.ne.s32.totalorder %s115, %s131
    %p133 = scmp.eq.s32.totalorder %s15, 0
    %p134 = por %p132, %p133
    %p135 = scmp.le.s32.totalorder 1, %s9
    %p136 = scmp.lt.s32.totalorder %s9, 5
    %p137 = pnand %p135, %p136
    %p138 = pneg %p137
    // Predicated region
    $region9: #{cnn_branch_forward.3} parent=5 // pred_check
      _
    $region10: #{cnn_branch_forward.3} parent=5 // pred_check_branch
      %140 = sbr.rel (%p137) target = $region12
    $region11: #{cnn_branch_forward.3} parent=5 // pred_region
      %s141 = ssub.s32 %s9, 1
      // Predicated region
      $region13: #{cnn_branch_forward.3} parent=11 // pred_check
        %p142 = pneg %p73
      $region14: #{cnn_branch_forward.3} parent=11 // pred_check_branch
        %144 = sbr.rel (%p142) target = $region16
      $region15: #{cnn_branch_forward.3} parent=11 // pred_region
        %p145 = scmp.lt.s32.totalorder %s19, 0
        %s146 = scalar_select %p145, %s19, 0
        %s147 = smul.addr %s146, 4
        %s148 = scalar_lea.vmem %s1, %s147
      $region16: #{cnn_branch_forward.3} parent=11 // pred_fallthru
        _
      // Predicated region
      $region17: #{cnn_branch_forward.3} parent=11 // pred_check
        %p149 = pneg %p99
      $region18: #{cnn_branch_forward.3} parent=11 // pred_check_branch
        %151 = sbr.rel (%p149) target = $region20
      $region19: #{cnn_branch_forward.3} parent=11 // pred_region
        %p152 = scmp.lt.s32.totalorder %s19, 0
        %s153 = scalar_select %p152, %s19, 0
        %s154 = scalar_lea.vmem %s2, %s153
      $region20: #{cnn_branch_forward.3} parent=11 // pred_fallthru
        _
    $region12: #{cnn_branch_forward.3} parent=5 // pred_fallthru
      _
    %p155 = scmp.lt.s32.totalorder %s9, 4
    // Predicated region
    $region21: #{cnn_branch_forward.3} parent=5 // pred_check
      %p156 = pneg %p155
    $region22: #{cnn_branch_forward.3} parent=5 // pred_check_branch
      %158 = sbr.rel (%p156) target = $region24
    $region23: #{cnn_branch_forward.3} parent=5 // pred_region
      // Predicated region
      $region25: #{cnn_branch_forward.3} parent=23 // pred_check
        %p159 = pneg %p41
      $region26: #{cnn_branch_forward.3} parent=23 // pred_check_branch
        %161 = sbr.rel (%p159) target = $region28
      $region27: #{cnn_branch_forward.3} parent=23 // pred_region
        %s162 = smul.u32 16, %s16
        %p163 = scmp.lt.s32.totalorder %s162, 63
        %s164 = scalar_select %p163, %s162, 63
        %s165 = smul.addr %s164, 4
        %s166 = scalar_lea.vmem %s0, %s165
        %s167 = smul.u32 16, %s16
      $region28: #{cnn_branch_forward.3} parent=23 // pred_fallthru
        _
    $region24: #{cnn_branch_forward.3} parent=5 // pred_fallthru
      _
    %p168 = scmp.le.s32.totalorder 1, %s9
    %p169 = scmp.lt.s32.totalorder %s9, 5
    %p170 = pnand %p168, %p169
    %p171 = pneg %p170
    // Predicated region
    $region29: #{cnn_branch_forward.3} parent=5 // pred_check
      _
    $region30: #{cnn_branch_forward.3} parent=5 // pred_check_branch
      %173 = sbr.rel (%p170) target = $region32
    $region31: #{cnn_branch_forward.3} parent=5 // pred_region
      %s174 = ssub.s32 %s9, 1
      %s175 = smul.u32 16, %s18
      %p176 = scmp.lt.s32.totalorder %s175, 63
      %s177 = scalar_select %p176, %s175, 63
      %s178 = smul.addr %s177, 4
      %s179 = scalar_lea.vmem %s0, %s178
      %p180 = pneg %p47
      %p181 = pneg %p44
      %p182 = scmp.lt.s32.totalorder %s19, 0
      %s183 = scalar_select %p182, %s19, 0
      %s184 = smul.addr %s183, 4
      %s185 = scalar_lea.vmem %s1, %s184
      %p186 = pneg %p73
      %p187 = pneg %p70
      %p188 = scmp.lt.s32.totalorder %s19, 0
      %s189 = scalar_select %p188, %s19, 0
      %s190 = scalar_lea.vmem %s2, %s189
      %p191 = pneg %p99
      %p192 = pneg %p96
      %p193 = pneg %p127
      %p194 = pneg %p124
      %s195 = smul.u32 16, %s18
      %p196 = scmp.lt.s32.totalorder %s195, 63
      %s197 = scalar_select %p196, %s195, 63
      %p198 = scmp.lt.s32.totalorder %s19, 0
      %s199 = scalar_select %p198, %s19, 0
      %s200 = sadd.s32 %s199, %s197
      %s201 = smul.addr %s200, 4
      %s202 = scalar_lea.vmem %s3, %s201
      %s203 = smul.u32 16, %s18
      %p204 = scmp.lt.s32.totalorder %s203, 63
      %s205 = scalar_select %p204, %s203, 63
      %s206 = smul.addr %s205, 4
      %s207 = scalar_lea.vmem %s0, %s206
      %s208 = smul.u32 16, %s18
      %p209 = scmp.lt.s32.totalorder %s19, 0
      %s210 = scalar_select %p209, %s19, 0
      %s211 = smul.addr %s210, 4
      %s212 = scalar_lea.vmem %s1, %s211
      %p213 = scmp.lt.s32.totalorder %s19, 0
      %s214 = scalar_select %p213, %s19, 0
      %s215 = scalar_lea.vmem %s2, %s214
      %s216 = smul.u32 16, %s18
      %p217 = scmp.lt.s32.totalorder %s216, 63
      %s218 = scalar_select %p217, %s216, 63
      %p219 = scmp.lt.s32.totalorder %s19, 0
      %s220 = scalar_select %p219, %s19, 0
      %s221 = sadd.s32 %s220, %s218
      %s222 = smul.addr %s221, 4
      %s223 = scalar_lea.vmem %s3, %s222
      %s224 = smul.u32 16, %s18
      %v226 = vld [vmem:[%s207] sm:$0xf]
      %v227 = vld [vmem:[%s207 + $0x4] sm:$0xf]
      %v228 = vld [vmem:[%s207 + $0x8] sm:$0xf]
      %v229 = vld [vmem:[%s207 + $0xc] sm:$0xf]
      %v230 = vld [vmem:[%s207 + $0x10] sm:$0xf]
      %v231 = vld [vmem:[%s207 + $0x14] sm:$0xf]
      %v232 = vld [vmem:[%s207 + $0x18] sm:$0xf]
      %v233 = vld [vmem:[%s207 + $0x1c] sm:$0xf]
      %v234 = vld [vmem:[%s207 + $0x20] sm:$0xf]
      %v235 = vld [vmem:[%s207 + $0x24] sm:$0xf]
      %v236 = vld [vmem:[%s207 + $0x28] sm:$0xf]
      %v237 = vld [vmem:[%s207 + $0x2c] sm:$0xf]
      %v238 = vld [vmem:[%s207 + $0x30] sm:$0xf]
      %v239 = vld [vmem:[%s207 + $0x34] sm:$0xf]
      %v240 = vld [vmem:[%s207 + $0x38] sm:$0xf]
      %v241 = vld [vmem:[%s207 + $0x3c] sm:$0xf]
      %v242 = vld [vmem:[%s212] sm:$0xf]
      %v243 = vld [vmem:[%s212 + $0x4] sm:$0xf]
      %v244 = vld [vmem:[%s212 + $0x8] sm:$0xf]
      %v245 = vld [vmem:[%s212 + $0xc] sm:$0xf]
      %v246 = vld [vmem:[%s215] sm:$0x1]
      %v248 = vperm.slane %v246, 0
      %v266 = vunpack.c.l.b16 %v226
      %v267 = vunpack.c.l.b16 %v227
      %v268 = vunpack.c.l.b16 %v228
      %v269 = vunpack.c.l.b16 %v229
      %v270 = vunpack.c.l.b16 %v230
      %v271 = vunpack.c.l.b16 %v231
      %v272 = vunpack.c.l.b16 %v232
      %v273 = vunpack.c.l.b16 %v233
      %v274 = vunpack.c.l.b16 %v234
      %v275 = vunpack.c.l.b16 %v235
      %v276 = vunpack.c.l.b16 %v236
      %v277 = vunpack.c.l.b16 %v237
      %v278 = vunpack.c.l.b16 %v238
      %v279 = vunpack.c.l.b16 %v239
      %v280 = vunpack.c.l.b16 %v240
      %v281 = vunpack.c.l.b16 %v241
      %v282 = vpack.c.b16 %v267, %v266
      %v283 = vpack.c.b16 %v269, %v268
      %v284 = vpack.c.b16 %v271, %v270
      %v285 = vpack.c.b16 %v273, %v272
      %v286 = vpack.c.b16 %v275, %v274
      %v287 = vpack.c.b16 %v277, %v276
      %v288 = vpack.c.b16 %v279, %v278
      %v289 = vpack.c.b16 %v281, %v280
      %v294 = vunpack.c.l.b16 %v242
      %v295 = vunpack.c.l.b16 %v243
      %v296 = vunpack.c.l.b16 %v244
      %v297 = vunpack.c.l.b16 %v245
      %v298 = vpack.c.b16 %v295, %v294
      %v299 = vpack.c.b16 %v297, %v296
      %vm302 = vcmask 261120
      %v304 = vsel %vm302, %v282, 0
      %v307 = vsel %vm302, %v283, 0
      %v310 = vsel %vm302, %v284, 0
      %v313 = vsel %vm302, %v285, 0
      %v316 = vsel %vm302, %v286, 0
      %v319 = vsel %vm302, %v287, 0
      %v322 = vsel %vm302, %v288, 0
      %v325 = vsel %vm302, %v289, 0
      %327 = vmatpush.bf16.msra.mxu0 0
      %328 = vmatpush.bf16.msra.mxu0 0
      %329 = vmatpush.bf16.msra.mxu0 0
      %330 = vmatpush.bf16.msra.mxu0 0
      %331 = vmatpush.bf16.msra.mxu0 0
      %332 = vmatpush.bf16.msra.mxu0 0
      %333 = vmatpush.bf16.msra.mxu0 %v299
      %334 = vmatpush.bf16.msra.mxu0 %v298
      %335 = vmatmul.bf16.gmra.mxu0 %v304
      %v336 = vpop.f32.mrf.mxu0
      %v337 = vadd.f32 %v248, %v336
      %v338 = vpop.f32.mrf.mxu0
      %v339 = vadd.f32 %v248, %v338
      %340 = vmatmul.bf16.gmra.mxu0 %v307
      %v341 = vpop.f32.mrf.mxu0
      %v342 = vadd.f32 %v248, %v341
      %v343 = vpop.f32.mrf.mxu0
      %v344 = vadd.f32 %v248, %v343
      %345 = vmatmul.bf16.gmra.mxu0 %v310
      %v346 = vpop.f32.mrf.mxu0
      %v347 = vadd.f32 %v248, %v346
      %v348 = vpop.f32.mrf.mxu0
      %v349 = vadd.f32 %v248, %v348
      %350 = vmatmul.bf16.gmra.mxu0 %v313
      %v351 = vpop.f32.mrf.mxu0
      %v352 = vadd.f32 %v248, %v351
      %v353 = vpop.f32.mrf.mxu0
      %v354 = vadd.f32 %v248, %v353
      %355 = vmatmul.bf16.gmra.mxu0 %v316
      %v356 = vpop.f32.mrf.mxu0
      %v357 = vadd.f32 %v248, %v356
      %v358 = vpop.f32.mrf.mxu0
      %v359 = vadd.f32 %v248, %v358
      %360 = vmatmul.bf16.gmra.mxu0 %v319
      %v361 = vpop.f32.mrf.mxu0
      %v362 = vadd.f32 %v248, %v361
      %v363 = vpop.f32.mrf.mxu0
      %v364 = vadd.f32 %v248, %v363
      %365 = vmatmul.bf16.gmra.mxu0 %v322
      %v366 = vpop.f32.mrf.mxu0
      %v367 = vadd.f32 %v248, %v366
      %v368 = vpop.f32.mrf.mxu0
      %v369 = vadd.f32 %v248, %v368
      %370 = vmatmul.bf16.gmra.mxu0 %v325
      %v371 = vpop.f32.mrf.mxu0
      %v372 = vadd.f32 %v248, %v371
      %v373 = vpop.f32.mrf.mxu0
      %v374 = vadd.f32 %v248, %v373
      %375 = vdwg.mxu0
      %v376 = vxor.u32 %v337, 2147483648
      %v377 = vxor.u32 %v339, 2147483648
      %v378 = vxor.u32 %v342, 2147483648
      %v379 = vxor.u32 %v344, 2147483648
      %v380 = vxor.u32 %v347, 2147483648
      %v381 = vxor.u32 %v349, 2147483648
      %v382 = vxor.u32 %v352, 2147483648
      %v383 = vxor.u32 %v354, 2147483648
      %v384 = vxor.u32 %v357, 2147483648
      %v385 = vxor.u32 %v359, 2147483648
      %v386 = vxor.u32 %v362, 2147483648
      %v387 = vxor.u32 %v364, 2147483648
      %v388 = vxor.u32 %v367, 2147483648
      %v389 = vxor.u32 %v369, 2147483648
      %v390 = vxor.u32 %v372, 2147483648
      %v391 = vxor.u32 %v374, 2147483648
      %v392 = vmul.f32 %v376, 1.442695
      %v393 = vpow.pop %v392
      %v394 = vmul.f32 %v377, 1.442695
      %v395 = vpow.pop %v394
      %v396 = vmul.f32 %v378, 1.442695
      %v397 = vpow.pop %v396
      %v398 = vmul.f32 %v379, 1.442695
      %v399 = vpow.pop %v398
      %v400 = vmul.f32 %v380, 1.442695
      %v401 = vpow.pop %v400
      %v402 = vmul.f32 %v381, 1.442695
      %v403 = vpow.pop %v402
      %v404 = vmul.f32 %v382, 1.442695
      %v405 = vpow.pop %v404
      %v406 = vmul.f32 %v383, 1.442695
      %v407 = vpow.pop %v406
      %v408 = vmul.f32 %v384, 1.442695
      %v409 = vpow.pop %v408
      %v410 = vmul.f32 %v385, 1.442695
      %v411 = vpow.pop %v410
      %v412 = vmul.f32 %v386, 1.442695
      %v413 = vpow.pop %v412
      %v414 = vmul.f32 %v387, 1.442695
      %v415 = vpow.pop %v414
      %v416 = vmul.f32 %v388, 1.442695
      %v417 = vpow.pop %v416
      %v418 = vmul.f32 %v389, 1.442695
      %v419 = vpow.pop %v418
      %v420 = vmul.f32 %v390, 1.442695
      %v421 = vpow.pop %v420
      %v422 = vmul.f32 %v391, 1.442695
      %v423 = vpow.pop %v422
      %v424 = vadd.f32 %v393, 1.0
      %v425 = vadd.f32 %v395, 1.0
      %v426 = vadd.f32 %v397, 1.0
      %v427 = vadd.f32 %v399, 1.0
      %v428 = vadd.f32 %v401, 1.0
      %v429 = vadd.f32 %v403, 1.0
      %v430 = vadd.f32 %v405, 1.0
      %v431 = vadd.f32 %v407, 1.0
      %v432 = vadd.f32 %v409, 1.0
      %v433 = vadd.f32 %v411, 1.0
      %v434 = vadd.f32 %v413, 1.0
      %v435 = vadd.f32 %v415, 1.0
      %v436 = vadd.f32 %v417, 1.0
      %v437 = vadd.f32 %v419, 1.0
      %v438 = vadd.f32 %v421, 1.0
      %v439 = vadd.f32 %v423, 1.0
      %v440 = vrcp.pop %v424
      %v441 = vmul.f32 %v424, %v440
      %v442 = vsub.f32 1.0, %v441
      %v443 = vmul.f32 %v440, %v442
      %v444 = vadd.f32 %v440, %v443
      %vm445 = vweird.f32 %v424
      %vm446 = vweird.f32 %v440
      %vm447 = vmor %vm445, %vm446
      %v448 = vsel %vm447, %v440, %v444
      %v449 = vand.u32 2147483647, %v424
      %vm450 = vcmp.eq.f32.partialorder %v449, 8.507059e+37
      %v451 = vand.u32 %v424, 2147483648
      %v452 = vor.u32 1.1754944e-38, %v451
      %v453 = vsel %vm450, %v452, %v448
      %v454 = vmul.f32 1.0, %v453
      %v455 = vrcp.pop %v425
      %v456 = vmul.f32 %v425, %v455
      %v457 = vsub.f32 1.0, %v456
      %v458 = vmul.f32 %v455, %v457
      %v459 = vadd.f32 %v455, %v458
      %vm460 = vweird.f32 %v425
      %vm461 = vweird.f32 %v455
      %vm462 = vmor %vm460, %vm461
      %v463 = vsel %vm462, %v455, %v459
      %v464 = vand.u32 2147483647, %v425
      %vm465 = vcmp.eq.f32.partialorder %v464, 8.507059e+37
      %v466 = vand.u32 %v425, 2147483648
      %v467 = vor.u32 1.1754944e-38, %v466
      %v468 = vsel %vm465, %v467, %v463
      %v469 = vmul.f32 1.0, %v468
      %v470 = vrcp.pop %v426
      %v471 = vmul.f32 %v426, %v470
      %v472 = vsub.f32 1.0, %v471
      %v473 = vmul.f32 %v470, %v472
      %v474 = vadd.f32 %v470, %v473
      %vm475 = vweird.f32 %v426
      %vm476 = vweird.f32 %v470
      %vm477 = vmor %vm475, %vm476
      %v478 = vsel %vm477, %v470, %v474
      %v479 = vand.u32 2147483647, %v426
      %vm480 = vcmp.eq.f32.partialorder %v479, 8.507059e+37
      %v481 = vand.u32 %v426, 2147483648
      %v482 = vor.u32 1.1754944e-38, %v481
      %v483 = vsel %vm480, %v482, %v478
      %v484 = vmul.f32 1.0, %v483
      %v485 = vrcp.pop %v427
      %v486 = vmul.f32 %v427, %v485
      %v487 = vsub.f32 1.0, %v486
      %v488 = vmul.f32 %v485, %v487
      %v489 = vadd.f32 %v485, %v488
      %vm490 = vweird.f32 %v427
      %vm491 = vweird.f32 %v485
      %vm492 = vmor %vm490, %vm491
      %v493 = vsel %vm492, %v485, %v489
      %v494 = vand.u32 2147483647, %v427
      %vm495 = vcmp.eq.f32.partialorder %v494, 8.507059e+37
      %v496 = vand.u32 %v427, 2147483648
      %v497 = vor.u32 1.1754944e-38, %v496
      %v498 = vsel %vm495, %v497, %v493
      %v499 = vmul.f32 1.0, %v498
      %v500 = vrcp.pop %v428
      %v501 = vmul.f32 %v428, %v500
      %v502 = vsub.f32 1.0, %v501
      %v503 = vmul.f32 %v500, %v502
      %v504 = vadd.f32 %v500, %v503
      %vm505 = vweird.f32 %v428
      %vm506 = vweird.f32 %v500
      %vm507 = vmor %vm505, %vm506
      %v508 = vsel %vm507, %v500, %v504
      %v509 = vand.u32 2147483647, %v428
      %vm510 = vcmp.eq.f32.partialorder %v509, 8.507059e+37
      %v511 = vand.u32 %v428, 2147483648
      %v512 = vor.u32 1.1754944e-38, %v511
      %v513 = vsel %vm510, %v512, %v508
      %v514 = vmul.f32 1.0, %v513
      %v515 = vrcp.pop %v429
      %v516 = vmul.f32 %v429, %v515
      %v517 = vsub.f32 1.0, %v516
      %v518 = vmul.f32 %v515, %v517
      %v519 = vadd.f32 %v515, %v518
      %vm520 = vweird.f32 %v429
      %vm521 = vweird.f32 %v515
      %vm522 = vmor %vm520, %vm521
      %v523 = vsel %vm522, %v515, %v519
      %v524 = vand.u32 2147483647, %v429
      %vm525 = vcmp.eq.f32.partialorder %v524, 8.507059e+37
      %v526 = vand.u32 %v429, 2147483648
      %v527 = vor.u32 1.1754944e-38, %v526
      %v528 = vsel %vm525, %v527, %v523
      %v529 = vmul.f32 1.0, %v528
      %v530 = vrcp.pop %v430
      %v531 = vmul.f32 %v430, %v530
      %v532 = vsub.f32 1.0, %v531
      %v533 = vmul.f32 %v530, %v532
      %v534 = vadd.f32 %v530, %v533
      %vm535 = vweird.f32 %v430
      %vm536 = vweird.f32 %v530
      %vm537 = vmor %vm535, %vm536
      %v538 = vsel %vm537, %v530, %v534
      %v539 = vand.u32 2147483647, %v430
      %vm540 = vcmp.eq.f32.partialorder %v539, 8.507059e+37
      %v541 = vand.u32 %v430, 2147483648
      %v542 = vor.u32 1.1754944e-38, %v541
      %v543 = vsel %vm540, %v542, %v538
      %v544 = vmul.f32 1.0, %v543
      %v545 = vrcp.pop %v431
      %v546 = vmul.f32 %v431, %v545
      %v547 = vsub.f32 1.0, %v546
      %v548 = vmul.f32 %v545, %v547
      %v549 = vadd.f32 %v545, %v548
      %vm550 = vweird.f32 %v431
      %vm551 = vweird.f32 %v545
      %vm552 = vmor %vm550, %vm551
      %v553 = vsel %vm552, %v545, %v549
      %v554 = vand.u32 2147483647, %v431
      %vm555 = vcmp.eq.f32.partialorder %v554, 8.507059e+37
      %v556 = vand.u32 %v431, 2147483648
      %v557 = vor.u32 1.1754944e-38, %v556
      %v558 = vsel %vm555, %v557, %v553
      %v559 = vmul.f32 1.0, %v558
      %v560 = vrcp.pop %v432
      %v561 = vmul.f32 %v432, %v560
      %v562 = vsub.f32 1.0, %v561
      %v563 = vmul.f32 %v560, %v562
      %v564 = vadd.f32 %v560, %v563
      %vm565 = vweird.f32 %v432
      %vm566 = vweird.f32 %v560
      %vm567 = vmor %vm565, %vm566
      %v568 = vsel %vm567, %v560, %v564
      %v569 = vand.u32 2147483647, %v432
      %vm570 = vcmp.eq.f32.partialorder %v569, 8.507059e+37
      %v571 = vand.u32 %v432, 2147483648
      %v572 = vor.u32 1.1754944e-38, %v571
      %v573 = vsel %vm570, %v572, %v568
      %v574 = vmul.f32 1.0, %v573
      %v575 = vrcp.pop %v433
      %v576 = vmul.f32 %v433, %v575
      %v577 = vsub.f32 1.0, %v576
      %v578 = vmul.f32 %v575, %v577
      %v579 = vadd.f32 %v575, %v578
      %vm580 = vweird.f32 %v433
      %vm581 = vweird.f32 %v575
      %vm582 = vmor %vm580, %vm581
      %v583 = vsel %vm582, %v575, %v579
      %v584 = vand.u32 2147483647, %v433
      %vm585 = vcmp.eq.f32.partialorder %v584, 8.507059e+37
      %v586 = vand.u32 %v433, 2147483648
      %v587 = vor.u32 1.1754944e-38, %v586
      %v588 = vsel %vm585, %v587, %v583
      %v589 = vmul.f32 1.0, %v588
      %v590 = vrcp.pop %v434
      %v591 = vmul.f32 %v434, %v590
      %v592 = vsub.f32 1.0, %v591
      %v593 = vmul.f32 %v590, %v592
      %v594 = vadd.f32 %v590, %v593
      %vm595 = vweird.f32 %v434
      %vm596 = vweird.f32 %v590
      %vm597 = vmor %vm595, %vm596
      %v598 = vsel %vm597, %v590, %v594
      %v599 = vand.u32 2147483647, %v434
      %vm600 = vcmp.eq.f32.partialorder %v599, 8.507059e+37
      %v601 = vand.u32 %v434, 2147483648
      %v602 = vor.u32 1.1754944e-38, %v601
      %v603 = vsel %vm600, %v602, %v598
      %v604 = vmul.f32 1.0, %v603
      %v605 = vrcp.pop %v435
      %v606 = vmul.f32 %v435, %v605
      %v607 = vsub.f32 1.0, %v606
      %v608 = vmul.f32 %v605, %v607
      %v609 = vadd.f32 %v605, %v608
      %vm610 = vweird.f32 %v435
      %vm611 = vweird.f32 %v605
      %vm612 = vmor %vm610, %vm611
      %v613 = vsel %vm612, %v605, %v609
      %v614 = vand.u32 2147483647, %v435
      %vm615 = vcmp.eq.f32.partialorder %v614, 8.507059e+37
      %v616 = vand.u32 %v435, 2147483648
      %v617 = vor.u32 1.1754944e-38, %v616
      %v618 = vsel %vm615, %v617, %v613
      %v619 = vmul.f32 1.0, %v618
      %v620 = vrcp.pop %v436
      %v621 = vmul.f32 %v436, %v620
      %v622 = vsub.f32 1.0, %v621
      %v623 = vmul.f32 %v620, %v622
      %v624 = vadd.f32 %v620, %v623
      %vm625 = vweird.f32 %v436
      %vm626 = vweird.f32 %v620
      %vm627 = vmor %vm625, %vm626
      %v628 = vsel %vm627, %v620, %v624
      %v629 = vand.u32 2147483647, %v436
      %vm630 = vcmp.eq.f32.partialorder %v629, 8.507059e+37
      %v631 = vand.u32 %v436, 2147483648
      %v632 = vor.u32 1.1754944e-38, %v631
      %v633 = vsel %vm630, %v632, %v628
      %v634 = vmul.f32 1.0, %v633
      %v635 = vrcp.pop %v437
      %v636 = vmul.f32 %v437, %v635
      %v637 = vsub.f32 1.0, %v636
      %v638 = vmul.f32 %v635, %v637
      %v639 = vadd.f32 %v635, %v638
      %vm640 = vweird.f32 %v437
      %vm641 = vweird.f32 %v635
      %vm642 = vmor %vm640, %vm641
      %v643 = vsel %vm642, %v635, %v639
      %v644 = vand.u32 2147483647, %v437
      %vm645 = vcmp.eq.f32.partialorder %v644, 8.507059e+37
      %v646 = vand.u32 %v437, 2147483648
      %v647 = vor.u32 1.1754944e-38, %v646
      %v648 = vsel %vm645, %v647, %v643
      %v649 = vmul.f32 1.0, %v648
      %v650 = vrcp.pop %v438
      %v651 = vmul.f32 %v438, %v650
      %v652 = vsub.f32 1.0, %v651
      %v653 = vmul.f32 %v650, %v652
      %v654 = vadd.f32 %v650, %v653
      %vm655 = vweird.f32 %v438
      %vm656 = vweird.f32 %v650
      %vm657 = vmor %vm655, %vm656
      %v658 = vsel %vm657, %v650, %v654
      %v659 = vand.u32 2147483647, %v438
      %vm660 = vcmp.eq.f32.partialorder %v659, 8.507059e+37
      %v661 = vand.u32 %v438, 2147483648
      %v662 = vor.u32 1.1754944e-38, %v661
      %v663 = vsel %vm660, %v662, %v658
      %v664 = vmul.f32 1.0, %v663
      %v665 = vrcp.pop %v439
      %v666 = vmul.f32 %v439, %v665
      %v667 = vsub.f32 1.0, %v666
      %v668 = vmul.f32 %v665, %v667
      %v669 = vadd.f32 %v665, %v668
      %vm670 = vweird.f32 %v439
      %vm671 = vweird.f32 %v665
      %vm672 = vmor %vm670, %vm671
      %v673 = vsel %vm672, %v665, %v669
      %v674 = vand.u32 2147483647, %v439
      %vm675 = vcmp.eq.f32.partialorder %v674, 8.507059e+37
      %v676 = vand.u32 %v439, 2147483648
      %v677 = vor.u32 1.1754944e-38, %v676
      %v678 = vsel %vm675, %v677, %v673
      %v679 = vmul.f32 1.0, %v678
      %v680 = vmul.f32 %v337, %v454
      %v681 = vmul.f32 %v339, %v469
      %v682 = vmul.f32 %v342, %v484
      %v683 = vmul.f32 %v344, %v499
      %v684 = vmul.f32 %v347, %v514
      %v685 = vmul.f32 %v349, %v529
      %v686 = vmul.f32 %v352, %v544
      %v687 = vmul.f32 %v354, %v559
      %v688 = vmul.f32 %v357, %v574
      %v689 = vmul.f32 %v359, %v589
      %v690 = vmul.f32 %v362, %v604
      %v691 = vmul.f32 %v364, %v619
      %v692 = vmul.f32 %v367, %v634
      %v693 = vmul.f32 %v369, %v649
      %v694 = vmul.f32 %v372, %v664
      %v695 = vmul.f32 %v374, %v679
      %v696 = vpack.c.bf16 %v680, %v680
      %v697 = vpack.c.bf16 %v681, %v681
      %v698 = vpack.c.bf16 %v682, %v682
      %v699 = vpack.c.bf16 %v683, %v683
      %v700 = vpack.c.bf16 %v684, %v684
      %v701 = vpack.c.bf16 %v685, %v685
      %v702 = vpack.c.bf16 %v686, %v686
      %v703 = vpack.c.bf16 %v687, %v687
      %v704 = vpack.c.bf16 %v688, %v688
      %v705 = vpack.c.bf16 %v689, %v689
      %v706 = vpack.c.bf16 %v690, %v690
      %v707 = vpack.c.bf16 %v691, %v691
      %v708 = vpack.c.bf16 %v692, %v692
      %v709 = vpack.c.bf16 %v693, %v693
      %v710 = vpack.c.bf16 %v694, %v694
      %v711 = vpack.c.bf16 %v695, %v695
      %712 = vst [vmem:[%s223] sm:$0xf] %v696
      %713 = vst [vmem:[%s223 + $0x4] sm:$0xf] %v697
      %714 = vst [vmem:[%s223 + $0x8] sm:$0xf] %v698
      %715 = vst [vmem:[%s223 + $0xc] sm:$0xf] %v699
      %716 = vst [vmem:[%s223 + $0x10] sm:$0xf] %v700
      %717 = vst [vmem:[%s223 + $0x14] sm:$0xf] %v701
      %718 = vst [vmem:[%s223 + $0x18] sm:$0xf] %v702
      %719 = vst [vmem:[%s223 + $0x1c] sm:$0xf] %v703
      %720 = vst [vmem:[%s223 + $0x20] sm:$0xf] %v704
      %721 = vst [vmem:[%s223 + $0x24] sm:$0xf] %v705
      %722 = vst [vmem:[%s223 + $0x28] sm:$0xf] %v706
      %723 = vst [vmem:[%s223 + $0x2c] sm:$0xf] %v707
      %724 = vst [vmem:[%s223 + $0x30] sm:$0xf] %v708
      %725 = vst [vmem:[%s223 + $0x34] sm:$0xf] %v709
      %726 = vst [vmem:[%s223 + $0x38] sm:$0xf] %v710
      %727 = vst [vmem:[%s223 + $0x3c] sm:$0xf] %v711
      %s728 = smul.u32 16, %s18
      %p729 = scmp.lt.s32.totalorder %s728, 63
      %s730 = scalar_select %p729, %s728, 63
      %p731 = scmp.lt.s32.totalorder %s19, 0
      %s732 = scalar_select %p731, %s19, 0
      %s733 = sadd.s32 %s732, %s730
      %s734 = smul.addr %s733, 4
      %s735 = scalar_lea.vmem %s3, %s734
      // Predicated region
      $region33: #{cnn_branch_forward.3} parent=31 // pred_check
        %p736 = pneg %p124
      $region34: #{cnn_branch_forward.3} parent=31 // pred_check_branch
        %738 = sbr.rel (%p736) target = $region36
      $region35: #{cnn_branch_forward.3} parent=31 // pred_region
        %s739 = smul.u32 16, %s18
      $region36: #{cnn_branch_forward.3} parent=31 // pred_fallthru
        _
    $region32: #{cnn_branch_forward.3} parent=5 // pred_fallthru
      _
    %p740 = scmp.le.s32.totalorder 2, %s9
    // Predicated region
    $region37: #{cnn_branch_forward.3} parent=5 // pred_check
      %p741 = pneg %p740
    $region38: #{cnn_branch_forward.3} parent=5 // pred_check_branch
      %743 = sbr.rel (%p741) target = $region40
    $region39: #{cnn_branch_forward.3} parent=5 // pred_region
      %s744 = ssub.s32 %s9, 2
      // Predicated region
      $region41: #{cnn_branch_forward.3} parent=39 // pred_check
        %p745 = pneg %p130
      $region42: #{cnn_branch_forward.3} parent=39 // pred_check_branch
        %747 = sbr.rel (%p745) target = $region44
      $region43: #{cnn_branch_forward.3} parent=39 // pred_region
        %s748 = smul.u32 16, %s20
        %p749 = scmp.lt.s32.totalorder %s748, 63
        %s750 = scalar_select %p749, %s748, 63
        %p751 = scmp.lt.s32.totalorder %s21, 0
        %s752 = scalar_select %p751, %s21, 0
        %s753 = sadd.s32 %s752, %s750
        %s754 = smul.addr %s753, 4
        %s755 = scalar_lea.vmem %s3, %s754
      $region44: #{cnn_branch_forward.3} parent=39 // pred_fallthru
        _
    $region40: #{cnn_branch_forward.3} parent=5 // pred_fallthru
      _
  $region6: #{cnn_branch_forward.3} parent=0 // loop_footer
    %s13 = sadd.s32 1, %s9
  $region7: #{cnn_branch_forward.3} parent=0 // loop_footer_branch
    %8 = sbr.rel target = $region3
  $region8: #{cnn_branch_forward.3} parent=0 // loop_exit
    _

// kernel: tile.28
$region0: #{tile.28}
  #allocation0 [shape = 's32[1]{0}', space=sflag, size = 0x4, scoped, tag = 'scoped memory for tile.28']
  %s0 = inlined_call_operand.vmem [shape: f32[32], index: 0, kind: input, shape index: {}]
  %s1 = inlined_call_operand.vmem [shape: f32[16,32], index: 1, kind: output, shape index: {}]
  // Predicated region
  $region2: #{tile.28} parent=0 // pred_check
    _
  $region3: #{tile.28} parent=0 // pred_check_branch
    %3 = sbr.rel (0) target = $region5
  $region4: #{tile.28} parent=0 // pred_region
    _
  $region5: #{tile.28} parent=0 // pred_fallthru
    _
  %v4 = vld [vmem:[%s0] ss:$0 sm:$0xff]
  %5 = vst [vmem:[%s1] sm:$0xff] %v4
  %s6 = scalar_lea.vmem %s1, 8
  %7 = vst [vmem:[%s6] sm:$0xff] %v4

// kernel: tile.29
$region0: #{tile.29}
  %s0 = inlined_call_operand.vmem [shape: f32[16,32], index: 0, kind: input, shape index: {}]
  %s1 = inlined_call_operand.vmem [shape: f32[1,512], index: 1, kind: output, shape index: {}]
  $region1: #{tile.29} parent=0
    #allocation0 [shape = 'u8[16384]{0}', space=vmem, size = 0x4000, scoped, tag = 'scoped mem for output reshape']
    %v2 = vld [vmem:[%s0] ss:$4 sm:$0xf]
    %vm3 = vcmask 261120
    %4 = vst.msk [vmem:[#allocation0] ss:$8 sm:$0xf] %vm3, %v2
    %s5 = scalar_lea.vmem %s0, 3
    %v6 = vld [vmem:[%s5] ss:$4 sm:$0xf]
    %7 = vrot.lane.b32.xlu0 %v6, 96
    %v8 = vpop.permute.xlu0 %7
    %vm9 = vcmask 1048320
    %10 = vst.msk [vmem:[#allocation0] ss:$8 sm:$0xf] %vm9, %v8
    %s11 = scalar_lea.vmem %s0, 2
    %v12 = vld [vmem:[%s11] ss:$4 sm:$0xf]
    %13 = vrot.lane.b32.xlu0 %v12, 64
    %v14 = vpop.permute.xlu0 %13
    %vm15 = vcmask 785920
    %16 = vst.msk [vmem:[#allocation0] ss:$8 sm:$0xf] %vm15, %v14
    %s17 = scalar_lea.vmem %s0, 1
    %v18 = vld [vmem:[%s17] ss:$4 sm:$0xf]
    %19 = vrot.lane.b32.xlu0 %v18, 32
    %v20 = vpop.permute.xlu0 %19
    %vm21 = vcmask 523520
    %22 = vst.msk [vmem:[#allocation0] ss:$8 sm:$0xf] %vm21, %v20
    %s24 = ssub.s32 2, 1
    %v25 = vld [vmem:[#allocation0] sm:%s24]
    %s27 = ssub.s32 2, 1
    %28 = vst [vmem:[%s1] sm:%s27] %v25
    %s29 = scalar_lea.vmem [#allocation0], 8
    %v30 = vld [vmem:[%s29] sm:%s24]
    %s32 = ssub.s32 2, 1
    %s33 = scalar_lea.vmem %s1, 1
    %34 = vst [vmem:[%s33] sm:%s32] %v30
    %s35 = scalar_lea.vmem [#allocation0], 16
    %v36 = vld [vmem:[%s35] sm:%s24]
    %s38 = ssub.s32 2, 1
    %s39 = scalar_lea.vmem %s1, 2
    %40 = vst [vmem:[%s39] sm:%s38] %v36
    %s41 = scalar_lea.vmem [#allocation0], 24
    %v42 = vld [vmem:[%s41] sm:%s24]
    %s44 = ssub.s32 2, 1
    %s45 = scalar_lea.vmem %s1, 3
    %46 = vst [vmem:[%s45] sm:%s44] %v42

// kernel: tile.24
$region0: #{tile.24}
  %s0 = inlined_call_operand.vmem [shape: f32[3,3,16,32], index: 0, kind: input, shape index: {}]
  %s1 = inlined_call_operand.vmem [shape: f32[3,3,512], index: 1, kind: output, shape index: {}]
  $region1: #{tile.24} parent=0
    #allocation0 [shape = 'u8[49152]{0}', space=vmem, size = 0xc000, scoped, tag = 'scoped mem for output reshape']
    %v2 = vld [vmem:[%s0] ss:$4 sm:$0xff]
    %vm3 = vcmask 261120
    %4 = vst.msk [vmem:[#allocation0] ss:$8 sm:$0xf] %vm3, %v2
    %s5 = scalar_lea.vmem [#allocation0], 4294967265
    %6 = vst.msk [vmem:[%s5] ss:$8 sm:$0xf0] %vm3, %v2
    %s7 = scalar_lea.vmem %s0, 32
    %v8 = vld [vmem:[%s7] ss:$4 sm:$0xff]
    %vm9 = vcmask 261120
    %s10 = scalar_lea.vmem [#allocation0], 2
    %11 = vst.msk [vmem:[%s10] ss:$8 sm:$0xf] %vm9, %v8
    %12 = vst.msk [vmem:[#allocation0] ss:$8 sm:$0xf0] %vm9, %v8
    %s13 = scalar_lea.vmem %s0, 64
    %v14 = vld [vmem:[%s13] ss:$4 sm:$0xff]
    %vm15 = vcmask 261120
    %s16 = scalar_lea.vmem [#allocation0], 33
    %17 = vst.msk [vmem:[%s16] ss:$8 sm:$0xf] %vm15, %v14
    %s18 = scalar_lea.vmem [#allocation0], 2
    %19 = vst.msk [vmem:[%s18] ss:$8 sm:$0xf0] %vm15, %v14
    %s20 = scalar_lea.vmem %s0, 96
    %v21 = vld [vmem:[%s20] ss:$4 sm:$0xff]
    %vm22 = vcmask 261120
    %s23 = scalar_lea.vmem [#allocation0], 64
    %24 = vst.msk [vmem:[%s23] ss:$8 sm:$0xf] %vm22, %v21
    %s25 = scalar_lea.vmem [#allocation0], 33
    %26 = vst.msk [vmem:[%s25] ss:$8 sm:$0xf0] %vm22, %v21
    %s27 = scalar_lea.vmem %s0, 128
    %v28 = vld [vmem:[%s27] ss:$4 sm:$0xf]
    %vm29 = vcmask 261120
    %s30 = scalar_lea.vmem [#allocation0], 66
    %31 = vst.msk [vmem:[%s30] ss:$8 sm:$0xf] %vm29, %v28
    %s32 = scalar_lea.vmem %s0, 3
    %s33 = smov 3
    %v34 = vld [vmem:[%s32] ss:$16 sm:%s33]
    %s35 = scalar_lea.vmem %s0, 91
    %s36 = smov 12
    %v37 = vld [vmem:[%s35] ss:$-28 sm:%s36]
    %vm38 = vcmask 1043458
    %v39 = vsel %vm38, %v37, %v34
    %s40 = scalar_lea.vmem %s0, 4294967255
    %s41 = smov 48
    %v42 = vld [vmem:[%s40] ss:$16 sm:%s41]
    %vm43 = vcmask 1045508
    %v44 = vsel %vm43, %v42, %v39
    %s45 = scalar_lea.vmem %s0, 4294967211
    %s46 = smov 192
    %v47 = vld [vmem:[%s45] ss:$16 sm:%s46]
    %vm48 = vcmask 1047558
    %v49 = vsel %vm48, %v47, %v44
    %50 = vrot.lane.b32.xlu0 %v49, 96
    %v51 = vpop.permute.xlu0 %50
    %vm52 = vcmask 1048320
    %53 = vst.msk [vmem:[#allocation0] sm:$0x7] %vm52, %v51
    %s54 = scalar_lea.vmem [#allocation0], 5
    %55 = vst.msk [vmem:[%s54] sm:$0x38] %vm52, %v51
    %s56 = scalar_lea.vmem [#allocation0], 10
    %57 = vst.msk [vmem:[%s56] sm:$0xc0] %vm52, %v51
    %s58 = scalar_lea.vmem %s0, 51
    %s59 = smov 3
    %v60 = vld [vmem:[%s58] ss:$16 sm:%s59]
    %s61 = scalar_lea.vmem %s0, 139
    %s62 = smov 12
    %v63 = vld [vmem:[%s61] ss:$-28 sm:%s62]
    %vm64 = vcmask 1043458
    %v65 = vsel %vm64, %v63, %v60
    %s66 = scalar_lea.vmem %s0, 7
    %s67 = smov 48
    %v68 = vld [vmem:[%s66] ss:$16 sm:%s67]
    %vm69 = vcmask 1045508
    %v70 = vsel %vm69, %v68, %v65
    %s71 = scalar_lea.vmem %s0, 4294967259
    %s72 = smov 192
    %v73 = vld [vmem:[%s71] ss:$16 sm:%s72]
    %vm74 = vcmask 1047558
    %v75 = vsel %vm74, %v73, %v70
    %76 = vrot.lane.b32.xlu0 %v75, 96
    %v77 = vpop.permute.xlu0 %76
    %vm78 = vcmask 1048320
    %s79 = scalar_lea.vmem [#allocation0], 32
    %80 = vst.msk [vmem:[%s79] sm:$0x7] %vm78, %v77
    %s81 = scalar_lea.vmem [#allocation0], 37
    %82 = vst.msk [vmem:[%s81] sm:$0x38] %vm78, %v77
    %s83 = scalar_lea.vmem [#allocation0], 42
    %84 = vst.msk [vmem:[%s83] sm:$0xc0] %vm78, %v77
    %s85 = scalar_lea.vmem %s0, 99
    %s86 = smov 3
    %v87 = vld [vmem:[%s85] ss:$16 sm:%s86]
    %s88 = scalar_lea.vmem %s0, 187
    %s89 = smov 12
    %v90 = vld [vmem:[%s88] ss:$-28 sm:%s89]
    %vm91 = vcmask 1043458
    %v92 = vsel %vm91, %v90, %v87
    %s93 = scalar_lea.vmem %s0, 55
    %s94 = smov 48
    %v95 = vld [vmem:[%s93] ss:$16 sm:%s94]
    %vm96 = vcmask 1045508
    %v97 = vsel %vm96, %v95, %v92
    %s98 = scalar_lea.vmem %s0, 11
    %s99 = smov 192
    %v100 = vld [vmem:[%s98] ss:$16 sm:%s99]
    %vm101 = vcmask 1047558
    %v102 = vsel %vm101, %v100, %v97
    %103 = vrot.lane.b32.xlu0 %v102, 96
    %v104 = vpop.permute.xlu0 %103
    %vm105 = vcmask 1048320
    %s106 = scalar_lea.vmem [#allocation0], 64
    %107 = vst.msk [vmem:[%s106] sm:$0x7] %vm105, %v104
    %s108 = scalar_lea.vmem [#allocation0], 69
    %109 = vst.msk [vmem:[%s108] sm:$0x38] %vm105, %v104
    %s110 = scalar_lea.vmem [#allocation0], 74
    %111 = vst.msk [vmem:[%s110] sm:$0xc0] %vm105, %v104
    %s112 = scalar_lea.vmem %s0, 43
    %s113 = smov 3
    %v114 = vld [vmem:[%s112] ss:$-28 sm:%s113]
    %s115 = scalar_lea.vmem %s0, 4294967295
    %s116 = smov 12
    %v117 = vld [vmem:[%s115] ss:$16 sm:%s116]
    %vm118 = vcmask 1043458
    %v119 = vsel %vm118, %v117, %v114
    %s120 = scalar_lea.vmem %s0, 203
    %s121 = smov 48
    %v122 = vld [vmem:[%s120] ss:$-28 sm:%s121]
    %vm123 = vcmask 1045508
    %v124 = vsel %vm123, %v122, %v119
    %s125 = scalar_lea.vmem %s0, 4294967279
    %s126 = smov 192
    %v127 = vld [vmem:[%s125] ss:$16 sm:%s126]
    %vm128 = vcmask 1047558
    %v129 = vsel %vm128, %v127, %v124
    %130 = vrot.lane.b32.xlu0 %v129, 96
    %v131 = vpop.permute.xlu0 %130
    %vm132 = vcmask 1048320
    %s133 = scalar_lea.vmem [#allocation0], 18
    %134 = vst.msk [vmem:[%s133] ss:$6 sm:$0x3] %vm132, %v131
    %s135 = scalar_lea.vmem [#allocation0], 23
    %136 = vst.msk [vmem:[%s135] sm:$0xc] %vm132, %v131
    %s137 = scalar_lea.vmem [#allocation0], 26
    %138 = vst.msk [vmem:[%s137] ss:$6 sm:$0x30] %vm132, %v131
    %s139 = scalar_lea.vmem [#allocation0], 51
    %140 = vst.msk [vmem:[%s139] sm:$0xc0] %vm132, %v131
    %s141 = scalar_lea.vmem %s0, 139
    %s142 = smov 3
    %v143 = vld [vmem:[%s141] ss:$-28 sm:%s142]
    %s144 = scalar_lea.vmem %s0, 95
    %s145 = smov 12
    %v146 = vld [vmem:[%s144] ss:$16 sm:%s145]
    %vm147 = vcmask 1043458
    %v148 = vsel %vm147, %v146, %v143
    %149 = vrot.lane.b32.xlu0 %v148, 96
    %v150 = vpop.permute.xlu0 %149
    %vm151 = vcmask 1048320
    %s152 = scalar_lea.vmem [#allocation0], 82
    %153 = vst.msk [vmem:[%s152] ss:$6 sm:$0x3] %vm151, %v150
    %s154 = scalar_lea.vmem [#allocation0], 87
    %155 = vst.msk [vmem:[%s154] sm:$0xc] %vm151, %v150
    %s156 = scalar_lea.vmem %s0, 2
    %s157 = smov 3
    %v158 = vld [vmem:[%s156] ss:$16 sm:%s157]
    %s159 = scalar_lea.vmem %s0, 90
    %s160 = smov 12
    %v161 = vld [vmem:[%s159] ss:$-28 sm:%s160]
    %vm162 = vcmask 1043458
    %v163 = vsel %vm162, %v161, %v158
    %s164 = scalar_lea.vmem %s0, 4294967254
    %s165 = smov 48
    %v166 = vld [vmem:[%s164] ss:$16 sm:%s165]
    %vm167 = vcmask 1045508
    %v168 = vsel %vm167, %v166, %v163
    %s169 = scalar_lea.vmem %s0, 4294967210
    %s170 = smov 192
    %v171 = vld [vmem:[%s169] ss:$16 sm:%s170]
    %vm172 = vcmask 1047558
    %v173 = vsel %vm172, %v171, %v168
    %174 = vrot.lane.b32.xlu0 %v173, 64
    %v175 = vpop.permute.xlu0 %174
    %vm176 = vcmask 785920
    %177 = vst.msk [vmem:[#allocation0] sm:$0x7] %vm176, %v175
    %s178 = scalar_lea.vmem [#allocation0], 5
    %179 = vst.msk [vmem:[%s178] sm:$0x38] %vm176, %v175
    %s180 = scalar_lea.vmem [#allocation0], 10
    %181 = vst.msk [vmem:[%s180] sm:$0xc0] %vm176, %v175
    %s182 = scalar_lea.vmem %s0, 50
    %s183 = smov 3
    %v184 = vld [vmem:[%s182] ss:$16 sm:%s183]
    %s185 = scalar_lea.vmem %s0, 138
    %s186 = smov 12
    %v187 = vld [vmem:[%s185] ss:$-28 sm:%s186]
    %vm188 = vcmask 1043458
    %v189 = vsel %vm188, %v187, %v184
    %s190 = scalar_lea.vmem %s0, 6
    %s191 = smov 48
    %v192 = vld [vmem:[%s190] ss:$16 sm:%s191]
    %vm193 = vcmask 1045508
    %v194 = vsel %vm193, %v192, %v189
    %s195 = scalar_lea.vmem %s0, 4294967258
    %s196 = smov 192
    %v197 = vld [vmem:[%s195] ss:$16 sm:%s196]
    %vm198 = vcmask 1047558
    %v199 = vsel %vm198, %v197, %v194
    %200 = vrot.lane.b32.xlu0 %v199, 64
    %v201 = vpop.permute.xlu0 %200
    %vm202 = vcmask 785920
    %s203 = scalar_lea.vmem [#allocation0], 32
    %204 = vst.msk [vmem:[%s203] sm:$0x7] %vm202, %v201
    %s205 = scalar_lea.vmem [#allocation0], 37
    %206 = vst.msk [vmem:[%s205] sm:$0x38] %vm202, %v201
    %s207 = scalar_lea.vmem [#allocation0], 42
    %208 = vst.msk [vmem:[%s207] sm:$0xc0] %vm202, %v201
    %s209 = scalar_lea.vmem %s0, 98
    %s210 = smov 3
    %v211 = vld [vmem:[%s209] ss:$16 sm:%s210]
    %s212 = scalar_lea.vmem %s0, 186
    %s213 = smov 12
    %v214 = vld [vmem:[%s212] ss:$-28 sm:%s213]
    %vm215 = vcmask 1043458
    %v216 = vsel %vm215, %v214, %v211
    %s217 = scalar_lea.vmem %s0, 54
    %s218 = smov 48
    %v219 = vld [vmem:[%s217] ss:$16 sm:%s218]
    %vm220 = vcmask 1045508
    %v221 = vsel %vm220, %v219, %v216
    %s222 = scalar_lea.vmem %s0, 10
    %s223 = smov 192
    %v224 = vld [vmem:[%s222] ss:$16 sm:%s223]
    %vm225 = vcmask 1047558
    %v226 = vsel %vm225, %v224, %v221
    %227 = vrot.lane.b32.xlu0 %v226, 64
    %v228 = vpop.permute.xlu0 %227
    %vm229 = vcmask 785920
    %s230 = scalar_lea.vmem [#allocation0], 64
    %231 = vst.msk [vmem:[%s230] sm:$0x7] %vm229, %v228
    %s232 = scalar_lea.vmem [#allocation0], 69
    %233 = vst.msk [vmem:[%s232] sm:$0x38] %vm229, %v228
    %s234 = scalar_lea.vmem [#allocation0], 74
    %235 = vst.msk [vmem:[%s234] sm:$0xc0] %vm229, %v228
    %s236 = scalar_lea.vmem %s0, 42
    %s237 = smov 3
    %v238 = vld [vmem:[%s236] ss:$-28 sm:%s237]
    %s239 = scalar_lea.vmem %s0, 4294967294
    %s240 = smov 12
    %v241 = vld [vmem:[%s239] ss:$16 sm:%s240]
    %vm242 = vcmask 1043458
    %v243 = vsel %vm242, %v241, %v238
    %s244 = scalar_lea.vmem %s0, 202
    %s245 = smov 48
    %v246 = vld [vmem:[%s244] ss:$-28 sm:%s245]
    %vm247 = vcmask 1045508
    %v248 = vsel %vm247, %v246, %v243
    %s249 = scalar_lea.vmem %s0, 4294967278
    %s250 = smov 192
    %v251 = vld [vmem:[%s249] ss:$16 sm:%s250]
    %vm252 = vcmask 1047558
    %v253 = vsel %vm252, %v251, %v248
    %254 = vrot.lane.b32.xlu0 %v253, 64
    %v255 = vpop.permute.xlu0 %254
    %vm256 = vcmask 785920
    %s257 = scalar_lea.vmem [#allocation0], 18
    %258 = vst.msk [vmem:[%s257] ss:$6 sm:$0x3] %vm256, %v255
    %s259 = scalar_lea.vmem [#allocation0], 23
    %260 = vst.msk [vmem:[%s259] sm:$0xc] %vm256, %v255
    %s261 = scalar_lea.vmem [#allocation0], 26
    %262 = vst.msk [vmem:[%s261] ss:$6 sm:$0x30] %vm256, %v255
    %s263 = scalar_lea.vmem [#allocation0], 51
    %264 = vst.msk [vmem:[%s263] sm:$0xc0] %vm256, %v255
    %s265 = scalar_lea.vmem %s0, 138
    %s266 = smov 3
    %v267 = vld [vmem:[%s265] ss:$-28 sm:%s266]
    %s268 = scalar_lea.vmem %s0, 94
    %s269 = smov 12
    %v270 = vld [vmem:[%s268] ss:$16 sm:%s269]
    %vm271 = vcmask 1043458
    %v272 = vsel %vm271, %v270, %v267
    %273 = vrot.lane.b32.xlu0 %v272, 64
    %v274 = vpop.permute.xlu0 %273
    %vm275 = vcmask 785920
    %s276 = scalar_lea.vmem [#allocation0], 82
    %277 = vst.msk [vmem:[%s276] ss:$6 sm:$0x3] %vm275, %v274
    %s278 = scalar_lea.vmem [#allocation0], 87
    %279 = vst.msk [vmem:[%s278] sm:$0xc] %vm275, %v274
    %s280 = scalar_lea.vmem %s0, 1
    %s281 = smov 3
    %v282 = vld [vmem:[%s280] ss:$16 sm:%s281]
    %s283 = scalar_lea.vmem %s0, 89
    %s284 = smov 12
    %v285 = vld [vmem:[%s283] ss:$-28 sm:%s284]
    %vm286 = vcmask 1043458
    %v287 = vsel %vm286, %v285, %v282
    %s288 = scalar_lea.vmem %s0, 4294967253
    %s289 = smov 48
    %v290 = vld [vmem:[%s288] ss:$16 sm:%s289]
    %vm291 = vcmask 1045508
    %v292 = vsel %vm291, %v290, %v287
    %s293 = scalar_lea.vmem %s0, 4294967209
    %s294 = smov 192
    %v295 = vld [vmem:[%s293] ss:$16 sm:%s294]
    %vm296 = vcmask 1047558
    %v297 = vsel %vm296, %v295, %v292
    %298 = vrot.lane.b32.xlu0 %v297, 32
    %v299 = vpop.permute.xlu0 %298
    %vm300 = vcmask 523520
    %301 = vst.msk [vmem:[#allocation0] sm:$0x7] %vm300, %v299
    %s302 = scalar_lea.vmem [#allocation0], 5
    %303 = vst.msk [vmem:[%s302] sm:$0x38] %vm300, %v299
    %s304 = scalar_lea.vmem [#allocation0], 10
    %305 = vst.msk [vmem:[%s304] sm:$0xc0] %vm300, %v299
    %s306 = scalar_lea.vmem %s0, 49
    %s307 = smov 3
    %v308 = vld [vmem:[%s306] ss:$16 sm:%s307]
    %s309 = scalar_lea.vmem %s0, 137
    %s310 = smov 12
    %v311 = vld [vmem:[%s309] ss:$-28 sm:%s310]
    %vm312 = vcmask 1043458
    %v313 = vsel %vm312, %v311, %v308
    %s314 = scalar_lea.vmem %s0, 5
    %s315 = smov 48
    %v316 = vld [vmem:[%s314] ss:$16 sm:%s315]
    %vm317 = vcmask 1045508
    %v318 = vsel %vm317, %v316, %v313
    %s319 = scalar_lea.vmem %s0, 4294967257
    %s320 = smov 192
    %v321 = vld [vmem:[%s319] ss:$16 sm:%s320]
    %vm322 = vcmask 1047558
    %v323 = vsel %vm322, %v321, %v318
    %324 = vrot.lane.b32.xlu0 %v323, 32
    %v325 = vpop.permute.xlu0 %324
    %vm326 = vcmask 523520
    %s327 = scalar_lea.vmem [#allocation0], 32
    %328 = vst.msk [vmem:[%s327] sm:$0x7] %vm326, %v325
    %s329 = scalar_lea.vmem [#allocation0], 37
    %330 = vst.msk [vmem:[%s329] sm:$0x38] %vm326, %v325
    %s331 = scalar_lea.vmem [#allocation0], 42
    %332 = vst.msk [vmem:[%s331] sm:$0xc0] %vm326, %v325
    %s333 = scalar_lea.vmem %s0, 97
    %s334 = smov 3
    %v335 = vld [vmem:[%s333] ss:$16 sm:%s334]
    %s336 = scalar_lea.vmem %s0, 185
    %s337 = smov 12
    %v338 = vld [vmem:[%s336] ss:$-28 sm:%s337]
    %vm339 = vcmask 1043458
    %v340 = vsel %vm339, %v338, %v335
    %s341 = scalar_lea.vmem %s0, 53
    %s342 = smov 48
    %v343 = vld [vmem:[%s341] ss:$16 sm:%s342]
    %vm344 = vcmask 1045508
    %v345 = vsel %vm344, %v343, %v340
    %s346 = scalar_lea.vmem %s0, 9
    %s347 = smov 192
    %v348 = vld [vmem:[%s346] ss:$16 sm:%s347]
    %vm349 = vcmask 1047558
    %v350 = vsel %vm349, %v348, %v345
    %351 = vrot.lane.b32.xlu0 %v350, 32
    %v352 = vpop.permute.xlu0 %351
    %vm353 = vcmask 523520
    %s354 = scalar_lea.vmem [#allocation0], 64
    %355 = vst.msk [vmem:[%s354] sm:$0x7] %vm353, %v352
    %s356 = scalar_lea.vmem [#allocation0], 69
    %357 = vst.msk [vmem:[%s356] sm:$0x38] %vm353, %v352
    %s358 = scalar_lea.vmem [#allocation0], 74
    %359 = vst.msk [vmem:[%s358] sm:$0xc0] %vm353, %v352
    %s360 = scalar_lea.vmem %s0, 41
    %s361 = smov 3
    %v362 = vld [vmem:[%s360] ss:$-28 sm:%s361]
    %s363 = scalar_lea.vmem %s0, 4294967293
    %s364 = smov 12
    %v365 = vld [vmem:[%s363] ss:$16 sm:%s364]
    %vm366 = vcmask 1043458
    %v367 = vsel %vm366, %v365, %v362
    %s368 = scalar_lea.vmem %s0, 201
    %s369 = smov 48
    %v370 = vld [vmem:[%s368] ss:$-28 sm:%s369]
    %vm371 = vcmask 1045508
    %v372 = vsel %vm371, %v370, %v367
    %s373 = scalar_lea.vmem %s0, 4294967277
    %s374 = smov 192
    %v375 = vld [vmem:[%s373] ss:$16 sm:%s374]
    %vm376 = vcmask 1047558
    %v377 = vsel %vm376, %v375, %v372
    %378 = vrot.lane.b32.xlu0 %v377, 32
    %v379 = vpop.permute.xlu0 %378
    %vm380 = vcmask 523520
    %s381 = scalar_lea.vmem [#allocation0], 18
    %382 = vst.msk [vmem:[%s381] ss:$6 sm:$0x3] %vm380, %v379
    %s383 = scalar_lea.vmem [#allocation0], 23
    %384 = vst.msk [vmem:[%s383] sm:$0xc] %vm380, %v379
    %s385 = scalar_lea.vmem [#allocation0], 26
    %386 = vst.msk [vmem:[%s385] ss:$6 sm:$0x30] %vm380, %v379
    %s387 = scalar_lea.vmem [#allocation0], 51
    %388 = vst.msk [vmem:[%s387] sm:$0xc0] %vm380, %v379
    %s389 = scalar_lea.vmem %s0, 137
    %s390 = smov 3
    %v391 = vld [vmem:[%s389] ss:$-28 sm:%s390]
    %s392 = scalar_lea.vmem %s0, 93
    %s393 = smov 12
    %v394 = vld [vmem:[%s392] ss:$16 sm:%s393]
    %vm395 = vcmask 1043458
    %v396 = vsel %vm395, %v394, %v391
    %397 = vrot.lane.b32.xlu0 %v396, 32
    %v398 = vpop.permute.xlu0 %397
    %vm399 = vcmask 523520
    %s400 = scalar_lea.vmem [#allocation0], 82
    %401 = vst.msk [vmem:[%s400] ss:$6 sm:$0x3] %vm399, %v398
    %s402 = scalar_lea.vmem [#allocation0], 87
    %403 = vst.msk [vmem:[%s402] sm:$0xc] %vm399, %v398
    %s405 = ssub.s32 16, 1
    %v406 = vld [vmem:[#allocation0] sm:%s405]
    %s408 = ssub.s32 16, 1
    %409 = vst [vmem:[%s1] sm:%s408] %v406
    %s410 = scalar_lea.vmem [#allocation0], 8
    %v411 = vld [vmem:[%s410] sm:%s405]
    %s413 = ssub.s32 16, 1
    %s414 = scalar_lea.vmem %s1, 4
    %415 = vst [vmem:[%s414] sm:%s413] %v411
    %s416 = scalar_lea.vmem [#allocation0], 16
    %v417 = vld [vmem:[%s416] sm:%s405]
    %s419 = ssub.s32 16, 1
    %s420 = scalar_lea.vmem %s1, 8
    %421 = vst [vmem:[%s420] sm:%s419] %v417
    %s422 = scalar_lea.vmem [#allocation0], 24
    %v423 = vld [vmem:[%s422] sm:%s405]
    %s425 = ssub.s32 16, 1
    %s426 = scalar_lea.vmem %s1, 12
    %427 = vst [vmem:[%s426] sm:%s425] %v423
    %s428 = scalar_lea.vmem [#allocation0], 32
    %v429 = vld [vmem:[%s428] sm:%s405]
    %s431 = ssub.s32 16, 1
    %s432 = scalar_lea.vmem %s1, 16
    %433 = vst [vmem:[%s432] sm:%s431] %v429
    %s434 = scalar_lea.vmem [#allocation0], 40
    %v435 = vld [vmem:[%s434] sm:%s405]
    %s437 = ssub.s32 16, 1
    %s438 = scalar_lea.vmem %s1, 20
    %439 = vst [vmem:[%s438] sm:%s437] %v435
    %s440 = scalar_lea.vmem [#allocation0], 48
    %v441 = vld [vmem:[%s440] sm:%s405]
    %s443 = ssub.s32 16, 1
    %s444 = scalar_lea.vmem %s1, 24
    %445 = vst [vmem:[%s444] sm:%s443] %v441
    %s446 = scalar_lea.vmem [#allocation0], 56
    %v447 = vld [vmem:[%s446] sm:%s405]
    %s449 = ssub.s32 16, 1
    %s450 = scalar_lea.vmem %s1, 28
    %451 = vst [vmem:[%s450] sm:%s449] %v447
    %s452 = scalar_lea.vmem [#allocation0], 64
    %v453 = vld [vmem:[%s452] sm:%s405]
    %s455 = ssub.s32 16, 1
    %s456 = scalar_lea.vmem %s1, 32
    %457 = vst [vmem:[%s456] sm:%s455] %v453
    %s458 = scalar_lea.vmem [#allocation0], 72
    %v459 = vld [vmem:[%s458] sm:%s405]
    %s461 = ssub.s32 16, 1
    %s462 = scalar_lea.vmem %s1, 36
    %463 = vst [vmem:[%s462] sm:%s461] %v459
    %s464 = scalar_lea.vmem [#allocation0], 80
    %v465 = vld [vmem:[%s464] sm:%s405]
    %s467 = ssub.s32 16, 1
    %s468 = scalar_lea.vmem %s1, 40
    %469 = vst [vmem:[%s468] sm:%s467] %v465
    %s470 = scalar_lea.vmem [#allocation0], 88
    %v471 = vld [vmem:[%s470] sm:%s405]
    %s473 = ssub.s32 16, 1
    %s474 = scalar_lea.vmem %s1, 44
    %475 = vst [vmem:[%s474] sm:%s473] %v471

// kernel: cnn_branch_forward.5
$region0: #{cnn_branch_forward.5}
  #allocation0 [shape = 'u32[]', space=smem, size = 0x4, offset = 0x4, fixed_abs, tag = 'smem constant byte address 0x4 - core index']
  #allocation1 [shape = 'u32[72,128]{1,0:T(1,128)}', space=vmem, size = 0x9000, scoped, tag = 'internal scratch']
  #allocation2 [shape = 'f32[1,256]{1,0:T(1,128)}', space=vmem, size = 0x400, scoped, tag = 'scratch operand']
  %s0 = inlined_call_operand.vmem [shape: bf16[2,256,32], index: 0, kind: input, shape index: {}]
  %s1 = inlined_call_operand.vmem [shape: bf16[2,1,32], index: 1, kind: input, shape index: {}]
  %s2 = inlined_call_operand.vmem [shape: bf16[32,1280], index: 2, kind: input, shape index: {}]
  %s3 = inlined_call_operand.vmem [shape: f32[1,1280], index: 3, kind: input, shape index: {}]
  %s4 = inlined_call_operand.vmem [shape: f32[2,1,1280], index: 4, kind: output, shape index: {}]
  %s5 = sld [smem:[#allocation0]]
  $region95: #{cnn_branch_forward.5} parent=0
    _
  %s7 = ssub.s32 1, %s5
  %s8 = scalar_select 0, %s7, %s5
  $region1: #{cnn_branch_forward.5} parent=0
    #allocation3 [shape = 'u8[32768]{0}', space=vmem, size = 0x8000, scoped, tag = 'input window, operand 2']
    loop: start=0, step=1, limit=22
    $region2: #{cnn_branch_forward.5} parent=1 // loop_pre_header
      _
    $region3: #{cnn_branch_forward.5} parent=1 // loop_header
      %s10 = sphi 0, %s14
      %p11 = scmp.ge.s32.totalorder %s10, 22
      %s17 = sphi 0, %s36
      %s18 = sphi 0, %s32
      %s19 = sphi 0, %s28
      %s20 = sphi 0, %s17
      %s21 = sphi 0, %s18
      %s22 = sphi 0, %s19
      %s23 = sphi 0, %s20
      %s24 = sphi 0, %s21
      %s25 = sphi 0, %s22
      %s39 = sphi 0, %s41
      %s42 = sphi 0, %s39
      %s43 = sphi 0, %s42
      %s59 = sphi 0, %s43
      %s65 = sphi 0, %s67
      %s68 = sphi 0, %s65
      %s69 = sphi 0, %s68
      %s85 = sphi 0, %s69
      %s91 = sphi 0, %s93
      %s94 = sphi 0, %s91
      %s95 = sphi 0, %s94
      %s111 = sphi 0, %s95
      %s117 = sphi 0, %s119
      %s120 = sphi 0, %s117
      %s121 = sphi 0, %s120
      %s137 = sphi 0, %s121
      %s145 = sphi 0, %s147
      %s148 = sphi 0, %s145
      %s149 = sphi 0, %s148
      %s165 = sphi 0, %s149
    $region4: #{cnn_branch_forward.5} parent=1 // loop_header_branch
      %13 = sbr.rel (%p11) target = $region8
    $region5: #{cnn_branch_forward.5} parent=1 // loop_body
      %s15 = ssub.s32 %s10, 1
      %s16 = ssub.s32 %s10, 2
      %s26 = sadd.s32 1, %s19
      %p27 = scmp.ge.s32.totalorder %s26, 2
      %s28 = scalar_select %p27, 0, %s26
      %s29 = sadd.s32 1, %s18
      %s30 = scalar_select %p27, %s29, %s18
      %p31 = scmp.ge.s32.totalorder %s30, 5
      %s32 = scalar_select %p31, 0, %s30
      %s33 = sadd.s32 1, %s17
      %s34 = scalar_select %p31, %s33, %s17
      %p35 = scmp.ge.s32.totalorder %s34, 2
      %s36 = scalar_select %p35, 0, %s34
      %s37 = ssub.s32 %s17, %s36
      %p38 = scmp.eq.s32.totalorder %s37, 0
      %s40 = sadd.s32 %s39, 1
      %s41 = scalar_select %p38, %s39, %s40
      %p44 = pneg %p38
      %p45 = scmp.eq.s32.totalorder %s10, 19
      %p46 = por %p44, %p45
      %p47 = scmp.ne.s32.totalorder %s39, %s42
      %p48 = scmp.eq.s32.totalorder %s10, 0
      %p49 = por %p47, %p48
      %p50 = scmp.ne.s32.totalorder %s39, %s42
      %p51 = scmp.eq.s32.totalorder %s15, 19
      %p52 = por %p50, %p51
      %p53 = scmp.ne.s32.totalorder %s42, %s43
      %p54 = scmp.eq.s32.totalorder %s15, 0
      %p55 = por %p53, %p54
      %p56 = scmp.ne.s32.totalorder %s42, %s43
      %p57 = scmp.eq.s32.totalorder %s16, 19
      %p58 = por %p56, %p57
      %p60 = scmp.ne.s32.totalorder %s43, %s59
      %p61 = scmp.eq.s32.totalorder %s16, 0
      %p62 = por %p60, %p61
      %s63 = ssub.s32 %s17, %s36
      %p64 = scmp.eq.s32.totalorder %s63, 0
      %s66 = sadd.s32 %s65, 1
      %s67 = scalar_select %p64, %s65, %s66
      %p70 = pneg %p64
      %p71 = scmp.eq.s32.totalorder %s10, 19
      %p72 = por %p70, %p71
      %p73 = scmp.ne.s32.totalorder %s65, %s68
      %p74 = scmp.eq.s32.totalorder %s10, 0
      %p75 = por %p73, %p74
      %p76 = scmp.ne.s32.totalorder %s65, %s68
      %p77 = scmp.eq.s32.totalorder %s15, 19
      %p78 = por %p76, %p77
      %p79 = scmp.ne.s32.totalorder %s68, %s69
      %p80 = scmp.eq.s32.totalorder %s15, 0
      %p81 = por %p79, %p80
      %p82 = scmp.ne.s32.totalorder %s68, %s69
      %p83 = scmp.eq.s32.totalorder %s16, 19
      %p84 = por %p82, %p83
      %p86 = scmp.ne.s32.totalorder %s69, %s85
      %p87 = scmp.eq.s32.totalorder %s16, 0
      %p88 = por %p86, %p87
      %s89 = ssub.s32 %s18, %s32
      %p90 = scmp.eq.s32.totalorder %s89, 0
      %s92 = sadd.s32 %s91, 1
      %s93 = scalar_select %p90, %s91, %s92
      %p96 = pneg %p90
      %p97 = scmp.eq.s32.totalorder %s10, 19
      %p98 = por %p96, %p97
      %p99 = scmp.ne.s32.totalorder %s91, %s94
      %p100 = scmp.eq.s32.totalorder %s10, 0
      %p101 = por %p99, %p100
      %p102 = scmp.ne.s32.totalorder %s91, %s94
      %p103 = scmp.eq.s32.totalorder %s15, 19
      %p104 = por %p102, %p103
      %p105 = scmp.ne.s32.totalorder %s94, %s95
      %p106 = scmp.eq.s32.totalorder %s15, 0
      %p107 = por %p105, %p106
      %p108 = scmp.ne.s32.totalorder %s94, %s95
      %p109 = scmp.eq.s32.totalorder %s16, 19
      %p110 = por %p108, %p109
      %p112 = scmp.ne.s32.totalorder %s95, %s111
      %p113 = scmp.eq.s32.totalorder %s16, 0
      %p114 = por %p112, %p113
      %s115 = ssub.s32 %s18, %s32
      %p116 = scmp.eq.s32.totalorder %s115, 0
      %s118 = sadd.s32 %s117, 1
      %s119 = scalar_select %p116, %s117, %s118
      %p122 = pneg %p116
      %p123 = scmp.eq.s32.totalorder %s10, 19
      %p124 = por %p122, %p123
      %p125 = scmp.ne.s32.totalorder %s117, %s120
      %p126 = scmp.eq.s32.totalorder %s10, 0
      %p127 = por %p125, %p126
      %p128 = scmp.ne.s32.totalorder %s117, %s120
      %p129 = scmp.eq.s32.totalorder %s15, 19
      %p130 = por %p128, %p129
      %p131 = scmp.ne.s32.totalorder %s120, %s121
      %p132 = scmp.eq.s32.totalorder %s15, 0
      %p133 = por %p131, %p132
      %p134 = scmp.ne.s32.totalorder %s120, %s121
      %p135 = scmp.eq.s32.totalorder %s16, 19
      %p136 = por %p134, %p135
      %p138 = scmp.ne.s32.totalorder %s121, %s137
      %p139 = scmp.eq.s32.totalorder %s16, 0
      %p140 = por %p138, %p139
      %s141 = ssub.s32 %s17, %s36
      %s142 = ssub.s32 %s18, %s32
      %s143 = sor.u32 %s141, %s142
      %p144 = scmp.eq.s32.totalorder %s143, 0
      %s146 = sadd.s32 %s145, 1
      %s147 = scalar_select %p144, %s145, %s146
      %p150 = pneg %p144
      %p151 = scmp.eq.s32.totalorder %s10, 19
      %p152 = por %p150, %p151
      %p153 = scmp.ne.s32.totalorder %s145, %s148
      %p154 = scmp.eq.s32.totalorder %s10, 0
      %p155 = por %p153, %p154
      %p156 = scmp.ne.s32.totalorder %s145, %s148
      %p157 = scmp.eq.s32.totalorder %s15, 19
      %p158 = por %p156, %p157
      %p159 = scmp.ne.s32.totalorder %s148, %s149
      %p160 = scmp.eq.s32.totalorder %s15, 0
      %p161 = por %p159, %p160
      %p162 = scmp.ne.s32.totalorder %s148, %s149
      %p163 = scmp.eq.s32.totalorder %s16, 19
      %p164 = por %p162, %p163
      %p166 = scmp.ne.s32.totalorder %s149, %s165
      %p167 = scmp.eq.s32.totalorder %s16, 0
      %p168 = por %p166, %p167
      %p169 = scmp.le.s32.totalorder 1, %s10
      %p170 = scmp.lt.s32.totalorder %s10, 21
      %p171 = pnand %p169, %p170
      %p172 = pneg %p171
      // Predicated region
      $region9: #{cnn_branch_forward.5} parent=5 // pred_check
        _
      $region10: #{cnn_branch_forward.5} parent=5 // pred_check_branch
        %174 = sbr.rel (%p171) target = $region12
      $region11: #{cnn_branch_forward.5} parent=5 // pred_region
        %s175 = ssub.s32 %s10, 1
      $region12: #{cnn_branch_forward.5} parent=5 // pred_fallthru
        _
      %p176 = scmp.lt.s32.totalorder %s10, 20
      // Predicated region
      $region13: #{cnn_branch_forward.5} parent=5 // pred_check
        %p177 = pneg %p176
      $region14: #{cnn_branch_forward.5} parent=5 // pred_check_branch
        %179 = sbr.rel (%p177) target = $region16
      $region15: #{cnn_branch_forward.5} parent=5 // pred_region
        // Predicated region
        $region17: #{cnn_branch_forward.5} parent=15 // pred_check
          %p180 = pneg %p49
        $region18: #{cnn_branch_forward.5} parent=15 // pred_check_branch
          %182 = sbr.rel (%p180) target = $region20
        $region19: #{cnn_branch_forward.5} parent=15 // pred_region
          %p183 = scmp.lt.s32.totalorder %s17, 1
          %s184 = scalar_select %p183, %s17, 1
          %s185 = smul.addr %s184, 32
          %s186 = smul.addr %s185, 4
          %s187 = scalar_lea.vmem %s0, %s186
        $region20: #{cnn_branch_forward.5} parent=15 // pred_fallthru
          _
        // Predicated region
        $region21: #{cnn_branch_forward.5} parent=15 // pred_check
          %p188 = pneg %p75
        $region22: #{cnn_branch_forward.5} parent=15 // pred_check_branch
          %190 = sbr.rel (%p188) target = $region24
        $region23: #{cnn_branch_forward.5} parent=15 // pred_region
          %p191 = scmp.lt.s32.totalorder %s17, 1
          %s192 = scalar_select %p191, %s17, 1
          %s193 = scalar_lea.vmem %s1, %s192
        $region24: #{cnn_branch_forward.5} parent=15 // pred_fallthru
          _
        // Predicated region
        $region25: #{cnn_branch_forward.5} parent=15 // pred_check
          %p194 = pneg %p101
        $region26: #{cnn_branch_forward.5} parent=15 // pred_check_branch
          %196 = sbr.rel (%p194) target = $region28
        $region27: #{cnn_branch_forward.5} parent=15 // pred_region
          %s197 = sand.u32 %s91, 1
          %s198 = sand.u32 %s91, 1
          %s199 = smul.addr %s198, 32
          %s200 = scalar_lea.vmem [#allocation3], %s199
          %s201 = smul.u32 2, %s18
          %s202 = smul.addr %s201, 4
          %s203 = scalar_lea.vmem %s2, %s202
          // Predicated region
          $region29: #{cnn_branch_forward.5} parent=27 // pred_check
            _
          $region30: #{cnn_branch_forward.5} parent=27 // pred_check_branch
            %205 = sbr.rel (0) target = $region32
          $region31: #{cnn_branch_forward.5} parent=27 // pred_region
            // Predicated region
            $region33: #{cnn_branch_forward.5} parent=31 // pred_check
              _
            $region34: #{cnn_branch_forward.5} parent=31 // pred_check_branch
              %207 = sbr.rel (0) target = $region36
            $region35: #{cnn_branch_forward.5} parent=31 // pred_region
              // Predicated region
              $region48: #{cnn_branch_forward.5} parent=35 // pred_check
                _
              $region49: #{cnn_branch_forward.5} parent=35 // pred_check_branch
                %229 = sbr.rel (0) target = $region51
              $region50: #{cnn_branch_forward.5} parent=35 // pred_region
                loop: start=0, step=1, limit=1
                $region52: #{cnn_branch_forward.5} parent=50 // loop_pre_header
                  _
                $region53: #{cnn_branch_forward.5} parent=50 // loop_header
                  %s231 = sphi 0, %s235
                  %p232 = scmp.ge.s32.totalorder %s231, 1
                  %s236 = sphi %s203, %s203
                  %s237 = sphi %s200, %s200
                $region54: #{cnn_branch_forward.5} parent=50 // loop_header_branch
                  %234 = sbr.rel (%p232) target = $region58
                $region55: #{cnn_branch_forward.5} parent=50 // loop_body
                  %v238 = vld [vmem:[%s236] sm:$0xff]
                  %239 = vst [vmem:[%s237] sm:$0xff] %v238
                  %v240 = vld [vmem:[%s236 + $0x28] sm:$0xff]
                  %241 = vst [vmem:[%s237 + $0x8] sm:$0xff] %v240
                  %v242 = vld [vmem:[%s236 + $0x50] sm:$0xff]
                  %243 = vst [vmem:[%s237 + $0x10] sm:$0xff] %v242
                  %v244 = vld [vmem:[%s236 + $0x78] sm:$0xff]
                  %245 = vst [vmem:[%s237 + $0x18] sm:$0xff] %v244
                $region56: #{cnn_branch_forward.5} parent=50 // loop_footer
                  %s235 = sadd.s32 1, %s231
                $region57: #{cnn_branch_forward.5} parent=50 // loop_footer_branch
                  %230 = sbr.rel target = $region53
                $region58: #{cnn_branch_forward.5} parent=50 // loop_exit
                  _
              $region51: #{cnn_branch_forward.5} parent=35 // pred_fallthru
                _
              // Predicated region
              $region59: #{cnn_branch_forward.5} parent=35 // pred_check
                _
              $region60: #{cnn_branch_forward.5} parent=35 // pred_check_branch
                %247 = sbr.rel target = $region62
              $region61: #{cnn_branch_forward.5} parent=35 // pred_region
                _
              $region62: #{cnn_branch_forward.5} parent=35 // pred_fallthru
                _
            $region36: #{cnn_branch_forward.5} parent=31 // pred_fallthru
              _
            // Predicated region
            $region37: #{cnn_branch_forward.5} parent=31 // pred_check
              _
            $region38: #{cnn_branch_forward.5} parent=31 // pred_check_branch
              %209 = sbr.rel target = $region40
            $region39: #{cnn_branch_forward.5} parent=31 // pred_region
              %s211 = ssub.s32 256, 1
              loop: start=0, step=1, limit=1
              $region41: #{cnn_branch_forward.5} parent=39 // loop_pre_header
                _
              $region42: #{cnn_branch_forward.5} parent=39 // loop_header
                %s213 = sphi 0, %s217
                %p214 = scmp.ge.s32.totalorder %s213, 1
                %s218 = sphi %s203, %s203
                %s219 = sphi %s200, %s200
              $region43: #{cnn_branch_forward.5} parent=39 // loop_header_branch
                %216 = sbr.rel (%p214) target = $region47
              $region44: #{cnn_branch_forward.5} parent=39 // loop_body
                %v220 = vld [vmem:[%s218] sm:%s211]
                %221 = vst [vmem:[%s219] sm:%s211] %v220
                %v222 = vld [vmem:[%s218 + $0x28] sm:%s211]
                %223 = vst [vmem:[%s219 + $0x8] sm:%s211] %v222
                %v224 = vld [vmem:[%s218 + $0x50] sm:%s211]
                %225 = vst [vmem:[%s219 + $0x10] sm:%s211] %v224
                %v226 = vld [vmem:[%s218 + $0x78] sm:%s211]
                %227 = vst [vmem:[%s219 + $0x18] sm:%s211] %v226
              $region45: #{cnn_branch_forward.5} parent=39 // loop_footer
                %s217 = sadd.s32 1, %s213
              $region46: #{cnn_branch_forward.5} parent=39 // loop_footer_branch
                %212 = sbr.rel target = $region42
              $region47: #{cnn_branch_forward.5} parent=39 // loop_exit
                _
            $region40: #{cnn_branch_forward.5} parent=31 // pred_fallthru
              _
          $region32: #{cnn_branch_forward.5} parent=27 // pred_fallthru
            _
          %248 = vnop
        $region28: #{cnn_branch_forward.5} parent=15 // pred_fallthru
          _
        // Predicated region
        $region63: #{cnn_branch_forward.5} parent=15 // pred_check
          %p249 = pneg %p127
        $region64: #{cnn_branch_forward.5} parent=15 // pred_check_branch
          %251 = sbr.rel (%p249) target = $region66
        $region65: #{cnn_branch_forward.5} parent=15 // pred_region
          %s252 = smul.u32 2, %s18
          %p253 = scmp.lt.s32.totalorder %s252, 9
          %s254 = scalar_select %p253, %s252, 9
          %s255 = scalar_lea.vmem %s3, %s254
          %s256 = smul.u32 2, %s18
        $region66: #{cnn_branch_forward.5} parent=15 // pred_fallthru
          _
      $region16: #{cnn_branch_forward.5} parent=5 // pred_fallthru
        _
      %p257 = scmp.le.s32.totalorder 1, %s10
      %p258 = scmp.lt.s32.totalorder %s10, 21
      %p259 = pnand %p257, %p258
      %p260 = pneg %p259
      // Predicated region
      $region67: #{cnn_branch_forward.5} parent=5 // pred_check
        _
      $region68: #{cnn_branch_forward.5} parent=5 // pred_check_branch
        %262 = sbr.rel (%p259) target = $region70
      $region69: #{cnn_branch_forward.5} parent=5 // pred_region
        %s263 = ssub.s32 %s10, 1
        %s264 = sand.u32 %s94, 1
        %s265 = sand.u32 %s94, 1
        %s266 = smul.addr %s265, 32
        %s267 = scalar_lea.vmem [#allocation3], %s266
        // Predicated region
        $region71: #{cnn_branch_forward.5} parent=69 // pred_check
          %p268 = pneg %p107
        $region72: #{cnn_branch_forward.5} parent=69 // pred_check_branch
          %270 = sbr.rel (%p268) target = $region74
        $region73: #{cnn_branch_forward.5} parent=69 // pred_region
          _
        $region74: #{cnn_branch_forward.5} parent=69 // pred_fallthru
          _
        %p271 = scmp.lt.s32.totalorder %s20, 1
        %s272 = scalar_select %p271, %s20, 1
        %s273 = smul.addr %s272, 32
        %s274 = smul.addr %s273, 4
        %s275 = scalar_lea.vmem %s0, %s274
        %p276 = pneg %p55
        %p277 = pneg %p52
        %p278 = scmp.lt.s32.totalorder %s20, 1
        %s279 = scalar_select %p278, %s20, 1
        %s280 = scalar_lea.vmem %s1, %s279
        %p281 = pneg %p81
        %p282 = pneg %p78
        %s283 = sand.u32 %s94, 1
        %s284 = sand.u32 %s94, 1
        %s285 = smul.addr %s284, 32
        %s286 = scalar_lea.vmem [#allocation3], %s285
        %p287 = pneg %p107
        %p288 = pneg %p104
        %s289 = smul.u32 2, %s21
        %p290 = scmp.lt.s32.totalorder %s289, 9
        %s291 = scalar_select %p290, %s289, 9
        %s292 = scalar_lea.vmem %s3, %s291
        %p293 = pneg %p133
        %p294 = pneg %p130
        %p295 = pneg %p161
        %p296 = pneg %p158
        %s297 = smul.u32 2, %s21
        %p298 = scmp.lt.s32.totalorder %s20, 1
        %s299 = scalar_select %p298, %s20, 1
        %p300 = scmp.lt.s32.totalorder %s297, 9
        %s301 = scalar_select %p300, %s297, 9
        %s302 = smul.addr %s299, 10
        %s303 = sadd.s32 %s301, %s302
        %s304 = scalar_lea.vmem %s4, %s303
        %p305 = scmp.lt.s32.totalorder %s20, 1
        %s306 = scalar_select %p305, %s20, 1
        %s307 = smul.addr %s306, 32
        %s308 = smul.addr %s307, 4
        %s309 = scalar_lea.vmem %s0, %s308
        %p310 = scmp.lt.s32.totalorder %s20, 1
        %s311 = scalar_select %p310, %s20, 1
        %s312 = scalar_lea.vmem %s1, %s311
        %s313 = smul.u32 2, %s21
        %s314 = smul.u32 2, %s21
        %p315 = scmp.lt.s32.totalorder %s314, 9
        %s316 = scalar_select %p315, %s314, 9
        %s317 = scalar_lea.vmem %s3, %s316
        %s318 = smul.u32 2, %s21
        %s319 = smul.u32 2, %s21
        %p320 = scmp.lt.s32.totalorder %s20, 1
        %s321 = scalar_select %p320, %s20, 1
        %p322 = scmp.lt.s32.totalorder %s319, 9
        %s323 = scalar_select %p322, %s319, 9
        %s324 = smul.addr %s321, 10
        %s325 = sadd.s32 %s323, %s324
        %s326 = scalar_lea.vmem %s4, %s325
        %s327 = smul.u32 2, %s21
        %p329 = scmp.eq.s32.totalorder %s22, 0
        // Predicated region
        $region75: #{cnn_branch_forward.5} parent=69 // pred_check
          %p330 = pneg %p329
        $region76: #{cnn_branch_forward.5} parent=69 // pred_check_branch
          %332 = sbr.rel (%p330) target = $region78
        $region77: #{cnn_branch_forward.5} parent=69 // pred_region
          %v333 = vlaneseq
          %vm334 = vcmp.ge.s32.totalorder %v333, 0
          %vm335 = vcmp.lt.s32.totalorder %v333, 256
          %vm336 = vmand %vm334, %vm335
          %337 = vst.msk [vmem:[#allocation2] sm:$0x3] %vm336, 0.0
        $region78: #{cnn_branch_forward.5} parent=69 // pred_fallthru
          _
        %s338 = smul.u32 %s22, 128
        %s339 = sshra.s32 %s338, 3
        %s340 = sand.u32 %s338, 7
        %s341 = smul.addr %s339, 4
        %s342 = scalar_lea.vmem %s309, %s341
        %v343 = vld [vmem:[%s342] sm:$0xf]
        %v344 = vld [vmem:[%s342 + $0x4] sm:$0xf]
        %v345 = vld [vmem:[%s342 + $0x8] sm:$0xf]
        %v346 = vld [vmem:[%s342 + $0xc] sm:$0xf]
        %v347 = vld [vmem:[%s342 + $0x10] sm:$0xf]
        %v348 = vld [vmem:[%s342 + $0x14] sm:$0xf]
        %v349 = vld [vmem:[%s342 + $0x18] sm:$0xf]
        %v350 = vld [vmem:[%s342 + $0x1c] sm:$0xf]
        %v351 = vld [vmem:[%s342 + $0x20] sm:$0xf]
        %v352 = vld [vmem:[%s342 + $0x24] sm:$0xf]
        %v353 = vld [vmem:[%s342 + $0x28] sm:$0xf]
        %v354 = vld [vmem:[%s342 + $0x2c] sm:$0xf]
        %v355 = vld [vmem:[%s342 + $0x30] sm:$0xf]
        %v356 = vld [vmem:[%s342 + $0x34] sm:$0xf]
        %v357 = vld [vmem:[%s342 + $0x38] sm:$0xf]
        %v358 = vld [vmem:[%s342 + $0x3c] sm:$0xf]
        %v359 = vld [vmem:[%s312] sm:$0x1]
        %v361 = vpack.i.b16 %v359, %v359
        %v363 = vperm.slane %v361, 0
        %v364 = vunpack.c.l.bf16 %v343
        %v365 = vunpack.c.l.bf16 %v344
        %v366 = vunpack.c.l.bf16 %v345
        %v367 = vunpack.c.l.bf16 %v346
        %v368 = vunpack.c.l.bf16 %v347
        %v369 = vunpack.c.l.bf16 %v348
        %v370 = vunpack.c.l.bf16 %v349
        %v371 = vunpack.c.l.bf16 %v350
        %v372 = vunpack.c.l.bf16 %v351
        %v373 = vunpack.c.l.bf16 %v352
        %v374 = vunpack.c.l.bf16 %v353
        %v375 = vunpack.c.l.bf16 %v354
        %v376 = vunpack.c.l.bf16 %v355
        %v377 = vunpack.c.l.bf16 %v356
        %v378 = vunpack.c.l.bf16 %v357
        %v379 = vunpack.c.l.bf16 %v358
        %v380 = vunpack.c.l.bf16 %v363
        %v381 = vmul.f32 %v364, %v380
        %v382 = vmul.f32 %v365, %v380
        %v383 = vmul.f32 %v366, %v380
        %v384 = vmul.f32 %v367, %v380
        %v385 = vmul.f32 %v368, %v380
        %v386 = vmul.f32 %v369, %v380
        %v387 = vmul.f32 %v370, %v380
        %v388 = vmul.f32 %v371, %v380
        %v389 = vmul.f32 %v372, %v380
        %v390 = vmul.f32 %v373, %v380
        %v391 = vmul.f32 %v374, %v380
        %v392 = vmul.f32 %v375, %v380
        %v393 = vmul.f32 %v376, %v380
        %v394 = vmul.f32 %v377, %v380
        %v395 = vmul.f32 %v378, %v380
        %v396 = vmul.f32 %v379, %v380
        %v397 = vpack.c.bf16 %v382, %v381
        %v398 = vpack.c.bf16 %v384, %v383
        %v399 = vpack.c.bf16 %v386, %v385
        %v400 = vpack.c.bf16 %v388, %v387
        %v401 = vpack.c.bf16 %v390, %v389
        %v402 = vpack.c.bf16 %v392, %v391
        %v403 = vpack.c.bf16 %v394, %v393
        %v404 = vpack.c.bf16 %v396, %v395
        %v405 = vld [vmem:[%s267] sm:$0xff]
        %v406 = vld [vmem:[%s267 + $0x8] sm:$0xff]
        %v407 = vld [vmem:[%s267 + $0x10] sm:$0xff]
        %v408 = vld [vmem:[%s267 + $0x18] sm:$0xff]
        %v409 = vld [vmem:[%s317] sm:$0x3]
        %v411 = vperm.slane %v409, 0
        %v412 = vperm.slane %v409, 1
        %v419 = vunpack.c.l.b16 %v405
        %v420 = vunpack.c.h.b16 %v405
        %v421 = vunpack.c.l.b16 %v406
        %v422 = vunpack.c.h.b16 %v406
        %v423 = vunpack.c.l.b16 %v407
        %v424 = vunpack.c.h.b16 %v407
        %v425 = vunpack.c.l.b16 %v408
        %v426 = vunpack.c.h.b16 %v408
        %v427 = vpack.c.b16 %v421, %v419
        %v428 = vpack.c.b16 %v422, %v420
        %v429 = vpack.c.b16 %v425, %v423
        %v430 = vpack.c.b16 %v426, %v424
        %vm435 = vcmask 261120
        %v437 = vsel %vm435, %v397, 0
        %v440 = vsel %vm435, %v398, 0
        %v443 = vsel %vm435, %v399, 0
        %v446 = vsel %vm435, %v400, 0
        %v449 = vsel %vm435, %v401, 0
        %v452 = vsel %vm435, %v402, 0
        %v455 = vsel %vm435, %v403, 0
        %v458 = vsel %vm435, %v404, 0
        %460 = vmatpush.bf16.msra.mxu0 0
        %461 = vmatpush.bf16.msra.mxu0 0
        %462 = vmatpush.bf16.msra.mxu0 0
        %463 = vmatpush.bf16.msra.mxu0 0
        %464 = vmatpush.bf16.msra.mxu0 0
        %465 = vmatpush.bf16.msra.mxu0 0
        %466 = vmatpush.bf16.msra.mxu0 %v429
        %467 = vmatpush.bf16.msra.mxu0 %v427
        %468 = vmatmul.bf16.gmra.mxu0 %v437
        %v469 = vpop.f32.mrf.mxu0
        %v470 = vadd.f32 %v411, %v469
        %v471 = vpop.f32.mrf.mxu0
        %v472 = vadd.f32 %v411, %v471
        %473 = vmatmul.bf16.gmra.mxu0 %v440
        %v474 = vpop.f32.mrf.mxu0
        %v475 = vadd.f32 %v411, %v474
        %v476 = vpop.f32.mrf.mxu0
        %v477 = vadd.f32 %v411, %v476
        %478 = vmatmul.bf16.gmra.mxu0 %v443
        %v479 = vpop.f32.mrf.mxu0
        %v480 = vadd.f32 %v411, %v479
        %v481 = vpop.f32.mrf.mxu0
        %v482 = vadd.f32 %v411, %v481
        %483 = vmatmul.bf16.gmra.mxu0 %v446
        %v484 = vpop.f32.mrf.mxu0
        %v485 = vadd.f32 %v411, %v484
        %v486 = vpop.f32.mrf.mxu0
        %v487 = vadd.f32 %v411, %v486
        %488 = vmatmul.bf16.gmra.mxu0 %v449
        %v489 = vpop.f32.mrf.mxu0
        %v490 = vadd.f32 %v411, %v489
        %v491 = vpop.f32.mrf.mxu0
        %v492 = vadd.f32 %v411, %v491
        %493 = vmatmul.bf16.gmra.mxu0 %v452
        %v494 = vpop.f32.mrf.mxu0
        %v495 = vadd.f32 %v411, %v494
        %v496 = vpop.f32.mrf.mxu0
        %v497 = vadd.f32 %v411, %v496
        %498 = vmatmul.bf16.gmra.mxu0 %v455
        %v499 = vpop.f32.mrf.mxu0
        %v500 = vadd.f32 %v411, %v499
        %v501 = vpop.f32.mrf.mxu0
        %v502 = vadd.f32 %v411, %v501
        %503 = vmatmul.bf16.gmra.mxu0 %v458
        %v504 = vpop.f32.mrf.mxu0
        %v505 = vadd.f32 %v411, %v504
        %v506 = vpop.f32.mrf.mxu0
        %v507 = vadd.f32 %v411, %v506
        %508 = vdwg.mxu0
        %509 = vmatpush.bf16.msra.mxu0 0
        %510 = vmatpush.bf16.msra.mxu0 0
        %511 = vmatpush.bf16.msra.mxu0 0
        %512 = vmatpush.bf16.msra.mxu0 0
        %513 = vmatpush.bf16.msra.mxu0 0
        %514 = vmatpush.bf16.msra.mxu0 0
        %515 = vmatpush.bf16.msra.mxu0 %v430
        %516 = vmatpush.bf16.msra.mxu0 %v428
        %517 = vmatmul.bf16.gmra.mxu0 %v437
        %v518 = vpop.f32.mrf.mxu0
        %v519 = vadd.f32 %v412, %v518
        %v520 = vpop.f32.mrf.mxu0
        %v521 = vadd.f32 %v412, %v520
        %522 = vmatmul.bf16.gmra.mxu0 %v440
        %v523 = vpop.f32.mrf.mxu0
        %v524 = vadd.f32 %v412, %v523
        %v525 = vpop.f32.mrf.mxu0
        %v526 = vadd.f32 %v412, %v525
        %527 = vmatmul.bf16.gmra.mxu0 %v443
        %v528 = vpop.f32.mrf.mxu0
        %v529 = vadd.f32 %v412, %v528
        %v530 = vpop.f32.mrf.mxu0
        %v531 = vadd.f32 %v412, %v530
        %532 = vmatmul.bf16.gmra.mxu0 %v446
        %v533 = vpop.f32.mrf.mxu0
        %v534 = vadd.f32 %v412, %v533
        %v535 = vpop.f32.mrf.mxu0
        %v536 = vadd.f32 %v412, %v535
        %537 = vmatmul.bf16.gmra.mxu0 %v449
        %v538 = vpop.f32.mrf.mxu0
        %v539 = vadd.f32 %v412, %v538
        %v540 = vpop.f32.mrf.mxu0
        %v541 = vadd.f32 %v412, %v540
        %542 = vmatmul.bf16.gmra.mxu0 %v452
        %v543 = vpop.f32.mrf.mxu0
        %v544 = vadd.f32 %v412, %v543
        %v545 = vpop.f32.mrf.mxu0
        %v546 = vadd.f32 %v412, %v545
        %547 = vmatmul.bf16.gmra.mxu0 %v455
        %v548 = vpop.f32.mrf.mxu0
        %v549 = vadd.f32 %v412, %v548
        %v550 = vpop.f32.mrf.mxu0
        %v551 = vadd.f32 %v412, %v550
        %552 = vmatmul.bf16.gmra.mxu0 %v458
        %v553 = vpop.f32.mrf.mxu0
        %v554 = vadd.f32 %v412, %v553
        %v555 = vpop.f32.mrf.mxu0
        %v556 = vadd.f32 %v412, %v555
        %557 = vdwg.mxu0
        %v558 = vxor.u32 %v470, 2147483648
        %v559 = vxor.u32 %v519, 2147483648
        %v560 = vxor.u32 %v472, 2147483648
        %v561 = vxor.u32 %v521, 2147483648
        %v562 = vxor.u32 %v475, 2147483648
        %v563 = vxor.u32 %v524, 2147483648
        %v564 = vxor.u32 %v477, 2147483648
        %v565 = vxor.u32 %v526, 2147483648
        %v566 = vxor.u32 %v480, 2147483648
        %v567 = vxor.u32 %v529, 2147483648
        %v568 = vxor.u32 %v482, 2147483648
        %v569 = vxor.u32 %v531, 2147483648
        %v570 = vxor.u32 %v485, 2147483648
        %v571 = vxor.u32 %v534, 2147483648
        %v572 = vxor.u32 %v487, 2147483648
        %v573 = vxor.u32 %v536, 2147483648
        %v574 = vxor.u32 %v490, 2147483648
        %v575 = vxor.u32 %v539, 2147483648
        %v576 = vxor.u32 %v492, 2147483648
        %v577 = vxor.u32 %v541, 2147483648
        %v578 = vxor.u32 %v495, 2147483648
        %v579 = vxor.u32 %v544, 2147483648
        %v580 = vxor.u32 %v497, 2147483648
        %v581 = vxor.u32 %v546, 2147483648
        %v582 = vxor.u32 %v500, 2147483648
        %v583 = vxor.u32 %v549, 2147483648
        %v584 = vxor.u32 %v502, 2147483648
        %v585 = vxor.u32 %v551, 2147483648
        %v586 = vxor.u32 %v505, 2147483648
        %v587 = vxor.u32 %v554, 2147483648
        %v588 = vxor.u32 %v507, 2147483648
        %v589 = vxor.u32 %v556, 2147483648
        %v590 = vmul.f32 %v558, 1.442695
        %v591 = vpow.pop %v590
        %v592 = vmul.f32 %v559, 1.442695
        %v593 = vpow.pop %v592
        %v594 = vmul.f32 %v560, 1.442695
        %v595 = vpow.pop %v594
        %v596 = vmul.f32 %v561, 1.442695
        %v597 = vpow.pop %v596
        %v598 = vmul.f32 %v562, 1.442695
        %v599 = vpow.pop %v598
        %v600 = vmul.f32 %v563, 1.442695
        %v601 = vpow.pop %v600
        %v602 = vmul.f32 %v564, 1.442695
        %v603 = vpow.pop %v602
        %v604 = vmul.f32 %v565, 1.442695
        %v605 = vpow.pop %v604
        %v606 = vmul.f32 %v566, 1.442695
        %v607 = vpow.pop %v606
        %v608 = vmul.f32 %v567, 1.442695
        %v609 = vpow.pop %v608
        %v610 = vmul.f32 %v568, 1.442695
        %v611 = vpow.pop %v610
        %v612 = vmul.f32 %v569, 1.442695
        %v613 = vpow.pop %v612
        %v614 = vmul.f32 %v570, 1.442695
        %v615 = vpow.pop %v614
        %v616 = vmul.f32 %v571, 1.442695
        %v617 = vpow.pop %v616
        %v618 = vmul.f32 %v572, 1.442695
        %v619 = vpow.pop %v618
        %v620 = vmul.f32 %v573, 1.442695
        %v621 = vpow.pop %v620
        %v622 = vmul.f32 %v574, 1.442695
        %v623 = vpow.pop %v622
        %v624 = vmul.f32 %v575, 1.442695
        %v625 = vpow.pop %v624
        %v626 = vmul.f32 %v576, 1.442695
        %v627 = vpow.pop %v626
        %v628 = vmul.f32 %v577, 1.442695
        %v629 = vpow.pop %v628
        %v630 = vmul.f32 %v578, 1.442695
        %v631 = vpow.pop %v630
        %v632 = vmul.f32 %v579, 1.442695
        %v633 = vpow.pop %v632
        %v634 = vmul.f32 %v580, 1.442695
        %v635 = vpow.pop %v634
        %v636 = vmul.f32 %v581, 1.442695
        %v637 = vpow.pop %v636
        %v638 = vmul.f32 %v582, 1.442695
        %v639 = vpow.pop %v638
        %v640 = vmul.f32 %v583, 1.442695
        %v641 = vpow.pop %v640
        %v642 = vmul.f32 %v584, 1.442695
        %v643 = vpow.pop %v642
        %v644 = vmul.f32 %v585, 1.442695
        %v645 = vpow.pop %v644
        %v646 = vmul.f32 %v586, 1.442695
        %v647 = vpow.pop %v646
        %v648 = vmul.f32 %v587, 1.442695
        %v649 = vpow.pop %v648
        %v650 = vmul.f32 %v588, 1.442695
        %v651 = vpow.pop %v650
        %v652 = vmul.f32 %v589, 1.442695
        %v653 = vpow.pop %v652
        %v654 = vadd.f32 %v591, 1.0
        %v655 = vadd.f32 %v593, 1.0
        %v656 = vadd.f32 %v595, 1.0
        %v657 = vadd.f32 %v597, 1.0
        %v658 = vadd.f32 %v599, 1.0
        %v659 = vadd.f32 %v601, 1.0
        %v660 = vadd.f32 %v603, 1.0
        %v661 = vadd.f32 %v605, 1.0
        %v662 = vadd.f32 %v607, 1.0
        %v663 = vadd.f32 %v609, 1.0
        %v664 = vadd.f32 %v611, 1.0
        %v665 = vadd.f32 %v613, 1.0
        %v666 = vadd.f32 %v615, 1.0
        %v667 = vadd.f32 %v617, 1.0
        %v668 = vadd.f32 %v619, 1.0
        %v669 = vadd.f32 %v621, 1.0
        %v670 = vadd.f32 %v623, 1.0
        %v671 = vadd.f32 %v625, 1.0
        %v672 = vadd.f32 %v627, 1.0
        %v673 = vadd.f32 %v629, 1.0
        %v674 = vadd.f32 %v631, 1.0
        %v675 = vadd.f32 %v633, 1.0
        %v676 = vadd.f32 %v635, 1.0
        %v677 = vadd.f32 %v637, 1.0
        %v678 = vadd.f32 %v639, 1.0
        %v679 = vadd.f32 %v641, 1.0
        %v680 = vadd.f32 %v643, 1.0
        %v681 = vadd.f32 %v645, 1.0
        %v682 = vadd.f32 %v647, 1.0
        %v683 = vadd.f32 %v649, 1.0
        %v684 = vadd.f32 %v651, 1.0
        %v685 = vadd.f32 %v653, 1.0
        %v686 = vrcp.pop %v654
        %v687 = vmul.f32 %v654, %v686
        %v688 = vsub.f32 1.0, %v687
        %v689 = vmul.f32 %v686, %v688
        %v690 = vadd.f32 %v686, %v689
        %vm691 = vweird.f32 %v654
        %vm692 = vweird.f32 %v686
        %vm693 = vmor %vm691, %vm692
        %v694 = vsel %vm693, %v686, %v690
        %v695 = vand.u32 2147483647, %v654
        %vm696 = vcmp.eq.f32.partialorder %v695, 8.507059e+37
        %v697 = vand.u32 %v654, 2147483648
        %v698 = vor.u32 1.1754944e-38, %v697
        %v699 = vsel %vm696, %v698, %v694
        %v700 = vmul.f32 1.0, %v699
        %v701 = vrcp.pop %v655
        %v702 = vmul.f32 %v655, %v701
        %v703 = vsub.f32 1.0, %v702
        %v704 = vmul.f32 %v701, %v703
        %v705 = vadd.f32 %v701, %v704
        %vm706 = vweird.f32 %v655
        %vm707 = vweird.f32 %v701
        %vm708 = vmor %vm706, %vm707
        %v709 = vsel %vm708, %v701, %v705
        %v710 = vand.u32 2147483647, %v655
        %vm711 = vcmp.eq.f32.partialorder %v710, 8.507059e+37
        %v712 = vand.u32 %v655, 2147483648
        %v713 = vor.u32 1.1754944e-38, %v712
        %v714 = vsel %vm711, %v713, %v709
        %v715 = vmul.f32 1.0, %v714
        %v716 = vrcp.pop %v656
        %v717 = vmul.f32 %v656, %v716
        %v718 = vsub.f32 1.0, %v717
        %v719 = vmul.f32 %v716, %v718
        %v720 = vadd.f32 %v716, %v719
        %vm721 = vweird.f32 %v656
        %vm722 = vweird.f32 %v716
        %vm723 = vmor %vm721, %vm722
        %v724 = vsel %vm723, %v716, %v720
        %v725 = vand.u32 2147483647, %v656
        %vm726 = vcmp.eq.f32.partialorder %v725, 8.507059e+37
        %v727 = vand.u32 %v656, 2147483648
        %v728 = vor.u32 1.1754944e-38, %v727
        %v729 = vsel %vm726, %v728, %v724
        %v730 = vmul.f32 1.0, %v729
        %v731 = vrcp.pop %v657
        %v732 = vmul.f32 %v657, %v731
        %v733 = vsub.f32 1.0, %v732
        %v734 = vmul.f32 %v731, %v733
        %v735 = vadd.f32 %v731, %v734
        %vm736 = vweird.f32 %v657
        %vm737 = vweird.f32 %v731
        %vm738 = vmor %vm736, %vm737
        %v739 = vsel %vm738, %v731, %v735
        %v740 = vand.u32 2147483647, %v657
        %vm741 = vcmp.eq.f32.partialorder %v740, 8.507059e+37
        %v742 = vand.u32 %v657, 2147483648
        %v743 = vor.u32 1.1754944e-38, %v742
        %v744 = vsel %vm741, %v743, %v739
        %v745 = vmul.f32 1.0, %v744
        %v746 = vrcp.pop %v658
        %v747 = vmul.f32 %v658, %v746
        %v748 = vsub.f32 1.0, %v747
        %v749 = vmul.f32 %v746, %v748
        %v750 = vadd.f32 %v746, %v749
        %vm751 = vweird.f32 %v658
        %vm752 = vweird.f32 %v746
        %vm753 = vmor %vm751, %vm752
        %v754 = vsel %vm753, %v746, %v750
        %v755 = vand.u32 2147483647, %v658
        %vm756 = vcmp.eq.f32.partialorder %v755, 8.507059e+37
        %v757 = vand.u32 %v658, 2147483648
        %v758 = vor.u32 1.1754944e-38, %v757
        %v759 = vsel %vm756, %v758, %v754
        %v760 = vmul.f32 1.0, %v759
        %v761 = vrcp.pop %v659
        %v762 = vmul.f32 %v659, %v761
        %v763 = vsub.f32 1.0, %v762
        %v764 = vmul.f32 %v761, %v763
        %v765 = vadd.f32 %v761, %v764
        %vm766 = vweird.f32 %v659
        %vm767 = vweird.f32 %v761
        %vm768 = vmor %vm766, %vm767
        %v769 = vsel %vm768, %v761, %v765
        %v770 = vand.u32 2147483647, %v659
        %vm771 = vcmp.eq.f32.partialorder %v770, 8.507059e+37
        %v772 = vand.u32 %v659, 2147483648
        %v773 = vor.u32 1.1754944e-38, %v772
        %v774 = vsel %vm771, %v773, %v769
        %v775 = vmul.f32 1.0, %v774
        %v776 = vrcp.pop %v660
        %v777 = vmul.f32 %v660, %v776
        %v778 = vsub.f32 1.0, %v777
        %v779 = vmul.f32 %v776, %v778
        %v780 = vadd.f32 %v776, %v779
        %vm781 = vweird.f32 %v660
        %vm782 = vweird.f32 %v776
        %vm783 = vmor %vm781, %vm782
        %v784 = vsel %vm783, %v776, %v780
        %v785 = vand.u32 2147483647, %v660
        %vm786 = vcmp.eq.f32.partialorder %v785, 8.507059e+37
        %v787 = vand.u32 %v660, 2147483648
        %v788 = vor.u32 1.1754944e-38, %v787
        %v789 = vsel %vm786, %v788, %v784
        %v790 = vmul.f32 1.0, %v789
        %v791 = vrcp.pop %v661
        %v792 = vmul.f32 %v661, %v791
        %v793 = vsub.f32 1.0, %v792
        %v794 = vmul.f32 %v791, %v793
        %v795 = vadd.f32 %v791, %v794
        %vm796 = vweird.f32 %v661
        %vm797 = vweird.f32 %v791
        %vm798 = vmor %vm796, %vm797
        %v799 = vsel %vm798, %v791, %v795
        %v800 = vand.u32 2147483647, %v661
        %vm801 = vcmp.eq.f32.partialorder %v800, 8.507059e+37
        %v802 = vand.u32 %v661, 2147483648
        %v803 = vor.u32 1.1754944e-38, %v802
        %v804 = vsel %vm801, %v803, %v799
        %v805 = vmul.f32 1.0, %v804
        %v806 = vrcp.pop %v662
        %v807 = vmul.f32 %v662, %v806
        %v808 = vsub.f32 1.0, %v807
        %v809 = vmul.f32 %v806, %v808
        %v810 = vadd.f32 %v806, %v809
        %vm811 = vweird.f32 %v662
        %vm812 = vweird.f32 %v806
        %vm813 = vmor %vm811, %vm812
        %v814 = vsel %vm813, %v806, %v810
        %v815 = vand.u32 2147483647, %v662
        %vm816 = vcmp.eq.f32.partialorder %v815, 8.507059e+37
        %v817 = vand.u32 %v662, 2147483648
        %v818 = vor.u32 1.1754944e-38, %v817
        %v819 = vsel %vm816, %v818, %v814
        %v820 = vmul.f32 1.0, %v819
        %v821 = vrcp.pop %v663
        %v822 = vmul.f32 %v663, %v821
        %v823 = vsub.f32 1.0, %v822
        %v824 = vmul.f32 %v821, %v823
        %v825 = vadd.f32 %v821, %v824
        %vm826 = vweird.f32 %v663
        %vm827 = vweird.f32 %v821
        %vm828 = vmor %vm826, %vm827
        %v829 = vsel %vm828, %v821, %v825
        %v830 = vand.u32 2147483647, %v663
        %vm831 = vcmp.eq.f32.partialorder %v830, 8.507059e+37
        %v832 = vand.u32 %v663, 2147483648
        %v833 = vor.u32 1.1754944e-38, %v832
        %v834 = vsel %vm831, %v833, %v829
        %v835 = vmul.f32 1.0, %v834
        %v836 = vrcp.pop %v664
        %v837 = vmul.f32 %v664, %v836
        %v838 = vsub.f32 1.0, %v837
        %v839 = vmul.f32 %v836, %v838
        %v840 = vadd.f32 %v836, %v839
        %vm841 = vweird.f32 %v664
        %vm842 = vweird.f32 %v836
        %vm843 = vmor %vm841, %vm842
        %v844 = vsel %vm843, %v836, %v840
        %v845 = vand.u32 2147483647, %v664
        %vm846 = vcmp.eq.f32.partialorder %v845, 8.507059e+37
        %v847 = vand.u32 %v664, 2147483648
        %v848 = vor.u32 1.1754944e-38, %v847
        %v849 = vsel %vm846, %v848, %v844
        %v850 = vmul.f32 1.0, %v849
        %v851 = vrcp.pop %v665
        %v852 = vmul.f32 %v665, %v851
        %v853 = vsub.f32 1.0, %v852
        %v854 = vmul.f32 %v851, %v853
        %v855 = vadd.f32 %v851, %v854
        %vm856 = vweird.f32 %v665
        %vm857 = vweird.f32 %v851
        %vm858 = vmor %vm856, %vm857
        %v859 = vsel %vm858, %v851, %v855
        %v860 = vand.u32 2147483647, %v665
        %vm861 = vcmp.eq.f32.partialorder %v860, 8.507059e+37
        %v862 = vand.u32 %v665, 2147483648
        %v863 = vor.u32 1.1754944e-38, %v862
        %v864 = vsel %vm861, %v863, %v859
        %v865 = vmul.f32 1.0, %v864
        %v866 = vrcp.pop %v666
        %v867 = vmul.f32 %v666, %v866
        %v868 = vsub.f32 1.0, %v867
        %v869 = vmul.f32 %v866, %v868
        %v870 = vadd.f32 %v866, %v869
        %vm871 = vweird.f32 %v666
        %vm872 = vweird.f32 %v866
        %vm873 = vmor %vm871, %vm872
        %v874 = vsel %vm873, %v866, %v870
        %v875 = vand.u32 2147483647, %v666
        %vm876 = vcmp.eq.f32.partialorder %v875, 8.507059e+37
        %v877 = vand.u32 %v666, 2147483648
        %v878 = vor.u32 1.1754944e-38, %v877
        %v879 = vsel %vm876, %v878, %v874
        %v880 = vmul.f32 1.0, %v879
        %v881 = vrcp.pop %v667
        %v882 = vmul.f32 %v667, %v881
        %v883 = vsub.f32 1.0, %v882
        %v884 = vmul.f32 %v881, %v883
        %v885 = vadd.f32 %v881, %v884
        %vm886 = vweird.f32 %v667
        %vm887 = vweird.f32 %v881
        %vm888 = vmor %vm886, %vm887
        %v889 = vsel %vm888, %v881, %v885
        %v890 = vand.u32 2147483647, %v667
        %vm891 = vcmp.eq.f32.partialorder %v890, 8.507059e+37
        %v892 = vand.u32 %v667, 2147483648
        %v893 = vor.u32 1.1754944e-38, %v892
        %v894 = vsel %vm891, %v893, %v889
        %v895 = vmul.f32 1.0, %v894
        %v896 = vrcp.pop %v668
        %v897 = vmul.f32 %v668, %v896
        %v898 = vsub.f32 1.0, %v897
        %v899 = vmul.f32 %v896, %v898
        %v900 = vadd.f32 %v896, %v899
        %vm901 = vweird.f32 %v668
        %vm902 = vweird.f32 %v896
        %vm903 = vmor %vm901, %vm902
        %v904 = vsel %vm903, %v896, %v900
        %v905 = vand.u32 2147483647, %v668
        %vm906 = vcmp.eq.f32.partialorder %v905, 8.507059e+37
        %v907 = vand.u32 %v668, 2147483648
        %v908 = vor.u32 1.1754944e-38, %v907
        %v909 = vsel %vm906, %v908, %v904
        %v910 = vmul.f32 1.0, %v909
        %v911 = vrcp.pop %v669
        %v912 = vmul.f32 %v669, %v911
        %v913 = vsub.f32 1.0, %v912
        %v914 = vmul.f32 %v911, %v913
        %v915 = vadd.f32 %v911, %v914
        %vm916 = vweird.f32 %v669
        %vm917 = vweird.f32 %v911
        %vm918 = vmor %vm916, %vm917
        %v919 = vsel %vm918, %v911, %v915
        %v920 = vand.u32 2147483647, %v669
        %vm921 = vcmp.eq.f32.partialorder %v920, 8.507059e+37
        %v922 = vand.u32 %v669, 2147483648
        %v923 = vor.u32 1.1754944e-38, %v922
        %v924 = vsel %vm921, %v923, %v919
        %v925 = vmul.f32 1.0, %v924
        %v926 = vrcp.pop %v670
        %v927 = vmul.f32 %v670, %v926
        %v928 = vsub.f32 1.0, %v927
        %v929 = vmul.f32 %v926, %v928
        %v930 = vadd.f32 %v926, %v929
        %vm931 = vweird.f32 %v670
        %vm932 = vweird.f32 %v926
        %vm933 = vmor %vm931, %vm932
        %v934 = vsel %vm933, %v926, %v930
        %v935 = vand.u32 2147483647, %v670
        %vm936 = vcmp.eq.f32.partialorder %v935, 8.507059e+37
        %v937 = vand.u32 %v670, 2147483648
        %v938 = vor.u32 1.1754944e-38, %v937
        %v939 = vsel %vm936, %v938, %v934
        %v940 = vmul.f32 1.0, %v939
        %v941 = vrcp.pop %v671
        %v942 = vmul.f32 %v671, %v941
        %v943 = vsub.f32 1.0, %v942
        %v944 = vmul.f32 %v941, %v943
        %v945 = vadd.f32 %v941, %v944
        %vm946 = vweird.f32 %v671
        %vm947 = vweird.f32 %v941
        %vm948 = vmor %vm946, %vm947
        %v949 = vsel %vm948, %v941, %v945
        %v950 = vand.u32 2147483647, %v671
        %vm951 = vcmp.eq.f32.partialorder %v950, 8.507059e+37
        %v952 = vand.u32 %v671, 2147483648
        %v953 = vor.u32 1.1754944e-38, %v952
        %v954 = vsel %vm951, %v953, %v949
        %v955 = vmul.f32 1.0, %v954
        %v956 = vrcp.pop %v672
        %v957 = vmul.f32 %v672, %v956
        %v958 = vsub.f32 1.0, %v957
        %v959 = vmul.f32 %v956, %v958
        %v960 = vadd.f32 %v956, %v959
        %vm961 = vweird.f32 %v672
        %vm962 = vweird.f32 %v956
        %vm963 = vmor %vm961, %vm962
        %v964 = vsel %vm963, %v956, %v960
        %v965 = vand.u32 2147483647, %v672
        %vm966 = vcmp.eq.f32.partialorder %v965, 8.507059e+37
        %v967 = vand.u32 %v672, 2147483648
        %v968 = vor.u32 1.1754944e-38, %v967
        %v969 = vsel %vm966, %v968, %v964
        %v970 = vmul.f32 1.0, %v969
        %v971 = vrcp.pop %v673
        %v972 = vmul.f32 %v673, %v971
        %v973 = vsub.f32 1.0, %v972
        %v974 = vmul.f32 %v971, %v973
        %v975 = vadd.f32 %v971, %v974
        %vm976 = vweird.f32 %v673
        %vm977 = vweird.f32 %v971
        %vm978 = vmor %vm976, %vm977
        %v979 = vsel %vm978, %v971, %v975
        %v980 = vand.u32 2147483647, %v673
        %vm981 = vcmp.eq.f32.partialorder %v980, 8.507059e+37
        %v982 = vand.u32 %v673, 2147483648
        %v983 = vor.u32 1.1754944e-38, %v982
        %v984 = vsel %vm981, %v983, %v979
        %v985 = vmul.f32 1.0, %v984
        %v986 = vrcp.pop %v674
        %v987 = vmul.f32 %v674, %v986
        %v988 = vsub.f32 1.0, %v987
        %v989 = vmul.f32 %v986, %v988
        %v990 = vadd.f32 %v986, %v989
        %vm991 = vweird.f32 %v674
        %vm992 = vweird.f32 %v986
        %vm993 = vmor %vm991, %vm992
        %v994 = vsel %vm993, %v986, %v990
        %v995 = vand.u32 2147483647, %v674
        %vm996 = vcmp.eq.f32.partialorder %v995, 8.507059e+37
        %v997 = vand.u32 %v674, 2147483648
        %v998 = vor.u32 1.1754944e-38, %v997
        %v999 = vsel %vm996, %v998, %v994
        %v1000 = vmul.f32 1.0, %v999
        %v1001 = vrcp.pop %v675
        %v1002 = vmul.f32 %v675, %v1001
        %v1003 = vsub.f32 1.0, %v1002
        %v1004 = vmul.f32 %v1001, %v1003
        %v1005 = vadd.f32 %v1001, %v1004
        %vm1006 = vweird.f32 %v675
        %vm1007 = vweird.f32 %v1001
        %vm1008 = vmor %vm1006, %vm1007
        %v1009 = vsel %vm1008, %v1001, %v1005
        %v1010 = vand.u32 2147483647, %v675
        %vm1011 = vcmp.eq.f32.partialorder %v1010, 8.507059e+37
        %v1012 = vand.u32 %v675, 2147483648
        %v1013 = vor.u32 1.1754944e-38, %v1012
        %v1014 = vsel %vm1011, %v1013, %v1009
        %v1015 = vmul.f32 1.0, %v1014
        %v1016 = vrcp.pop %v676
        %v1017 = vmul.f32 %v676, %v1016
        %v1018 = vsub.f32 1.0, %v1017
        %v1019 = vmul.f32 %v1016, %v1018
        %v1020 = vadd.f32 %v1016, %v1019
        %vm1021 = vweird.f32 %v676
        %vm1022 = vweird.f32 %v1016
        %vm1023 = vmor %vm1021, %vm1022
        %v1024 = vsel %vm1023, %v1016, %v1020
        %v1025 = vand.u32 2147483647, %v676
        %vm1026 = vcmp.eq.f32.partialorder %v1025, 8.507059e+37
        %v1027 = vand.u32 %v676, 2147483648
        %v1028 = vor.u32 1.1754944e-38, %v1027
        %v1029 = vsel %vm1026, %v1028, %v1024
        %v1030 = vmul.f32 1.0, %v1029
        %v1031 = vrcp.pop %v677
        %v1032 = vmul.f32 %v677, %v1031
        %v1033 = vsub.f32 1.0, %v1032
        %v1034 = vmul.f32 %v1031, %v1033
        %v1035 = vadd.f32 %v1031, %v1034
        %vm1036 = vweird.f32 %v677
        %vm1037 = vweird.f32 %v1031
        %vm1038 = vmor %vm1036, %vm1037
        %v1039 = vsel %vm1038, %v1031, %v1035
        %v1040 = vand.u32 2147483647, %v677
        %vm1041 = vcmp.eq.f32.partialorder %v1040, 8.507059e+37
        %v1042 = vand.u32 %v677, 2147483648
        %v1043 = vor.u32 1.1754944e-38, %v1042
        %v1044 = vsel %vm1041, %v1043, %v1039
        %v1045 = vmul.f32 1.0, %v1044
        %v1046 = vrcp.pop %v678
        %v1047 = vmul.f32 %v678, %v1046
        %v1048 = vsub.f32 1.0, %v1047
        %v1049 = vmul.f32 %v1046, %v1048
        %v1050 = vadd.f32 %v1046, %v1049
        %vm1051 = vweird.f32 %v678
        %vm1052 = vweird.f32 %v1046
        %vm1053 = vmor %vm1051, %vm1052
        %v1054 = vsel %vm1053, %v1046, %v1050
        %v1055 = vand.u32 2147483647, %v678
        %vm1056 = vcmp.eq.f32.partialorder %v1055, 8.507059e+37
        %v1057 = vand.u32 %v678, 2147483648
        %v1058 = vor.u32 1.1754944e-38, %v1057
        %v1059 = vsel %vm1056, %v1058, %v1054
        %v1060 = vmul.f32 1.0, %v1059
        %v1061 = vrcp.pop %v679
        %v1062 = vmul.f32 %v679, %v1061
        %v1063 = vsub.f32 1.0, %v1062
        %v1064 = vmul.f32 %v1061, %v1063
        %v1065 = vadd.f32 %v1061, %v1064
        %vm1066 = vweird.f32 %v679
        %vm1067 = vweird.f32 %v1061
        %vm1068 = vmor %vm1066, %vm1067
        %v1069 = vsel %vm1068, %v1061, %v1065
        %v1070 = vand.u32 2147483647, %v679
        %vm1071 = vcmp.eq.f32.partialorder %v1070, 8.507059e+37
        %v1072 = vand.u32 %v679, 2147483648
        %v1073 = vor.u32 1.1754944e-38, %v1072
        %v1074 = vsel %vm1071, %v1073, %v1069
        %v1075 = vmul.f32 1.0, %v1074
        %v1076 = vrcp.pop %v680
        %v1077 = vmul.f32 %v680, %v1076
        %v1078 = vsub.f32 1.0, %v1077
        %v1079 = vmul.f32 %v1076, %v1078
        %v1080 = vadd.f32 %v1076, %v1079
        %vm1081 = vweird.f32 %v680
        %vm1082 = vweird.f32 %v1076
        %vm1083 = vmor %vm1081, %vm1082
        %v1084 = vsel %vm1083, %v1076, %v1080
        %v1085 = vand.u32 2147483647, %v680
        %vm1086 = vcmp.eq.f32.partialorder %v1085, 8.507059e+37
        %v1087 = vand.u32 %v680, 2147483648
        %v1088 = vor.u32 1.1754944e-38, %v1087
        %v1089 = vsel %vm1086, %v1088, %v1084
        %v1090 = vmul.f32 1.0, %v1089
        %v1091 = vrcp.pop %v681
        %v1092 = vmul.f32 %v681, %v1091
        %v1093 = vsub.f32 1.0, %v1092
        %v1094 = vmul.f32 %v1091, %v1093
        %v1095 = vadd.f32 %v1091, %v1094
        %vm1096 = vweird.f32 %v681
        %vm1097 = vweird.f32 %v1091
        %vm1098 = vmor %vm1096, %vm1097
        %v1099 = vsel %vm1098, %v1091, %v1095
        %v1100 = vand.u32 2147483647, %v681
        %vm1101 = vcmp.eq.f32.partialorder %v1100, 8.507059e+37
        %v1102 = vand.u32 %v681, 2147483648
        %v1103 = vor.u32 1.1754944e-38, %v1102
        %v1104 = vsel %vm1101, %v1103, %v1099
        %v1105 = vmul.f32 1.0, %v1104
        %v1106 = vrcp.pop %v682
        %v1107 = vmul.f32 %v682, %v1106
        %v1108 = vsub.f32 1.0, %v1107
        %v1109 = vmul.f32 %v1106, %v1108
        %v1110 = vadd.f32 %v1106, %v1109
        %vm1111 = vweird.f32 %v682
        %vm1112 = vweird.f32 %v1106
        %vm1113 = vmor %vm1111, %vm1112
        %v1114 = vsel %vm1113, %v1106, %v1110
        %v1115 = vand.u32 2147483647, %v682
        %vm1116 = vcmp.eq.f32.partialorder %v1115, 8.507059e+37
        %v1117 = vand.u32 %v682, 2147483648
        %v1118 = vor.u32 1.1754944e-38, %v1117
        %v1119 = vsel %vm1116, %v1118, %v1114
        %v1120 = vmul.f32 1.0, %v1119
        %v1121 = vrcp.pop %v683
        %v1122 = vmul.f32 %v683, %v1121
        %v1123 = vsub.f32 1.0, %v1122
        %v1124 = vmul.f32 %v1121, %v1123
        %v1125 = vadd.f32 %v1121, %v1124
        %vm1126 = vweird.f32 %v683
        %vm1127 = vweird.f32 %v1121
        %vm1128 = vmor %vm1126, %vm1127
        %v1129 = vsel %vm1128, %v1121, %v1125
        %v1130 = vand.u32 2147483647, %v683
        %vm1131 = vcmp.eq.f32.partialorder %v1130, 8.507059e+37
        %v1132 = vand.u32 %v683, 2147483648
        %v1133 = vor.u32 1.1754944e-38, %v1132
        %v1134 = vsel %vm1131, %v1133, %v1129
        %v1135 = vmul.f32 1.0, %v1134
        %v1136 = vrcp.pop %v684
        %v1137 = vmul.f32 %v684, %v1136
        %v1138 = vsub.f32 1.0, %v1137
        %v1139 = vmul.f32 %v1136, %v1138
        %v1140 = vadd.f32 %v1136, %v1139
        %vm1141 = vweird.f32 %v684
        %vm1142 = vweird.f32 %v1136
        %vm1143 = vmor %vm1141, %vm1142
        %v1144 = vsel %vm1143, %v1136, %v1140
        %v1145 = vand.u32 2147483647, %v684
        %vm1146 = vcmp.eq.f32.partialorder %v1145, 8.507059e+37
        %v1147 = vand.u32 %v684, 2147483648
        %v1148 = vor.u32 1.1754944e-38, %v1147
        %v1149 = vsel %vm1146, %v1148, %v1144
        %v1150 = vmul.f32 1.0, %v1149
        %v1151 = vrcp.pop %v685
        %v1152 = vmul.f32 %v685, %v1151
        %v1153 = vsub.f32 1.0, %v1152
        %v1154 = vmul.f32 %v1151, %v1153
        %v1155 = vadd.f32 %v1151, %v1154
        %vm1156 = vweird.f32 %v685
        %vm1157 = vweird.f32 %v1151
        %vm1158 = vmor %vm1156, %vm1157
        %v1159 = vsel %vm1158, %v1151, %v1155
        %v1160 = vand.u32 2147483647, %v685
        %vm1161 = vcmp.eq.f32.partialorder %v1160, 8.507059e+37
        %v1162 = vand.u32 %v685, 2147483648
        %v1163 = vor.u32 1.1754944e-38, %v1162
        %v1164 = vsel %vm1161, %v1163, %v1159
        %v1165 = vmul.f32 1.0, %v1164
        %v1166 = vmul.f32 %v470, %v700
        %v1167 = vmul.f32 %v519, %v715
        %v1168 = vmul.f32 %v472, %v730
        %v1169 = vmul.f32 %v521, %v745
        %v1170 = vmul.f32 %v475, %v760
        %v1171 = vmul.f32 %v524, %v775
        %v1172 = vmul.f32 %v477, %v790
        %v1173 = vmul.f32 %v526, %v805
        %v1174 = vmul.f32 %v480, %v820
        %v1175 = vmul.f32 %v529, %v835
        %v1176 = vmul.f32 %v482, %v850
        %v1177 = vmul.f32 %v531, %v865
        %v1178 = vmul.f32 %v485, %v880
        %v1179 = vmul.f32 %v534, %v895
        %v1180 = vmul.f32 %v487, %v910
        %v1181 = vmul.f32 %v536, %v925
        %v1182 = vmul.f32 %v490, %v940
        %v1183 = vmul.f32 %v539, %v955
        %v1184 = vmul.f32 %v492, %v970
        %v1185 = vmul.f32 %v541, %v985
        %v1186 = vmul.f32 %v495, %v1000
        %v1187 = vmul.f32 %v544, %v1015
        %v1188 = vmul.f32 %v497, %v1030
        %v1189 = vmul.f32 %v546, %v1045
        %v1190 = vmul.f32 %v500, %v1060
        %v1191 = vmul.f32 %v549, %v1075
        %v1192 = vmul.f32 %v502, %v1090
        %v1193 = vmul.f32 %v551, %v1105
        %v1194 = vmul.f32 %v505, %v1120
        %v1195 = vmul.f32 %v554, %v1135
        %v1196 = vmul.f32 %v507, %v1150
        %v1197 = vmul.f32 %v556, %v1165
        %v1198 = vld [vmem:[#allocation2] sm:$0x3]
        %v1199 = vadd.f32 %v1166, %v1168
        %v1200 = vadd.f32 %v1199, %v1170
        %v1201 = vadd.f32 %v1200, %v1172
        %v1202 = vadd.f32 %v1201, %v1174
        %v1203 = vadd.f32 %v1202, %v1176
        %v1204 = vadd.f32 %v1203, %v1178
        %v1205 = vadd.f32 %v1204, %v1180
        %v1206 = vadd.f32 %v1205, %v1182
        %v1207 = vadd.f32 %v1206, %v1184
        %v1208 = vadd.f32 %v1207, %v1186
        %v1209 = vadd.f32 %v1208, %v1188
        %v1210 = vadd.f32 %v1209, %v1190
        %v1211 = vadd.f32 %v1210, %v1192
        %v1212 = vadd.f32 %v1211, %v1194
        %v1213 = vadd.f32 %v1212, %v1196
        %v1214 = vrot.slane %v1213, 4
        %v1215 = vadd.f32 %v1213, %v1214
        %v1216 = vrot.slane %v1215, 2
        %v1217 = vadd.f32 %v1215, %v1216
        %v1218 = vrot.slane %v1217, 1
        %v1219 = vadd.f32 %v1217, %v1218
        %v1220 = vadd.f32 %v1167, %v1169
        %v1221 = vadd.f32 %v1220, %v1171
        %v1222 = vadd.f32 %v1221, %v1173
        %v1223 = vadd.f32 %v1222, %v1175
        %v1224 = vadd.f32 %v1223, %v1177
        %v1225 = vadd.f32 %v1224, %v1179
        %v1226 = vadd.f32 %v1225, %v1181
        %v1227 = vadd.f32 %v1226, %v1183
        %v1228 = vadd.f32 %v1227, %v1185
        %v1229 = vadd.f32 %v1228, %v1187
        %v1230 = vadd.f32 %v1229, %v1189
        %v1231 = vadd.f32 %v1230, %v1191
        %v1232 = vadd.f32 %v1231, %v1193
        %v1233 = vadd.f32 %v1232, %v1195
        %v1234 = vadd.f32 %v1233, %v1197
        %v1235 = vrot.slane %v1234, 4
        %v1236 = vadd.f32 %v1234, %v1235
        %v1237 = vrot.slane %v1236, 2
        %v1238 = vadd.f32 %v1236, %v1237
        %v1239 = vrot.slane %v1238, 1
        %v1240 = vadd.f32 %v1238, %v1239
        %v1243 = vrot.slane %v1240, 7
        %vm1244 = vcmask 1040384
        %v1245 = vsel %vm1244, %v1219, %v1243
        %v1247 = vadd.f32 %v1198, %v1245
        %v1248 = vlaneseq
        %vm1249 = vcmp.ge.s32.totalorder %v1248, 0
        %vm1250 = vcmp.lt.s32.totalorder %v1248, 256
        %vm1251 = vmand %vm1249, %vm1250
        %1252 = vst.msk [vmem:[#allocation2] sm:$0x3] %vm1251, %v1247
        %p1253 = scmp.eq.s32.totalorder %s22, 1
        // Predicated region
        $region79: #{cnn_branch_forward.5} parent=69 // pred_check
          %p1254 = pneg %p1253
        $region80: #{cnn_branch_forward.5} parent=69 // pred_check_branch
          %1256 = sbr.rel (%p1254) target = $region82
        $region81: #{cnn_branch_forward.5} parent=69 // pred_region
          %v1257 = vld [vmem:[#allocation2] sm:$0x3]
          %v1258 = vmul.f32 %v1257, 0.00390625
          %1259 = vst.msk [vmem:[%s326] sm:$0x3] %vm1251, %v1258
        $region82: #{cnn_branch_forward.5} parent=69 // pred_fallthru
          _
        %s1260 = smul.u32 2, %s21
        %p1261 = scmp.lt.s32.totalorder %s20, 1
        %s1262 = scalar_select %p1261, %s20, 1
        %p1263 = scmp.lt.s32.totalorder %s1260, 9
        %s1264 = scalar_select %p1263, %s1260, 9
        %s1265 = smul.addr %s1262, 10
        %s1266 = sadd.s32 %s1264, %s1265
        %s1267 = scalar_lea.vmem %s4, %s1266
        // Predicated region
        $region83: #{cnn_branch_forward.5} parent=69 // pred_check
          %p1268 = pneg %p158
        $region84: #{cnn_branch_forward.5} parent=69 // pred_check_branch
          %1270 = sbr.rel (%p1268) target = $region86
        $region85: #{cnn_branch_forward.5} parent=69 // pred_region
          %s1271 = smul.u32 2, %s21
        $region86: #{cnn_branch_forward.5} parent=69 // pred_fallthru
          _
      $region70: #{cnn_branch_forward.5} parent=5 // pred_fallthru
        _
      %p1272 = scmp.le.s32.totalorder 2, %s10
      // Predicated region
      $region87: #{cnn_branch_forward.5} parent=5 // pred_check
        %p1273 = pneg %p1272
      $region88: #{cnn_branch_forward.5} parent=5 // pred_check_branch
        %1275 = sbr.rel (%p1273) target = $region90
      $region89: #{cnn_branch_forward.5} parent=5 // pred_region
        %s1276 = ssub.s32 %s10, 2
        // Predicated region
        $region91: #{cnn_branch_forward.5} parent=89 // pred_check
          %p1277 = pneg %p164
        $region92: #{cnn_branch_forward.5} parent=89 // pred_check_branch
          %1279 = sbr.rel (%p1277) target = $region94
        $region93: #{cnn_branch_forward.5} parent=89 // pred_region
          %s1280 = smul.u32 2, %s24
          %p1281 = scmp.lt.s32.totalorder %s23, 1
          %s1282 = scalar_select %p1281, %s23, 1
          %p1283 = scmp.lt.s32.totalorder %s1280, 9
          %s1284 = scalar_select %p1283, %s1280, 9
          %s1285 = smul.addr %s1282, 10
          %s1286 = sadd.s32 %s1284, %s1285
          %s1287 = scalar_lea.vmem %s4, %s1286
        $region94: #{cnn_branch_forward.5} parent=89 // pred_fallthru
          _
      $region90: #{cnn_branch_forward.5} parent=5 // pred_fallthru
        _
    $region6: #{cnn_branch_forward.5} parent=1 // loop_footer
      %s14 = sadd.s32 1, %s10
    $region7: #{cnn_branch_forward.5} parent=1 // loop_footer_branch
      %9 = sbr.rel target = $region3
    $region8: #{cnn_branch_forward.5} parent=1 // loop_exit
      _

// kernel: cnn_branch_forward.4
$region0: #{cnn_branch_forward.4}
  #allocation0 [shape = 'u32[]', space=smem, size = 0x4, offset = 0x4, fixed_abs, tag = 'smem constant byte address 0x4 - core index']
  #allocation1 [shape = 'u32[72,128]{1,0:T(1,128)}', space=vmem, size = 0x9000, scoped, tag = 'internal scratch']
  #allocation2 [shape = 'f32[1,32]{1,0:T(1,128)}', space=vmem, size = 0x200, scoped, tag = 'scratch operand']
  %s0 = inlined_call_operand.vmem [shape: bf16[2,18,576], index: 0, kind: input, shape index: {}]
  %s1 = inlined_call_operand.vmem [shape: f32[3,3,512], index: 1, kind: input, shape index: {}]
  %s2 = inlined_call_operand.vmem [shape: f32[1,512], index: 2, kind: input, shape index: {}]
  %s3 = inlined_call_operand.vmem [shape: f32[1,512], index: 3, kind: input, shape index: {}]
  %s4 = inlined_call_operand.vmem [shape: bf16[512,32], index: 4, kind: input, shape index: {}]
  %s5 = inlined_call_operand.vmem [shape: bf16[2,16,512], index: 5, kind: output, shape index: {0}]
  %s6 = inlined_call_operand.vmem [shape: f32[2,1,32], index: 6, kind: output, shape index: {1}]
  %7 = xla_tuple %s5, %s6
  %s8 = sld [smem:[#allocation0]]
  $region69: #{cnn_branch_forward.4} parent=0
    _
  %s10 = ssub.s32 1, %s8
  %s11 = scalar_select 0, %s10, %s8
  loop: start=0, step=1, limit=6
  $region2: #{cnn_branch_forward.4} parent=0 // loop_pre_header
    _
  $region3: #{cnn_branch_forward.4} parent=0 // loop_header
    %s13 = sphi 0, %s17
    %p14 = scmp.ge.s32.totalorder %s13, 6
    %s20 = sphi 0, %s32
    %s21 = sphi 0, %s28
    %s22 = sphi 0, %s20
    %s23 = sphi 0, %s21
    %s24 = sphi 0, %s22
    %s25 = sphi 0, %s23
    %s35 = sphi 0, %s37
    %s38 = sphi 0, %s35
    %s39 = sphi 0, %s38
    %s55 = sphi 0, %s39
    %s59 = sphi 0, %s59
    %s61 = sphi 0, %s59
    %s62 = sphi 0, %s61
    %s76 = sphi 0, %s62
    %s80 = sphi 0, %s80
    %s82 = sphi 0, %s80
    %s83 = sphi 0, %s82
    %s97 = sphi 0, %s83
    %s101 = sphi 0, %s101
    %s103 = sphi 0, %s101
    %s104 = sphi 0, %s103
    %s118 = sphi 0, %s104
    %s122 = sphi 0, %s122
    %s124 = sphi 0, %s122
    %s125 = sphi 0, %s124
    %s139 = sphi 0, %s125
    %s147 = sphi 0, %s149
    %s150 = sphi 0, %s147
    %s151 = sphi 0, %s150
    %s167 = sphi 0, %s151
    %s173 = sphi 0, %s175
    %s176 = sphi 0, %s173
    %s177 = sphi 0, %s176
    %s193 = sphi 0, %s177
  $region4: #{cnn_branch_forward.4} parent=0 // loop_header_branch
    %16 = sbr.rel (%p14) target = $region8
  $region5: #{cnn_branch_forward.4} parent=0 // loop_body
    %s18 = ssub.s32 %s13, 1
    %s19 = ssub.s32 %s13, 2
    %s26 = sadd.s32 1, %s21
    %p27 = scmp.ge.s32.totalorder %s26, 2
    %s28 = scalar_select %p27, 0, %s26
    %s29 = sadd.s32 1, %s20
    %s30 = scalar_select %p27, %s29, %s20
    %p31 = scmp.ge.s32.totalorder %s30, 2
    %s32 = scalar_select %p31, 0, %s30
    %s33 = ssub.s32 %s20, %s32
    %p34 = scmp.eq.s32.totalorder %s33, 0
    %s36 = sadd.s32 %s35, 1
    %s37 = scalar_select %p34, %s35, %s36
    %p40 = pneg %p34
    %p41 = scmp.eq.s32.totalorder %s13, 3
    %p42 = por %p40, %p41
    %p43 = scmp.ne.s32.totalorder %s35, %s38
    %p44 = scmp.eq.s32.totalorder %s13, 0
    %p45 = por %p43, %p44
    %p46 = scmp.ne.s32.totalorder %s35, %s38
    %p47 = scmp.eq.s32.totalorder %s18, 3
    %p48 = por %p46, %p47
    %p49 = scmp.ne.s32.totalorder %s38, %s39
    %p50 = scmp.eq.s32.totalorder %s18, 0
    %p51 = por %p49, %p50
    %p52 = scmp.ne.s32.totalorder %s38, %s39
    %p53 = scmp.eq.s32.totalorder %s19, 3
    %p54 = por %p52, %p53
    %p56 = scmp.ne.s32.totalorder %s39, %s55
    %p57 = scmp.eq.s32.totalorder %s19, 0
    %p58 = por %p56, %p57
    %s60 = sadd.s32 %s59, 1
    %p63 = scmp.eq.s32.totalorder %s13, 3
    %p64 = scmp.ne.s32.totalorder %s59, %s61
    %p65 = scmp.eq.s32.totalorder %s13, 0
    %p66 = por %p64, %p65
    %p67 = scmp.ne.s32.totalorder %s59, %s61
    %p68 = scmp.eq.s32.totalorder %s18, 3
    %p69 = por %p67, %p68
    %p70 = scmp.ne.s32.totalorder %s61, %s62
    %p71 = scmp.eq.s32.totalorder %s18, 0
    %p72 = por %p70, %p71
    %p73 = scmp.ne.s32.totalorder %s61, %s62
    %p74 = scmp.eq.s32.totalorder %s19, 3
    %p75 = por %p73, %p74
    %p77 = scmp.ne.s32.totalorder %s62, %s76
    %p78 = scmp.eq.s32.totalorder %s19, 0
    %p79 = por %p77, %p78
    %s81 = sadd.s32 %s80, 1
    %p84 = scmp.eq.s32.totalorder %s13, 3
    %p85 = scmp.ne.s32.totalorder %s80, %s82
    %p86 = scmp.eq.s32.totalorder %s13, 0
    %p87 = por %p85, %p86
    %p88 = scmp.ne.s32.totalorder %s80, %s82
    %p89 = scmp.eq.s32.totalorder %s18, 3
    %p90 = por %p88, %p89
    %p91 = scmp.ne.s32.totalorder %s82, %s83
    %p92 = scmp.eq.s32.totalorder %s18, 0
    %p93 = por %p91, %p92
    %p94 = scmp.ne.s32.totalorder %s82, %s83
    %p95 = scmp.eq.s32.totalorder %s19, 3
    %p96 = por %p94, %p95
    %p98 = scmp.ne.s32.totalorder %s83, %s97
    %p99 = scmp.eq.s32.totalorder %s19, 0
    %p100 = por %p98, %p99
    %s102 = sadd.s32 %s101, 1
    %p105 = scmp.eq.s32.totalorder %s13, 3
    %p106 = scmp.ne.s32.totalorder %s101, %s103
    %p107 = scmp.eq.s32.totalorder %s13, 0
    %p108 = por %p106, %p107
    %p109 = scmp.ne.s32.totalorder %s101, %s103
    %p110 = scmp.eq.s32.totalorder %s18, 3
    %p111 = por %p109, %p110
    %p112 = scmp.ne.s32.totalorder %s103, %s104
    %p113 = scmp.eq.s32.totalorder %s18, 0
    %p114 = por %p112, %p113
    %p115 = scmp.ne.s32.totalorder %s103, %s104
    %p116 = scmp.eq.s32.totalorder %s19, 3
    %p117 = por %p115, %p116
    %p119 = scmp.ne.s32.totalorder %s104, %s118
    %p120 = scmp.eq.s32.totalorder %s19, 0
    %p121 = por %p119, %p120
    %s123 = sadd.s32 %s122, 1
    %p126 = scmp.eq.s32.totalorder %s13, 3
    %p127 = scmp.ne.s32.totalorder %s122, %s124
    %p128 = scmp.eq.s32.totalorder %s13, 0
    %p129 = por %p127, %p128
    %p130 = scmp.ne.s32.totalorder %s122, %s124
    %p131 = scmp.eq.s32.totalorder %s18, 3
    %p132 = por %p130, %p131
    %p133 = scmp.ne.s32.totalorder %s124, %s125
    %p134 = scmp.eq.s32.totalorder %s18, 0
    %p135 = por %p133, %p134
    %p136 = scmp.ne.s32.totalorder %s124, %s125
    %p137 = scmp.eq.s32.totalorder %s19, 3
    %p138 = por %p136, %p137
    %p140 = scmp.ne.s32.totalorder %s125, %s139
    %p141 = scmp.eq.s32.totalorder %s19, 0
    %p142 = por %p140, %p141
    %s143 = ssub.s32 %s20, %s32
    %s144 = ssub.s32 %s21, %s28
    %s145 = sor.u32 %s143, %s144
    %p146 = scmp.eq.s32.totalorder %s145, 0
    %s148 = sadd.s32 %s147, 1
    %s149 = scalar_select %p146, %s147, %s148
    %p152 = pneg %p146
    %p153 = scmp.eq.s32.totalorder %s13, 3
    %p154 = por %p152, %p153
    %p155 = scmp.ne.s32.totalorder %s147, %s150
    %p156 = scmp.eq.s32.totalorder %s13, 0
    %p157 = por %p155, %p156
    %p158 = scmp.ne.s32.totalorder %s147, %s150
    %p159 = scmp.eq.s32.totalorder %s18, 3
    %p160 = por %p158, %p159
    %p161 = scmp.ne.s32.totalorder %s150, %s151
    %p162 = scmp.eq.s32.totalorder %s18, 0
    %p163 = por %p161, %p162
    %p164 = scmp.ne.s32.totalorder %s150, %s151
    %p165 = scmp.eq.s32.totalorder %s19, 3
    %p166 = por %p164, %p165
    %p168 = scmp.ne.s32.totalorder %s151, %s167
    %p169 = scmp.eq.s32.totalorder %s19, 0
    %p170 = por %p168, %p169
    %s171 = ssub.s32 %s20, %s32
    %p172 = scmp.eq.s32.totalorder %s171, 0
    %s174 = sadd.s32 %s173, 1
    %s175 = scalar_select %p172, %s173, %s174
    %p178 = pneg %p172
    %p179 = scmp.eq.s32.totalorder %s13, 3
    %p180 = por %p178, %p179
    %p181 = scmp.ne.s32.totalorder %s173, %s176
    %p182 = scmp.eq.s32.totalorder %s13, 0
    %p183 = por %p181, %p182
    %p184 = scmp.ne.s32.totalorder %s173, %s176
    %p185 = scmp.eq.s32.totalorder %s18, 3
    %p186 = por %p184, %p185
    %p187 = scmp.ne.s32.totalorder %s176, %s177
    %p188 = scmp.eq.s32.totalorder %s18, 0
    %p189 = por %p187, %p188
    %p190 = scmp.ne.s32.totalorder %s176, %s177
    %p191 = scmp.eq.s32.totalorder %s19, 3
    %p192 = por %p190, %p191
    %p194 = scmp.ne.s32.totalorder %s177, %s193
    %p195 = scmp.eq.s32.totalorder %s19, 0
    %p196 = por %p194, %p195
    %p197 = scmp.le.s32.totalorder 1, %s13
    %p198 = scmp.lt.s32.totalorder %s13, 5
    %p199 = pnand %p197, %p198
    %p200 = pneg %p199
    // Predicated region
    $region9: #{cnn_branch_forward.4} parent=5 // pred_check
      _
    $region10: #{cnn_branch_forward.4} parent=5 // pred_check_branch
      %202 = sbr.rel (%p199) target = $region12
    $region11: #{cnn_branch_forward.4} parent=5 // pred_region
      %s203 = ssub.s32 %s13, 1
      // Predicated region
      $region13: #{cnn_branch_forward.4} parent=11 // pred_check
        %p204 = pneg %p72
      $region14: #{cnn_branch_forward.4} parent=11 // pred_check_branch
        %206 = sbr.rel (%p204) target = $region16
      $region15: #{cnn_branch_forward.4} parent=11 // pred_region
        _
      $region16: #{cnn_branch_forward.4} parent=11 // pred_fallthru
        _
      // Predicated region
      $region17: #{cnn_branch_forward.4} parent=11 // pred_check
        %p207 = pneg %p93
      $region18: #{cnn_branch_forward.4} parent=11 // pred_check_branch
        %209 = sbr.rel (%p207) target = $region20
      $region19: #{cnn_branch_forward.4} parent=11 // pred_region
        _
      $region20: #{cnn_branch_forward.4} parent=11 // pred_fallthru
        _
      // Predicated region
      $region21: #{cnn_branch_forward.4} parent=11 // pred_check
        %p210 = pneg %p114
      $region22: #{cnn_branch_forward.4} parent=11 // pred_check_branch
        %212 = sbr.rel (%p210) target = $region24
      $region23: #{cnn_branch_forward.4} parent=11 // pred_region
        _
      $region24: #{cnn_branch_forward.4} parent=11 // pred_fallthru
        _
      // Predicated region
      $region25: #{cnn_branch_forward.4} parent=11 // pred_check
        %p213 = pneg %p135
      $region26: #{cnn_branch_forward.4} parent=11 // pred_check_branch
        %215 = sbr.rel (%p213) target = $region28
      $region27: #{cnn_branch_forward.4} parent=11 // pred_region
        _
      $region28: #{cnn_branch_forward.4} parent=11 // pred_fallthru
        _
    $region12: #{cnn_branch_forward.4} parent=5 // pred_fallthru
      _
    %p216 = scmp.lt.s32.totalorder %s13, 4
    // Predicated region
    $region29: #{cnn_branch_forward.4} parent=5 // pred_check
      %p217 = pneg %p216
    $region30: #{cnn_branch_forward.4} parent=5 // pred_check_branch
      %219 = sbr.rel (%p217) target = $region32
    $region31: #{cnn_branch_forward.4} parent=5 // pred_region
      // Predicated region
      $region33: #{cnn_branch_forward.4} parent=31 // pred_check
        %p220 = pneg %p45
      $region34: #{cnn_branch_forward.4} parent=31 // pred_check_branch
        %222 = sbr.rel (%p220) target = $region36
      $region35: #{cnn_branch_forward.4} parent=31 // pred_region
        %p223 = scmp.lt.s32.totalorder %s20, 1
        %s224 = scalar_select %p223, %s20, 1
        %s225 = smul.addr %s224, 15
        %s226 = smul.addr %s225, 4
        %s227 = scalar_lea.vmem %s0, %s226
      $region36: #{cnn_branch_forward.4} parent=31 // pred_fallthru
        _
    $region32: #{cnn_branch_forward.4} parent=5 // pred_fallthru
      _
    %p228 = scmp.le.s32.totalorder 1, %s13
    %p229 = scmp.lt.s32.totalorder %s13, 5
    %p230 = pnand %p228, %p229
    %p231 = pneg %p230
    // Predicated region
    $region37: #{cnn_branch_forward.4} parent=5 // pred_check
      _
    $region38: #{cnn_branch_forward.4} parent=5 // pred_check_branch
      %233 = sbr.rel (%p230) target = $region40
    $region39: #{cnn_branch_forward.4} parent=5 // pred_region
      %s234 = ssub.s32 %s13, 1
      %p235 = scmp.lt.s32.totalorder %s22, 1
      %s236 = scalar_select %p235, %s22, 1
      %s237 = smul.addr %s236, 15
      %s238 = smul.addr %s237, 4
      %s239 = scalar_lea.vmem %s0, %s238
      %p240 = pneg %p51
      %p241 = pneg %p48
      %p242 = pneg %p72
      %p243 = pneg %p69
      %p244 = pneg %p93
      %p245 = pneg %p90
      %p246 = pneg %p114
      %p247 = pneg %p111
      %p248 = pneg %p135
      %p249 = pneg %p132
      %p250 = pneg %p163
      %p251 = pneg %p160
      %p252 = scmp.lt.s32.totalorder %s22, 1
      %s253 = scalar_select %p252, %s22, 1
      %p254 = scmp.lt.s32.totalorder %s23, 1
      %s255 = scalar_select %p254, %s23, 1
      %s256 = smul.addr %s255, 4
      %s257 = smul.addr %s253, 8
      %s258 = sadd.s32 %s256, %s257
      %s259 = smul.addr %s258, 4
      %s260 = scalar_lea.vmem %s5, %s259
      %p261 = pneg %p189
      %p262 = pneg %p186
      %p263 = scmp.lt.s32.totalorder %s22, 1
      %s264 = scalar_select %p263, %s22, 1
      %s265 = scalar_lea.vmem %s6, %s264
      %p266 = scmp.lt.s32.totalorder %s22, 1
      %s267 = scalar_select %p266, %s22, 1
      %s268 = smul.addr %s267, 15
      %s269 = smul.addr %s268, 4
      %s270 = scalar_lea.vmem %s0, %s269
      %p271 = scmp.lt.s32.totalorder %s22, 1
      %s272 = scalar_select %p271, %s22, 1
      %p273 = scmp.lt.s32.totalorder %s23, 1
      %s274 = scalar_select %p273, %s23, 1
      %s275 = smul.addr %s274, 4
      %s276 = smul.addr %s272, 8
      %s277 = sadd.s32 %s275, %s276
      %s278 = smul.addr %s277, 4
      %s279 = scalar_lea.vmem %s5, %s278
      %p280 = scmp.lt.s32.totalorder %s22, 1
      %s281 = scalar_select %p280, %s22, 1
      %s282 = scalar_lea.vmem %s6, %s281
      %p283 = scmp.eq.s32.totalorder %s23, 0
      // Predicated region
      $region41: #{cnn_branch_forward.4} parent=39 // pred_check
        %p284 = pneg %p283
      $region42: #{cnn_branch_forward.4} parent=39 // pred_check_branch
        %286 = sbr.rel (%p284) target = $region44
      $region43: #{cnn_branch_forward.4} parent=39 // pred_region
        %vm287 = vcmask 253952
        %288 = vst.msk [vmem:[#allocation2] sm:$0x1] %vm287, 0.0
      $region44: #{cnn_branch_forward.4} parent=39 // pred_fallthru
        _
      %s289 = smul.u32 %s23, 8
      %s290 = sshra.s32 %s289, 3
      %s291 = sand.u32 %s289, 7
      %s292 = smul.u32 %s290, 5
      %s293 = smul.addr %s292, 4
      %s294 = scalar_lea.vmem %s270, %s293
      %v295 = vld [vmem:[%s294] sm:$0xff]
      %v296 = vld [vmem:[%s294 + $0x8] sm:$0xff]
      %v297 = vld [vmem:[%s294 + $0x10] sm:$0xf]
      %v298 = vld [vmem:[%s294 + $0x14] sm:$0x11]
      %v299 = vld [vmem:[%s294 + $0x1c] sm:$0x11]
      %v300 = vld [vmem:[%s294 + $0x24] sm:$0x1]
      %v301 = vunpack.c.l.bf16 %v295
      %v302 = vunpack.c.h.bf16 %v295
      %v303 = vunpack.c.l.bf16 %v296
      %v304 = vunpack.c.h.bf16 %v296
      %v305 = vunpack.c.l.bf16 %v297
      %v306 = vunpack.c.l.bf16 %v298
      %v307 = vunpack.c.h.bf16 %v298
      %v308 = vunpack.c.l.bf16 %v299
      %v309 = vunpack.c.h.bf16 %v299
      %v310 = vunpack.c.l.bf16 %v300
      %v311 = vld [vmem:[%s1] sm:$0x77]
      %v312 = vld [vmem:[%s1 + $0x8] sm:$0x77]
      %v313 = vld [vmem:[%s1 + $0x10] sm:$0x77]
      %v314 = vld [vmem:[%s1 + $0x18] sm:$0x77]
      %v315 = vld [vmem:[%s1 + $0x20] sm:$0x77]
      %v316 = vld [vmem:[%s1 + $0x28] sm:$0x77]
      %v319 = vperm.slane %v311, 0
      %v320 = vperm.slane %v311, 4
      %v321 = vperm.slane %v312, 0
      %v322 = vperm.slane %v312, 4
      %v327 = vperm.slane %v319, 0
      %v328 = vperm.slane %v320, 0
      %v329 = vperm.slane %v321, 0
      %v330 = vperm.slane %v322, 0
      %v331 = vmul.f32 %v301, %v327
      %v332 = vmul.f32 %v302, %v328
      %v333 = vmul.f32 %v303, %v329
      %v334 = vmul.f32 %v304, %v330
      %v335 = vadd.f32 %v331, 0.0
      %v336 = vadd.f32 %v332, 0.0
      %v337 = vadd.f32 %v333, 0.0
      %v338 = vadd.f32 %v334, 0.0
      %v339 = vperm.slane %v311, 1
      %v340 = vperm.slane %v311, 5
      %v341 = vperm.slane %v312, 1
      %v342 = vperm.slane %v312, 5
      %v347 = vperm.slane %v339, 1
      %v348 = vperm.slane %v340, 1
      %v349 = vperm.slane %v341, 1
      %v350 = vperm.slane %v342, 1
      %355 = vrot.lane.b32.xlu0 %v347, 32
      %v356 = vpop.permute.xlu0 %355
      %357 = vrot.lane.b32.xlu0 %v348, 32
      %v358 = vpop.permute.xlu0 %357
      %359 = vrot.lane.b32.xlu0 %v349, 32
      %v360 = vpop.permute.xlu0 %359
      %361 = vrot.lane.b32.xlu0 %v350, 32
      %v362 = vpop.permute.xlu0 %361
      %vm363 = vcmask 261120
      %v364 = vsel %vm363, %v356, %v358
      %v365 = vsel %vm363, %v358, %v360
      %v366 = vsel %vm363, %v360, %v362
      %v372 = vmul.f32 %v301, %v356
      %v373 = vmul.f32 %v302, %v364
      %v374 = vmul.f32 %v303, %v365
      %v375 = vmul.f32 %v304, %v366
      %v376 = vmul.f32 %v305, %v362
      %382 = vrot.lane.b32.xlu0 %v372, 96
      %v383 = vpop.permute.xlu0 %382
      %384 = vrot.lane.b32.xlu0 %v373, 96
      %v385 = vpop.permute.xlu0 %384
      %386 = vrot.lane.b32.xlu0 %v374, 96
      %v387 = vpop.permute.xlu0 %386
      %388 = vrot.lane.b32.xlu0 %v375, 96
      %v389 = vpop.permute.xlu0 %388
      %390 = vrot.lane.b32.xlu0 %v376, 96
      %v391 = vpop.permute.xlu0 %390
      %vm392 = vcmask 785408
      %v393 = vsel %vm392, %v383, %v385
      %v394 = vsel %vm392, %v385, %v387
      %v395 = vsel %vm392, %v387, %v389
      %v396 = vsel %vm392, %v389, %v391
      %v401 = vadd.f32 %v335, %v393
      %v402 = vadd.f32 %v336, %v394
      %v403 = vadd.f32 %v337, %v395
      %v404 = vadd.f32 %v338, %v396
      %v405 = vperm.slane %v311, 2
      %v406 = vperm.slane %v311, 6
      %v407 = vperm.slane %v312, 2
      %v408 = vperm.slane %v312, 6
      %v413 = vperm.slane %v405, 2
      %v414 = vperm.slane %v406, 2
      %v415 = vperm.slane %v407, 2
      %v416 = vperm.slane %v408, 2
      %421 = vrot.lane.b32.xlu0 %v413, 64
      %v422 = vpop.permute.xlu0 %421
      %423 = vrot.lane.b32.xlu0 %v414, 64
      %v424 = vpop.permute.xlu0 %423
      %425 = vrot.lane.b32.xlu0 %v415, 64
      %v426 = vpop.permute.xlu0 %425
      %427 = vrot.lane.b32.xlu0 %v416, 64
      %v428 = vpop.permute.xlu0 %427
      %vm429 = vcmask 523264
      %v430 = vsel %vm429, %v422, %v424
      %v431 = vsel %vm429, %v424, %v426
      %v432 = vsel %vm429, %v426, %v428
      %v438 = vmul.f32 %v301, %v422
      %v439 = vmul.f32 %v302, %v430
      %v440 = vmul.f32 %v303, %v431
      %v441 = vmul.f32 %v304, %v432
      %v442 = vmul.f32 %v305, %v428
      %448 = vrot.lane.b32.xlu0 %v438, 64
      %v449 = vpop.permute.xlu0 %448
      %450 = vrot.lane.b32.xlu0 %v439, 64
      %v451 = vpop.permute.xlu0 %450
      %452 = vrot.lane.b32.xlu0 %v440, 64
      %v453 = vpop.permute.xlu0 %452
      %454 = vrot.lane.b32.xlu0 %v441, 64
      %v455 = vpop.permute.xlu0 %454
      %456 = vrot.lane.b32.xlu0 %v442, 64
      %v457 = vpop.permute.xlu0 %456
      %v458 = vsel %vm429, %v449, %v451
      %v459 = vsel %vm429, %v451, %v453
      %v460 = vsel %vm429, %v453, %v455
      %v461 = vsel %vm429, %v455, %v457
      %v466 = vadd.f32 %v401, %v458
      %v467 = vadd.f32 %v402, %v459
      %v468 = vadd.f32 %v403, %v460
      %v469 = vadd.f32 %v404, %v461
      %v472 = vperm.slane %v313, 0
      %v473 = vperm.slane %v313, 4
      %v474 = vperm.slane %v314, 0
      %v475 = vperm.slane %v314, 4
      %v480 = vperm.slane %v472, 0
      %v481 = vperm.slane %v473, 0
      %v482 = vperm.slane %v474, 0
      %v483 = vperm.slane %v475, 0
      %v484 = vmul.f32 %v301, %v480
      %v485 = vmul.f32 %v302, %v481
      %v486 = vmul.f32 %v303, %v482
      %v487 = vmul.f32 %v304, %v483
      %v488 = vmul.f32 %v306, %v480
      %v489 = vmul.f32 %v307, %v481
      %v490 = vmul.f32 %v308, %v482
      %v491 = vmul.f32 %v309, %v483
      %vm500 = vcmask 1046528
      %v501 = vrot.slane %v484, 1
      %v502 = vrot.slane %v488, 1
      %v503 = vsel %vm500, %v501, %v502
      %v504 = vrot.slane %v485, 1
      %v505 = vrot.slane %v489, 1
      %v506 = vsel %vm500, %v504, %v505
      %v507 = vrot.slane %v486, 1
      %v508 = vrot.slane %v490, 1
      %v509 = vsel %vm500, %v507, %v508
      %v510 = vrot.slane %v487, 1
      %v511 = vrot.slane %v491, 1
      %v512 = vsel %vm500, %v510, %v511
      %v517 = vadd.f32 %v466, %v503
      %v518 = vadd.f32 %v467, %v506
      %v519 = vadd.f32 %v468, %v509
      %v520 = vadd.f32 %v469, %v512
      %v521 = vperm.slane %v313, 1
      %v522 = vperm.slane %v313, 5
      %v523 = vperm.slane %v314, 1
      %v524 = vperm.slane %v314, 5
      %v529 = vperm.slane %v521, 1
      %v530 = vperm.slane %v522, 1
      %v531 = vperm.slane %v523, 1
      %v532 = vperm.slane %v524, 1
      %537 = vrot.lane.b32.xlu0 %v529, 32
      %v538 = vpop.permute.xlu0 %537
      %539 = vrot.lane.b32.xlu0 %v530, 32
      %v540 = vpop.permute.xlu0 %539
      %541 = vrot.lane.b32.xlu0 %v531, 32
      %v542 = vpop.permute.xlu0 %541
      %543 = vrot.lane.b32.xlu0 %v532, 32
      %v544 = vpop.permute.xlu0 %543
      %v545 = vsel %vm363, %v538, %v540
      %v546 = vsel %vm363, %v540, %v542
      %v547 = vsel %vm363, %v542, %v544
      %v553 = vmul.f32 %v301, %v538
      %v554 = vmul.f32 %v302, %v545
      %v555 = vmul.f32 %v303, %v546
      %v556 = vmul.f32 %v304, %v547
      %v557 = vmul.f32 %v305, %v544
      %v558 = vmul.f32 %v306, %v538
      %v559 = vmul.f32 %v307, %v545
      %v560 = vmul.f32 %v308, %v546
      %v561 = vmul.f32 %v309, %v547
      %v562 = vmul.f32 %v310, %v544
      %v573 = vrot.slane %v553, 1
      %v574 = vrot.slane %v558, 1
      %v575 = vsel %vm500, %v573, %v574
      %v576 = vrot.slane %v554, 1
      %v577 = vrot.slane %v559, 1
      %v578 = vsel %vm500, %v576, %v577
      %v579 = vrot.slane %v555, 1
      %v580 = vrot.slane %v560, 1
      %v581 = vsel %vm500, %v579, %v580
      %v582 = vrot.slane %v556, 1
      %v583 = vrot.slane %v561, 1
      %v584 = vsel %vm500, %v582, %v583
      %v585 = vrot.slane %v557, 1
      %v586 = vrot.slane %v562, 1
      %v587 = vsel %vm500, %v585, %v586
      %588 = vrot.lane.b32.xlu0 %v575, 96
      %v589 = vpop.permute.xlu0 %588
      %590 = vrot.lane.b32.xlu0 %v578, 96
      %v591 = vpop.permute.xlu0 %590
      %592 = vrot.lane.b32.xlu0 %v581, 96
      %v593 = vpop.permute.xlu0 %592
      %594 = vrot.lane.b32.xlu0 %v584, 96
      %v595 = vpop.permute.xlu0 %594
      %596 = vrot.lane.b32.xlu0 %v587, 96
      %v597 = vpop.permute.xlu0 %596
      %v598 = vsel %vm392, %v589, %v591
      %v599 = vsel %vm392, %v591, %v593
      %v600 = vsel %vm392, %v593, %v595
      %v601 = vsel %vm392, %v595, %v597
      %v606 = vadd.f32 %v517, %v598
      %v607 = vadd.f32 %v518, %v599
      %v608 = vadd.f32 %v519, %v600
      %v609 = vadd.f32 %v520, %v601
      %v610 = vperm.slane %v313, 2
      %v611 = vperm.slane %v313, 6
      %v612 = vperm.slane %v314, 2
      %v613 = vperm.slane %v314, 6
      %v618 = vperm.slane %v610, 2
      %v619 = vperm.slane %v611, 2
      %v620 = vperm.slane %v612, 2
      %v621 = vperm.slane %v613, 2
      %626 = vrot.lane.b32.xlu0 %v618, 64
      %v627 = vpop.permute.xlu0 %626
      %628 = vrot.lane.b32.xlu0 %v619, 64
      %v629 = vpop.permute.xlu0 %628
      %630 = vrot.lane.b32.xlu0 %v620, 64
      %v631 = vpop.permute.xlu0 %630
      %632 = vrot.lane.b32.xlu0 %v621, 64
      %v633 = vpop.permute.xlu0 %632
      %v634 = vsel %vm429, %v627, %v629
      %v635 = vsel %vm429, %v629, %v631
      %v636 = vsel %vm429, %v631, %v633
      %v642 = vmul.f32 %v301, %v627
      %v643 = vmul.f32 %v302, %v634
      %v644 = vmul.f32 %v303, %v635
      %v645 = vmul.f32 %v304, %v636
      %v646 = vmul.f32 %v305, %v633
      %v647 = vmul.f32 %v306, %v627
      %v648 = vmul.f32 %v307, %v634
      %v649 = vmul.f32 %v308, %v635
      %v650 = vmul.f32 %v309, %v636
      %v651 = vmul.f32 %v310, %v633
      %v662 = vrot.slane %v642, 1
      %v663 = vrot.slane %v647, 1
      %v664 = vsel %vm500, %v662, %v663
      %v665 = vrot.slane %v643, 1
      %v666 = vrot.slane %v648, 1
      %v667 = vsel %vm500, %v665, %v666
      %v668 = vrot.slane %v644, 1
      %v669 = vrot.slane %v649, 1
      %v670 = vsel %vm500, %v668, %v669
      %v671 = vrot.slane %v645, 1
      %v672 = vrot.slane %v650, 1
      %v673 = vsel %vm500, %v671, %v672
      %v674 = vrot.slane %v646, 1
      %v675 = vrot.slane %v651, 1
      %v676 = vsel %vm500, %v674, %v675
      %677 = vrot.lane.b32.xlu0 %v664, 64
      %v678 = vpop.permute.xlu0 %677
      %679 = vrot.lane.b32.xlu0 %v667, 64
      %v680 = vpop.permute.xlu0 %679
      %681 = vrot.lane.b32.xlu0 %v670, 64
      %v682 = vpop.permute.xlu0 %681
      %683 = vrot.lane.b32.xlu0 %v673, 64
      %v684 = vpop.permute.xlu0 %683
      %685 = vrot.lane.b32.xlu0 %v676, 64
      %v686 = vpop.permute.xlu0 %685
      %v687 = vsel %vm429, %v678, %v680
      %v688 = vsel %vm429, %v680, %v682
      %v689 = vsel %vm429, %v682, %v684
      %v690 = vsel %vm429, %v684, %v686
      %v695 = vadd.f32 %v606, %v687
      %v696 = vadd.f32 %v607, %v688
      %v697 = vadd.f32 %v608, %v689
      %v698 = vadd.f32 %v609, %v690
      %v701 = vperm.slane %v315, 0
      %v702 = vperm.slane %v315, 4
      %v703 = vperm.slane %v316, 0
      %v704 = vperm.slane %v316, 4
      %v709 = vperm.slane %v701, 0
      %v710 = vperm.slane %v702, 0
      %v711 = vperm.slane %v703, 0
      %v712 = vperm.slane %v704, 0
      %v713 = vmul.f32 %v301, %v709
      %v714 = vmul.f32 %v302, %v710
      %v715 = vmul.f32 %v303, %v711
      %v716 = vmul.f32 %v304, %v712
      %v717 = vmul.f32 %v306, %v709
      %v718 = vmul.f32 %v307, %v710
      %v719 = vmul.f32 %v308, %v711
      %v720 = vmul.f32 %v309, %v712
      %vm729 = vcmask 1045504
      %v730 = vrot.slane %v713, 2
      %v731 = vrot.slane %v717, 2
      %v732 = vsel %vm729, %v730, %v731
      %v733 = vrot.slane %v714, 2
      %v734 = vrot.slane %v718, 2
      %v735 = vsel %vm729, %v733, %v734
      %v736 = vrot.slane %v715, 2
      %v737 = vrot.slane %v719, 2
      %v738 = vsel %vm729, %v736, %v737
      %v739 = vrot.slane %v716, 2
      %v740 = vrot.slane %v720, 2
      %v741 = vsel %vm729, %v739, %v740
      %v746 = vadd.f32 %v695, %v732
      %v747 = vadd.f32 %v696, %v735
      %v748 = vadd.f32 %v697, %v738
      %v749 = vadd.f32 %v698, %v741
      %v750 = vperm.slane %v315, 1
      %v751 = vperm.slane %v315, 5
      %v752 = vperm.slane %v316, 1
      %v753 = vperm.slane %v316, 5
      %v758 = vperm.slane %v750, 1
      %v759 = vperm.slane %v751, 1
      %v760 = vperm.slane %v752, 1
      %v761 = vperm.slane %v753, 1
      %766 = vrot.lane.b32.xlu0 %v758, 32
      %v767 = vpop.permute.xlu0 %766
      %768 = vrot.lane.b32.xlu0 %v759, 32
      %v769 = vpop.permute.xlu0 %768
      %770 = vrot.lane.b32.xlu0 %v760, 32
      %v771 = vpop.permute.xlu0 %770
      %772 = vrot.lane.b32.xlu0 %v761, 32
      %v773 = vpop.permute.xlu0 %772
      %v774 = vsel %vm363, %v767, %v769
      %v775 = vsel %vm363, %v769, %v771
      %v776 = vsel %vm363, %v771, %v773
      %v782 = vmul.f32 %v301, %v767
      %v783 = vmul.f32 %v302, %v774
      %v784 = vmul.f32 %v303, %v775
      %v785 = vmul.f32 %v304, %v776
      %v786 = vmul.f32 %v305, %v773
      %v787 = vmul.f32 %v306, %v767
      %v788 = vmul.f32 %v307, %v774
      %v789 = vmul.f32 %v308, %v775
      %v790 = vmul.f32 %v309, %v776
      %v791 = vmul.f32 %v310, %v773
      %v802 = vrot.slane %v782, 2
      %v803 = vrot.slane %v787, 2
      %v804 = vsel %vm729, %v802, %v803
      %v805 = vrot.slane %v783, 2
      %v806 = vrot.slane %v788, 2
      %v807 = vsel %vm729, %v805, %v806
      %v808 = vrot.slane %v784, 2
      %v809 = vrot.slane %v789, 2
      %v810 = vsel %vm729, %v808, %v809
      %v811 = vrot.slane %v785, 2
      %v812 = vrot.slane %v790, 2
      %v813 = vsel %vm729, %v811, %v812
      %v814 = vrot.slane %v786, 2
      %v815 = vrot.slane %v791, 2
      %v816 = vsel %vm729, %v814, %v815
      %817 = vrot.lane.b32.xlu0 %v804, 96
      %v818 = vpop.permute.xlu0 %817
      %819 = vrot.lane.b32.xlu0 %v807, 96
      %v820 = vpop.permute.xlu0 %819
      %821 = vrot.lane.b32.xlu0 %v810, 96
      %v822 = vpop.permute.xlu0 %821
      %823 = vrot.lane.b32.xlu0 %v813, 96
      %v824 = vpop.permute.xlu0 %823
      %825 = vrot.lane.b32.xlu0 %v816, 96
      %v826 = vpop.permute.xlu0 %825
      %v827 = vsel %vm392, %v818, %v820
      %v828 = vsel %vm392, %v820, %v822
      %v829 = vsel %vm392, %v822, %v824
      %v830 = vsel %vm392, %v824, %v826
      %v835 = vadd.f32 %v746, %v827
      %v836 = vadd.f32 %v747, %v828
      %v837 = vadd.f32 %v748, %v829
      %v838 = vadd.f32 %v749, %v830
      %v839 = vperm.slane %v315, 2
      %v840 = vperm.slane %v315, 6
      %v841 = vperm.slane %v316, 2
      %v842 = vperm.slane %v316, 6
      %v847 = vperm.slane %v839, 2
      %v848 = vperm.slane %v840, 2
      %v849 = vperm.slane %v841, 2
      %v850 = vperm.slane %v842, 2
      %855 = vrot.lane.b32.xlu0 %v847, 64
      %v856 = vpop.permute.xlu0 %855
      %857 = vrot.lane.b32.xlu0 %v848, 64
      %v858 = vpop.permute.xlu0 %857
      %859 = vrot.lane.b32.xlu0 %v849, 64
      %v860 = vpop.permute.xlu0 %859
      %861 = vrot.lane.b32.xlu0 %v850, 64
      %v862 = vpop.permute.xlu0 %861
      %v863 = vsel %vm429, %v856, %v858
      %v864 = vsel %vm429, %v858, %v860
      %v865 = vsel %vm429, %v860, %v862
      %v871 = vmul.f32 %v301, %v856
      %v872 = vmul.f32 %v302, %v863
      %v873 = vmul.f32 %v303, %v864
      %v874 = vmul.f32 %v304, %v865
      %v875 = vmul.f32 %v305, %v862
      %v876 = vmul.f32 %v306, %v856
      %v877 = vmul.f32 %v307, %v863
      %v878 = vmul.f32 %v308, %v864
      %v879 = vmul.f32 %v309, %v865
      %v880 = vmul.f32 %v310, %v862
      %v891 = vrot.slane %v871, 2
      %v892 = vrot.slane %v876, 2
      %v893 = vsel %vm729, %v891, %v892
      %v894 = vrot.slane %v872, 2
      %v895 = vrot.slane %v877, 2
      %v896 = vsel %vm729, %v894, %v895
      %v897 = vrot.slane %v873, 2
      %v898 = vrot.slane %v878, 2
      %v899 = vsel %vm729, %v897, %v898
      %v900 = vrot.slane %v874, 2
      %v901 = vrot.slane %v879, 2
      %v902 = vsel %vm729, %v900, %v901
      %v903 = vrot.slane %v875, 2
      %v904 = vrot.slane %v880, 2
      %v905 = vsel %vm729, %v903, %v904
      %906 = vrot.lane.b32.xlu0 %v893, 64
      %v907 = vpop.permute.xlu0 %906
      %908 = vrot.lane.b32.xlu0 %v896, 64
      %v909 = vpop.permute.xlu0 %908
      %910 = vrot.lane.b32.xlu0 %v899, 64
      %v911 = vpop.permute.xlu0 %910
      %912 = vrot.lane.b32.xlu0 %v902, 64
      %v913 = vpop.permute.xlu0 %912
      %914 = vrot.lane.b32.xlu0 %v905, 64
      %v915 = vpop.permute.xlu0 %914
      %v916 = vsel %vm429, %v907, %v909
      %v917 = vsel %vm429, %v909, %v911
      %v918 = vsel %vm429, %v911, %v913
      %v919 = vsel %vm429, %v913, %v915
      %v924 = vadd.f32 %v835, %v916
      %v925 = vadd.f32 %v836, %v917
      %v926 = vadd.f32 %v837, %v918
      %v927 = vadd.f32 %v838, %v919
      %v928 = vld [vmem:[%s2] sm:$0xf]
      %v930 = vperm.slane %v928, 0
      %v931 = vperm.slane %v928, 1
      %v932 = vperm.slane %v928, 2
      %v933 = vperm.slane %v928, 3
      %v938 = vmul.f32 %v924, %v930
      %v939 = vmul.f32 %v925, %v931
      %v940 = vmul.f32 %v926, %v932
      %v941 = vmul.f32 %v927, %v933
      %v942 = vld [vmem:[%s3] sm:$0xf]
      %v944 = vperm.slane %v942, 0
      %v945 = vperm.slane %v942, 1
      %v946 = vperm.slane %v942, 2
      %v947 = vperm.slane %v942, 3
      %v952 = vadd.f32 %v938, %v944
      %v953 = vadd.f32 %v939, %v945
      %v954 = vadd.f32 %v940, %v946
      %v955 = vadd.f32 %v941, %v947
      %v956 = vxor.u32 %v952, 2147483648
      %v957 = vxor.u32 %v953, 2147483648
      %v958 = vxor.u32 %v954, 2147483648
      %v959 = vxor.u32 %v955, 2147483648
      %v960 = vmul.f32 %v956, 1.442695
      %v961 = vpow.pop %v960
      %v962 = vmul.f32 %v957, 1.442695
      %v963 = vpow.pop %v962
      %v964 = vmul.f32 %v958, 1.442695
      %v965 = vpow.pop %v964
      %v966 = vmul.f32 %v959, 1.442695
      %v967 = vpow.pop %v966
      %v968 = vadd.f32 %v961, 1.0
      %v969 = vadd.f32 %v963, 1.0
      %v970 = vadd.f32 %v965, 1.0
      %v971 = vadd.f32 %v967, 1.0
      %v972 = vrcp.pop %v968
      %v973 = vmul.f32 %v968, %v972
      %v974 = vsub.f32 1.0, %v973
      %v975 = vmul.f32 %v972, %v974
      %v976 = vadd.f32 %v972, %v975
      %vm977 = vweird.f32 %v968
      %vm978 = vweird.f32 %v972
      %vm979 = vmor %vm977, %vm978
      %v980 = vsel %vm979, %v972, %v976
      %v981 = vand.u32 2147483647, %v968
      %vm982 = vcmp.eq.f32.partialorder %v981, 8.507059e+37
      %v983 = vand.u32 %v968, 2147483648
      %v984 = vor.u32 1.1754944e-38, %v983
      %v985 = vsel %vm982, %v984, %v980
      %v986 = vmul.f32 1.0, %v985
      %v987 = vrcp.pop %v969
      %v988 = vmul.f32 %v969, %v987
      %v989 = vsub.f32 1.0, %v988
      %v990 = vmul.f32 %v987, %v989
      %v991 = vadd.f32 %v987, %v990
      %vm992 = vweird.f32 %v969
      %vm993 = vweird.f32 %v987
      %vm994 = vmor %vm992, %vm993
      %v995 = vsel %vm994, %v987, %v991
      %v996 = vand.u32 2147483647, %v969
      %vm997 = vcmp.eq.f32.partialorder %v996, 8.507059e+37
      %v998 = vand.u32 %v969, 2147483648
      %v999 = vor.u32 1.1754944e-38, %v998
      %v1000 = vsel %vm997, %v999, %v995
      %v1001 = vmul.f32 1.0, %v1000
      %v1002 = vrcp.pop %v970
      %v1003 = vmul.f32 %v970, %v1002
      %v1004 = vsub.f32 1.0, %v1003
      %v1005 = vmul.f32 %v1002, %v1004
      %v1006 = vadd.f32 %v1002, %v1005
      %vm1007 = vweird.f32 %v970
      %vm1008 = vweird.f32 %v1002
      %vm1009 = vmor %vm1007, %vm1008
      %v1010 = vsel %vm1009, %v1002, %v1006
      %v1011 = vand.u32 2147483647, %v970
      %vm1012 = vcmp.eq.f32.partialorder %v1011, 8.507059e+37
      %v1013 = vand.u32 %v970, 2147483648
      %v1014 = vor.u32 1.1754944e-38, %v1013
      %v1015 = vsel %vm1012, %v1014, %v1010
      %v1016 = vmul.f32 1.0, %v1015
      %v1017 = vrcp.pop %v971
      %v1018 = vmul.f32 %v971, %v1017
      %v1019 = vsub.f32 1.0, %v1018
      %v1020 = vmul.f32 %v1017, %v1019
      %v1021 = vadd.f32 %v1017, %v1020
      %vm1022 = vweird.f32 %v971
      %vm1023 = vweird.f32 %v1017
      %vm1024 = vmor %vm1022, %vm1023
      %v1025 = vsel %vm1024, %v1017, %v1021
      %v1026 = vand.u32 2147483647, %v971
      %vm1027 = vcmp.eq.f32.partialorder %v1026, 8.507059e+37
      %v1028 = vand.u32 %v971, 2147483648
      %v1029 = vor.u32 1.1754944e-38, %v1028
      %v1030 = vsel %vm1027, %v1029, %v1025
      %v1031 = vmul.f32 1.0, %v1030
      %v1032 = vmul.f32 %v952, %v986
      %v1033 = vmul.f32 %v953, %v1001
      %v1034 = vmul.f32 %v954, %v1016
      %v1035 = vmul.f32 %v955, %v1031
      %v1036 = vpack.c.bf16 %v1033, %v1032
      %v1037 = vpack.c.bf16 %v1035, %v1034
      %1038 = vst [vmem:[%s279] sm:$0xff] %v1036
      %1039 = vst [vmem:[%s279 + $0x8] sm:$0xff] %v1037
      %v1040 = vrot.slane %v1032, 4
      %v1041 = vadd.f32 %v1032, %v1040
      %v1042 = vrot.slane %v1041, 2
      %v1043 = vadd.f32 %v1041, %v1042
      %v1044 = vrot.slane %v1043, 1
      %v1045 = vadd.f32 %v1043, %v1044
      %v1046 = vrot.slane %v1033, 4
      %v1047 = vadd.f32 %v1033, %v1046
      %v1048 = vrot.slane %v1047, 2
      %v1049 = vadd.f32 %v1047, %v1048
      %v1050 = vrot.slane %v1049, 1
      %v1051 = vadd.f32 %v1049, %v1050
      %v1052 = vrot.slane %v1034, 4
      %v1053 = vadd.f32 %v1034, %v1052
      %v1054 = vrot.slane %v1053, 2
      %v1055 = vadd.f32 %v1053, %v1054
      %v1056 = vrot.slane %v1055, 1
      %v1057 = vadd.f32 %v1055, %v1056
      %v1058 = vrot.slane %v1035, 4
      %v1059 = vadd.f32 %v1035, %v1058
      %v1060 = vrot.slane %v1059, 2
      %v1061 = vadd.f32 %v1059, %v1060
      %v1062 = vrot.slane %v1061, 1
      %v1063 = vadd.f32 %v1061, %v1062
      %v1064 = vpack.c.bf16 %v1045, %v1045
      %v1065 = vpack.c.bf16 %v1051, %v1051
      %v1066 = vpack.c.bf16 %v1057, %v1057
      %v1067 = vpack.c.bf16 %v1063, %v1063
      %v1068 = vld [vmem:[#allocation2] sm:$0x1]
      %v1069 = vld [vmem:[%s4] sm:$0xf]
      %v1070 = vld [vmem:[%s4 + $0x4] sm:$0xf]
      %v1071 = vld [vmem:[%s4 + $0x8] sm:$0xf]
      %v1072 = vld [vmem:[%s4 + $0xc] sm:$0xf]
      %v1073 = vld [vmem:[%s4 + $0x10] sm:$0xf]
      %v1074 = vld [vmem:[%s4 + $0x14] sm:$0xf]
      %v1075 = vld [vmem:[%s4 + $0x18] sm:$0xf]
      %v1076 = vld [vmem:[%s4 + $0x1c] sm:$0xf]
      %v1077 = vld [vmem:[%s4 + $0x20] sm:$0xf]
      %v1078 = vld [vmem:[%s4 + $0x24] sm:$0xf]
      %v1079 = vld [vmem:[%s4 + $0x28] sm:$0xf]
      %v1080 = vld [vmem:[%s4 + $0x2c] sm:$0xf]
      %v1081 = vld [vmem:[%s4 + $0x30] sm:$0xf]
      %v1082 = vld [vmem:[%s4 + $0x34] sm:$0xf]
      %v1083 = vld [vmem:[%s4 + $0x38] sm:$0xf]
      %v1084 = vld [vmem:[%s4 + $0x3c] sm:$0xf]
      %v1085 = vld [vmem:[%s4 + $0x40] sm:$0xf]
      %v1086 = vld [vmem:[%s4 + $0x44] sm:$0xf]
      %v1087 = vld [vmem:[%s4 + $0x48] sm:$0xf]
      %v1088 = vld [vmem:[%s4 + $0x4c] sm:$0xf]
      %v1089 = vld [vmem:[%s4 + $0x50] sm:$0xf]
      %v1090 = vld [vmem:[%s4 + $0x54] sm:$0xf]
      %v1091 = vld [vmem:[%s4 + $0x58] sm:$0xf]
      %v1092 = vld [vmem:[%s4 + $0x5c] sm:$0xf]
      %v1093 = vld [vmem:[%s4 + $0x60] sm:$0xf]
      %v1094 = vld [vmem:[%s4 + $0x64] sm:$0xf]
      %v1095 = vld [vmem:[%s4 + $0x68] sm:$0xf]
      %v1096 = vld [vmem:[%s4 + $0x6c] sm:$0xf]
      %v1097 = vld [vmem:[%s4 + $0x70] sm:$0xf]
      %v1098 = vld [vmem:[%s4 + $0x74] sm:$0xf]
      %v1099 = vld [vmem:[%s4 + $0x78] sm:$0xf]
      %v1100 = vld [vmem:[%s4 + $0x7c] sm:$0xf]
      %v1101 = vld [vmem:[%s4 + $0x80] sm:$0xf]
      %v1102 = vld [vmem:[%s4 + $0x84] sm:$0xf]
      %v1103 = vld [vmem:[%s4 + $0x88] sm:$0xf]
      %v1104 = vld [vmem:[%s4 + $0x8c] sm:$0xf]
      %v1105 = vld [vmem:[%s4 + $0x90] sm:$0xf]
      %v1106 = vld [vmem:[%s4 + $0x94] sm:$0xf]
      %v1107 = vld [vmem:[%s4 + $0x98] sm:$0xf]
      %v1108 = vld [vmem:[%s4 + $0x9c] sm:$0xf]
      %v1109 = vld [vmem:[%s4 + $0xa0] sm:$0xf]
      %v1110 = vld [vmem:[%s4 + $0xa4] sm:$0xf]
      %v1111 = vld [vmem:[%s4 + $0xa8] sm:$0xf]
      %v1112 = vld [vmem:[%s4 + $0xac] sm:$0xf]
      %v1113 = vld [vmem:[%s4 + $0xb0] sm:$0xf]
      %v1114 = vld [vmem:[%s4 + $0xb4] sm:$0xf]
      %v1115 = vld [vmem:[%s4 + $0xb8] sm:$0xf]
      %v1116 = vld [vmem:[%s4 + $0xbc] sm:$0xf]
      %v1117 = vld [vmem:[%s4 + $0xc0] sm:$0xf]
      %v1118 = vld [vmem:[%s4 + $0xc4] sm:$0xf]
      %v1119 = vld [vmem:[%s4 + $0xc8] sm:$0xf]
      %v1120 = vld [vmem:[%s4 + $0xcc] sm:$0xf]
      %v1121 = vld [vmem:[%s4 + $0xd0] sm:$0xf]
      %v1122 = vld [vmem:[%s4 + $0xd4] sm:$0xf]
      %v1123 = vld [vmem:[%s4 + $0xd8] sm:$0xf]
      %v1124 = vld [vmem:[%s4 + $0xdc] sm:$0xf]
      %v1125 = vld [vmem:[%s4 + $0xe0] sm:$0xf]
      %v1126 = vld [vmem:[%s4 + $0xe4] sm:$0xf]
      %v1127 = vld [vmem:[%s4 + $0xe8] sm:$0xf]
      %v1128 = vld [vmem:[%s4 + $0xec] sm:$0xf]
      %v1129 = vld [vmem:[%s4 + $0xf0] sm:$0xf]
      %v1130 = vld [vmem:[%s4 + $0xf4] sm:$0xf]
      %v1131 = vld [vmem:[%s4 + $0xf8] sm:$0xf]
      %v1132 = vld [vmem:[%s4 + $0xfc] sm:$0xf]
      %v1197 = vunpack.c.l.b16 %v1069
      %v1198 = vunpack.c.l.b16 %v1070
      %v1199 = vunpack.c.l.b16 %v1071
      %v1200 = vunpack.c.l.b16 %v1072
      %v1201 = vunpack.c.l.b16 %v1073
      %v1202 = vunpack.c.l.b16 %v1074
      %v1203 = vunpack.c.l.b16 %v1075
      %v1204 = vunpack.c.l.b16 %v1076
      %v1205 = vunpack.c.l.b16 %v1077
      %v1206 = vunpack.c.l.b16 %v1078
      %v1207 = vunpack.c.l.b16 %v1079
      %v1208 = vunpack.c.l.b16 %v1080
      %v1209 = vunpack.c.l.b16 %v1081
      %v1210 = vunpack.c.l.b16 %v1082
      %v1211 = vunpack.c.l.b16 %v1083
      %v1212 = vunpack.c.l.b16 %v1084
      %v1213 = vunpack.c.l.b16 %v1085
      %v1214 = vunpack.c.l.b16 %v1086
      %v1215 = vunpack.c.l.b16 %v1087
      %v1216 = vunpack.c.l.b16 %v1088
      %v1217 = vunpack.c.l.b16 %v1089
      %v1218 = vunpack.c.l.b16 %v1090
      %v1219 = vunpack.c.l.b16 %v1091
      %v1220 = vunpack.c.l.b16 %v1092
      %v1221 = vunpack.c.l.b16 %v1093
      %v1222 = vunpack.c.l.b16 %v1094
      %v1223 = vunpack.c.l.b16 %v1095
      %v1224 = vunpack.c.l.b16 %v1096
      %v1225 = vunpack.c.l.b16 %v1097
      %v1226 = vunpack.c.l.b16 %v1098
      %v1227 = vunpack.c.l.b16 %v1099
      %v1228 = vunpack.c.l.b16 %v1100
      %v1229 = vunpack.c.l.b16 %v1101
      %v1230 = vunpack.c.l.b16 %v1102
      %v1231 = vunpack.c.l.b16 %v1103
      %v1232 = vunpack.c.l.b16 %v1104
      %v1233 = vunpack.c.l.b16 %v1105
      %v1234 = vunpack.c.l.b16 %v1106
      %v1235 = vunpack.c.l.b16 %v1107
      %v1236 = vunpack.c.l.b16 %v1108
      %v1237 = vunpack.c.l.b16 %v1109
      %v1238 = vunpack.c.l.b16 %v1110
      %v1239 = vunpack.c.l.b16 %v1111
      %v1240 = vunpack.c.l.b16 %v1112
      %v1241 = vunpack.c.l.b16 %v1113
      %v1242 = vunpack.c.l.b16 %v1114
      %v1243 = vunpack.c.l.b16 %v1115
      %v1244 = vunpack.c.l.b16 %v1116
      %v1245 = vunpack.c.l.b16 %v1117
      %v1246 = vunpack.c.l.b16 %v1118
      %v1247 = vunpack.c.l.b16 %v1119
      %v1248 = vunpack.c.l.b16 %v1120
      %v1249 = vunpack.c.l.b16 %v1121
      %v1250 = vunpack.c.l.b16 %v1122
      %v1251 = vunpack.c.l.b16 %v1123
      %v1252 = vunpack.c.l.b16 %v1124
      %v1253 = vunpack.c.l.b16 %v1125
      %v1254 = vunpack.c.l.b16 %v1126
      %v1255 = vunpack.c.l.b16 %v1127
      %v1256 = vunpack.c.l.b16 %v1128
      %v1257 = vunpack.c.l.b16 %v1129
      %v1258 = vunpack.c.l.b16 %v1130
      %v1259 = vunpack.c.l.b16 %v1131
      %v1260 = vunpack.c.l.b16 %v1132
      %v1261 = vpack.c.b16 %v1198, %v1197
      %v1262 = vpack.c.b16 %v1200, %v1199
      %v1263 = vpack.c.b16 %v1202, %v1201
      %v1264 = vpack.c.b16 %v1204, %v1203
      %v1265 = vpack.c.b16 %v1206, %v1205
      %v1266 = vpack.c.b16 %v1208, %v1207
      %v1267 = vpack.c.b16 %v1210, %v1209
      %v1268 = vpack.c.b16 %v1212, %v1211
      %v1269 = vpack.c.b16 %v1214, %v1213
      %v1270 = vpack.c.b16 %v1216, %v1215
      %v1271 = vpack.c.b16 %v1218, %v1217
      %v1272 = vpack.c.b16 %v1220, %v1219
      %v1273 = vpack.c.b16 %v1222, %v1221
      %v1274 = vpack.c.b16 %v1224, %v1223
      %v1275 = vpack.c.b16 %v1226, %v1225
      %v1276 = vpack.c.b16 %v1228, %v1227
      %v1277 = vpack.c.b16 %v1230, %v1229
      %v1278 = vpack.c.b16 %v1232, %v1231
      %v1279 = vpack.c.b16 %v1234, %v1233
      %v1280 = vpack.c.b16 %v1236, %v1235
      %v1281 = vpack.c.b16 %v1238, %v1237
      %v1282 = vpack.c.b16 %v1240, %v1239
      %v1283 = vpack.c.b16 %v1242, %v1241
      %v1284 = vpack.c.b16 %v1244, %v1243
      %v1285 = vpack.c.b16 %v1246, %v1245
      %v1286 = vpack.c.b16 %v1248, %v1247
      %v1287 = vpack.c.b16 %v1250, %v1249
      %v1288 = vpack.c.b16 %v1252, %v1251
      %v1289 = vpack.c.b16 %v1254, %v1253
      %v1290 = vpack.c.b16 %v1256, %v1255
      %v1291 = vpack.c.b16 %v1258, %v1257
      %v1292 = vpack.c.b16 %v1260, %v1259
      %1325 = vmatpush.bf16.msra.mxu0 %v1268
      %1326 = vmatpush.bf16.msra.mxu0 %v1267
      %1327 = vmatpush.bf16.msra.mxu0 %v1266
      %1328 = vmatpush.bf16.msra.mxu0 %v1265
      %1329 = vmatpush.bf16.msra.mxu0 %v1264
      %1330 = vmatpush.bf16.msra.mxu0 %v1263
      %1331 = vmatpush.bf16.msra.mxu0 %v1262
      %1332 = vmatpush.bf16.msra.mxu0 %v1261
      %1333 = vmatmul.bf16.gmra.mxu0 %v1064
      %v1334 = vpop.f32.mrf.mxu0
      %v1335 = vadd.f32 0.0, %v1334
      %v1336 = vpop.f32.mrf.mxu0
      %1337 = vdwg.mxu0
      %1338 = vmatpush.bf16.msra.mxu0 %v1276
      %1339 = vmatpush.bf16.msra.mxu0 %v1275
      %1340 = vmatpush.bf16.msra.mxu0 %v1274
      %1341 = vmatpush.bf16.msra.mxu0 %v1273
      %1342 = vmatpush.bf16.msra.mxu0 %v1272
      %1343 = vmatpush.bf16.msra.mxu0 %v1271
      %1344 = vmatpush.bf16.msra.mxu0 %v1270
      %1345 = vmatpush.bf16.msra.mxu0 %v1269
      %1346 = vmatmul.bf16.gmra.mxu0 %v1065
      %v1347 = vpop.f32.mrf.mxu0
      %v1348 = vadd.f32 %v1335, %v1347
      %v1349 = vpop.f32.mrf.mxu0
      %1350 = vdwg.mxu0
      %1351 = vmatpush.bf16.msra.mxu0 %v1284
      %1352 = vmatpush.bf16.msra.mxu0 %v1283
      %1353 = vmatpush.bf16.msra.mxu0 %v1282
      %1354 = vmatpush.bf16.msra.mxu0 %v1281
      %1355 = vmatpush.bf16.msra.mxu0 %v1280
      %1356 = vmatpush.bf16.msra.mxu0 %v1279
      %1357 = vmatpush.bf16.msra.mxu0 %v1278
      %1358 = vmatpush.bf16.msra.mxu0 %v1277
      %1359 = vmatmul.bf16.gmra.mxu0 %v1066
      %v1360 = vpop.f32.mrf.mxu0
      %v1361 = vadd.f32 %v1348, %v1360
      %v1362 = vpop.f32.mrf.mxu0
      %1363 = vdwg.mxu0
      %1364 = vmatpush.bf16.msra.mxu0 %v1292
      %1365 = vmatpush.bf16.msra.mxu0 %v1291
      %1366 = vmatpush.bf16.msra.mxu0 %v1290
      %1367 = vmatpush.bf16.msra.mxu0 %v1289
      %1368 = vmatpush.bf16.msra.mxu0 %v1288
      %1369 = vmatpush.bf16.msra.mxu0 %v1287
      %1370 = vmatpush.bf16.msra.mxu0 %v1286
      %1371 = vmatpush.bf16.msra.mxu0 %v1285
      %1372 = vmatmul.bf16.gmra.mxu0 %v1067
      %v1373 = vpop.f32.mrf.mxu0
      %v1374 = vadd.f32 %v1361, %v1373
      %v1375 = vpop.f32.mrf.mxu0
      %1376 = vdwg.mxu0
      %v1377 = vadd.f32 %v1068, %v1374
      %vm1378 = vcmask 253952
      %1379 = vst.msk [vmem:[#allocation2] sm:$0x1] %vm1378, %v1377
      %p1380 = scmp.eq.s32.totalorder %s23, 1
      // Predicated region
      $region45: #{cnn_branch_forward.4} parent=39 // pred_check
        %p1381 = pneg %p1380
      $region46: #{cnn_branch_forward.4} parent=39 // pred_check_branch
        %1383 = sbr.rel (%p1381) target = $region48
      $region47: #{cnn_branch_forward.4} parent=39 // pred_region
        %v1384 = vld [vmem:[#allocation2] sm:$0x1]
        %v1385 = vmul.f32 %v1384, 0.00390625
        %1386 = vst.msk [vmem:[%s282] sm:$0x1] %vm1378, %v1385
      $region48: #{cnn_branch_forward.4} parent=39 // pred_fallthru
        _
      %p1387 = scmp.lt.s32.totalorder %s22, 1
      %s1388 = scalar_select %p1387, %s22, 1
      %p1389 = scmp.lt.s32.totalorder %s23, 1
      %s1390 = scalar_select %p1389, %s23, 1
      %s1391 = smul.addr %s1390, 4
      %s1392 = smul.addr %s1388, 8
      %s1393 = sadd.s32 %s1391, %s1392
      %s1394 = smul.addr %s1393, 4
      %s1395 = scalar_lea.vmem %s5, %s1394
      %p1396 = scmp.lt.s32.totalorder %s22, 1
      %s1397 = scalar_select %p1396, %s22, 1
      %s1398 = scalar_lea.vmem %s6, %s1397
      // Predicated region
      $region49: #{cnn_branch_forward.4} parent=39 // pred_check
        %p1399 = pneg %p160
      $region50: #{cnn_branch_forward.4} parent=39 // pred_check_branch
        %1401 = sbr.rel (%p1399) target = $region52
      $region51: #{cnn_branch_forward.4} parent=39 // pred_region
        _
      $region52: #{cnn_branch_forward.4} parent=39 // pred_fallthru
        _
      // Predicated region
      $region53: #{cnn_branch_forward.4} parent=39 // pred_check
        %p1402 = pneg %p186
      $region54: #{cnn_branch_forward.4} parent=39 // pred_check_branch
        %1404 = sbr.rel (%p1402) target = $region56
      $region55: #{cnn_branch_forward.4} parent=39 // pred_region
        _
      $region56: #{cnn_branch_forward.4} parent=39 // pred_fallthru
        _
    $region40: #{cnn_branch_forward.4} parent=5 // pred_fallthru
      _
    %p1405 = scmp.le.s32.totalorder 2, %s13
    // Predicated region
    $region57: #{cnn_branch_forward.4} parent=5 // pred_check
      %p1406 = pneg %p1405
    $region58: #{cnn_branch_forward.4} parent=5 // pred_check_branch
      %1408 = sbr.rel (%p1406) target = $region60
    $region59: #{cnn_branch_forward.4} parent=5 // pred_region
      %s1409 = ssub.s32 %s13, 2
      // Predicated region
      $region61: #{cnn_branch_forward.4} parent=59 // pred_check
        %p1410 = pneg %p166
      $region62: #{cnn_branch_forward.4} parent=59 // pred_check_branch
        %1412 = sbr.rel (%p1410) target = $region64
      $region63: #{cnn_branch_forward.4} parent=59 // pred_region
        %p1413 = scmp.lt.s32.totalorder %s24, 1
        %s1414 = scalar_select %p1413, %s24, 1
        %p1415 = scmp.lt.s32.totalorder %s25, 1
        %s1416 = scalar_select %p1415, %s25, 1
        %s1417 = smul.addr %s1416, 4
        %s1418 = smul.addr %s1414, 8
        %s1419 = sadd.s32 %s1417, %s1418
        %s1420 = smul.addr %s1419, 4
        %s1421 = scalar_lea.vmem %s5, %s1420
      $region64: #{cnn_branch_forward.4} parent=59 // pred_fallthru
        _
      // Predicated region
      $region65: #{cnn_branch_forward.4} parent=59 // pred_check
        %p1422 = pneg %p192
      $region66: #{cnn_branch_forward.4} parent=59 // pred_check_branch
        %1424 = sbr.rel (%p1422) target = $region68
      $region67: #{cnn_branch_forward.4} parent=59 // pred_region
        %p1425 = scmp.lt.s32.totalorder %s24, 1
        %s1426 = scalar_select %p1425, %s24, 1
        %s1427 = scalar_lea.vmem %s6, %s1426
      $region68: #{cnn_branch_forward.4} parent=59 // pred_fallthru
        _
    $region60: #{cnn_branch_forward.4} parent=5 // pred_fallthru
      _
  $region6: #{cnn_branch_forward.4} parent=0 // loop_footer
    %s17 = sadd.s32 1, %s13
  $region7: #{cnn_branch_forward.4} parent=0 // loop_footer_branch
    %12 = sbr.rel target = $region3
  $region8: #{cnn_branch_forward.4} parent=0 // loop_exit
    _

</llo_original>
